<compile_context>
chip_gen: v7x
topology: tpu7x:2x2x1
jax: 0.10.0
libtpu: 0.0.40
codegen_flags: <defaults>
</compile_context>

<pallas_src>
import functools
import math

import numpy as np
import jax
import jax.numpy as jnp
from jax import lax
from jax.experimental import pallas as pl
from jax.experimental.pallas import tpu as pltpu


def _swap_leading(x):
    """(N, BB, D) -> (BB, N, D), lane (last) dim unchanged."""
    if hasattr(pltpu, "einshape"):
        return pltpu.einshape("nbd->bnd", x)
    return jnp.swapaxes(x, 0, 1)


# ---------------------------------------------------------------------------
# Fused kernel: one-hot embedding gather + wavefront two-layer dual-stream GRU
# (block-diagonal weights, gate columns [r1 r2 | z1 z2 | n1 n2]) + batched
# adjacency + batched top-k masking.  One grid step = one batch block.
# ---------------------------------------------------------------------------
def magnet_graph_kernel(idx_ref,                              # (N*BB, 1) int32, rows n-major
                        table0_ref,                           # (NNODES, 6D) = emb_cat @ W_ih0^T
                        whhT0_ref, bx0_ref, bhn0_ref,         # fused layer-0 params
                        wihT1_ref, whhT1_ref, bx1_ref, bhn1_ref,   # fused layer-1 params
                        noise_ref,                            # (BB, N, N) tie-break noise
                        adj_full_ref, adj_ref,                # (BB, N, N) outputs
                        y1_ref,                               # VMEM scratch (N, BB, 2D)
                        *, alpha, k):
    BB, N, _ = adj_ref.shape
    D2 = whhT0_ref.shape[0]                  # 2*dim: both streams stacked on lanes
    D = D2 // 2
    G = 3 * D2                               # gate columns [r1 r2 | z1 z2 | n1 n2]
    NNODES = table0_ref.shape[0]

    # ---- 1. embedding gather + layer-0 input gates: ONE one-hot MXU matmul ----
    idx_col = idx_ref[...]                                        # (N*BB, 1)
    node_iota = lax.broadcasted_iota(jnp.int32, (N * BB, NNODES), 1)
    onehot = (node_iota == idx_col).astype(jnp.float32)           # (N*BB, NNODES)
    xg0_all = jnp.dot(onehot, table0_ref[...],
                      preferred_element_type=jnp.float32) + bx0_ref[...]   # (N*BB, 6D)

    whhT0 = whhT0_ref[...]                   # hoisted params (stay in vregs)
    whhT1 = whhT1_ref[...]
    wihT1 = wihT1_ref[...]
    bx1 = bx1_ref[...]
    bhn0 = bhn0_ref[...]
    bhn1 = bhn1_ref[...]

    def gru_gates(xg, hg, h_prev, bhn):
        # PyTorch gate order (r, z, n); r/z parts of b_hh already folded into xg.
        r = jax.nn.sigmoid(xg[:, 0:D2] + hg[:, 0:D2])
        z = jax.nn.sigmoid(xg[:, D2:2 * D2] + hg[:, D2:2 * D2])
        n = jnp.tanh(xg[:, 2 * D2:] + r * (hg[:, 2 * D2:] + bhn))
        return (1.0 - z) * n + z * h_prev

    # ---- 2. wavefront-unrolled two-layer GRU (h0 = 0) ----
    # Layer-1 step t only depends on layer-0 step t (its input) and layer-1
    # step t-1, so in this single unrolled block its matmuls overlap with
    # layer-0 step t+1's hidden matmul.
    zero_g = jnp.zeros((BB, G), jnp.float32)
    h0 = jnp.zeros((BB, D2), jnp.float32)
    h1 = jnp.zeros((BB, D2), jnp.float32)
    for t in range(N):                                            # N static & small
        xg0 = xg0_all[t * BB:(t + 1) * BB, :]                     # (BB, 6D) contiguous
        hg0 = zero_g if t == 0 else jnp.dot(h0, whhT0, preferred_element_type=jnp.float32)
        h0 = gru_gates(xg0, hg0, h0, bhn0)

        xg1 = jnp.dot(h0, wihT1, preferred_element_type=jnp.float32) + bx1
        hg1 = zero_g if t == 0 else jnp.dot(h1, whhT1, preferred_element_type=jnp.float32)
        h1 = gru_gates(xg1, hg1, h1, bhn1)
        y1_ref[t] = h1                                            # leading-axis VMEM store

    # ---- 3. adjacency + top-k mask, whole batch block at once ----
    nv = jnp.tanh(alpha * y1_ref[...])                            # (N, BB, 2D)
    nv_b = _swap_leading(nv)                                      # (BB, N, 2D)
    nv1 = nv_b[:, :, 0:D]
    nv2 = nv_b[:, :, D:D2]
    # a = nv1 nv2^T - nv2 nv1^T  ==  [nv1|nv2] . [nv2|-nv1]^T   (single batched matmul)
    nvd = jnp.concatenate([nv2, -nv1], axis=2)                    # (BB, N, 2D)
    a = jnp.einsum('bnd,bmd->bnm', nv_b, nvd,
                   preferred_element_type=jnp.float32)            # (BB, N, N)
    adjb = jnp.maximum(jnp.tanh(alpha * a), 0.0)                  # relu(tanh(alpha*a))
    adj_full_ref[...] = adjb                                      # one full-block store

    scored = adjb + noise_ref[...] * 0.01
    # k-th largest per row via k-1 batched max removals (noise breaks ties).
    work = scored
    for _ in range(k - 1):
        rowmax = jnp.max(work, axis=-1, keepdims=True)
        work = jnp.where(work >= rowmax, -jnp.inf, work)
    kth = jnp.max(work, axis=-1, keepdims=True)
    adj_ref[...] = adjb * (scored >= kth).astype(jnp.float32)     # one full-block store


# ---------------------------------------------------------------------------
# Wrapper: fuse the per-stream PyTorch-style GRU params into block-diagonal
# matrices (gate-column order [r1 r2 | z1 z2 | n1 n2]), fold the embedding
# tables through the layer-0 input weights, and launch the kernel.
# ---------------------------------------------------------------------------
def fuse_gru_params(gru1_p, gru2_p, D):
    """gruX_p = (wih_l0, whh_l0, bih_l0, bhh_l0, wih_l1, whh_l1, bih_l1, bhh_l1),
    PyTorch layouts: weights (3D, D) in gate order (r, z, n), biases (3D,).
    Returns per layer: WihT (2D,6D), WhhT (2D,6D), bias_x (1,6D), bias_hn (1,2D)."""
    Z = jnp.zeros((D, D), jnp.float32)

    def interleave_w(w1, w2):
        w1T, w2T = w1.T, w2.T                                 # (D, 3D) columns [r z n]
        top, bot = [], []
        for g in range(3):
            top += [w1T[:, g * D:(g + 1) * D], Z]
            bot += [Z, w2T[:, g * D:(g + 1) * D]]
        return jnp.concatenate([jnp.concatenate(top, axis=1),
                                jnp.concatenate(bot, axis=1)], axis=0)   # (2D, 6D)

    def interleave_b(b1, b2):
        return jnp.concatenate([b1[0:D], b2[0:D], b1[D:2 * D], b2[D:2 * D],
                                b1[2 * D:], b2[2 * D:]])      # (6D,)

    out = []
    for layer in range(2):
        w_ih1, w_hh1, b_ih1, b_hh1 = gru1_p[4 * layer:4 * layer + 4]
        w_ih2, w_hh2, b_ih2, b_hh2 = gru2_p[4 * layer:4 * layer + 4]
        wihT = interleave_w(w_ih1, w_ih2)
        whhT = interleave_w(w_hh1, w_hh2)
        bx = interleave_b(b_ih1, b_ih2)
        bh = interleave_b(b_hh1, b_hh2)
        # Fold r/z hidden biases into the input gates; n part stays in r*(W_hn h + b_hn).
        bias_x = bx + jnp.concatenate([bh[0:4 * D], jnp.zeros((2 * D,), jnp.float32)])
        bias_hn = bh[4 * D:6 * D]
        out += [wihT, whhT, bias_x.reshape(1, 6 * D), bias_hn.reshape(1, 2 * D)]
    return out


def graph_constructor_forward(idx, emb1, emb2, gru1_p, gru2_p, noise, alpha, k,
                              batch_block=None):
    B, N = idx.shape
    nnodes, D = emb1.shape
    assert 1 <= k <= N, "top-k requires 1 <= k <= N"

    (wihT0, whhT0, bx0, bhn0,
     wihT1, whhT1, bx1, bhn1) = fuse_gru_params(gru1_p, gru2_p, D)

    # Fold both embedding tables through the fused layer-0 input weights once
    # (outside the kernel, full f32): the in-kernel gather becomes an exact
    # one-hot row selection feeding the layer-0 input gates directly.
    emb_cat = jnp.concatenate([emb1, emb2], axis=1)                         # (NNODES, 2D)
    table0 = jnp.dot(emb_cat, wihT0, precision=lax.Precision.HIGHEST)       # (NNODES, 6D)

    if batch_block is None:
        # Per-sample streamed/working bytes: noise + two adj blocks (double
        # buffered) plus one-hot / gate / hidden-state intermediates.  Budget
        # leaves headroom for v7x (64 MiB VMEM) and v5e's small scoped default.
        per_sample = 4 * (6 * N * N + N * (nnodes + 8 * D))
        budget = 8 * 1024 * 1024
        bb = max(1, min(B, budget // max(per_sample, 1)))
        while B % bb:
            bb -= 1
        batch_block = bb
    assert B % batch_block == 0
    BB = batch_block
    num_blocks = B // BB

    # Rearrange idx so each block's rows are n-major (row = t*BB + b) and the
    # one-hot compare needs no in-kernel transpose/reshape; lane dim last = 1.
    idx_arr = (idx.astype(jnp.int32)
                  .reshape(num_blocks, BB, N)
                  .transpose(0, 2, 1)
                  .reshape(num_blocks * N * BB, 1))

    params = (table0, whhT0, bx0, bhn0, wihT1, whhT1, bx1, bhn1)

    param_bytes = 4 * sum(int(np.prod(p.shape)) for p in params)
    block_bytes = 4 * 2 * (3 * BB * N * N + N * BB)          # noise + 2 adj + idx, dbl-buffered
    work_bytes = 4 * N * BB * (nnodes + 6 * D + 4 * D)       # one-hot, gates, y1 scratch
    vmem_limit = int(min(64 * 2 ** 20,
                         max(32 * 2 ** 20,
                             2 * (param_bytes + block_bytes + work_bytes))))

    kern = functools.partial(magnet_graph_kernel, alpha=float(alpha), k=int(k))
    full2 = lambda g: (0, 0)
    batch3 = lambda g: (g, 0, 0)

    grid_spec = pltpu.PrefetchScalarGridSpec(
        num_scalar_prefetch=0,
        grid=(num_blocks,),
        in_specs=([pl.BlockSpec((N * BB, 1), lambda g: (g, 0))]          # idx, n-major rows
                  + [pl.BlockSpec(p.shape, full2) for p in params]       # tables / fused params
                  + [pl.BlockSpec((BB, N, N), batch3)]),                 # noise
        out_specs=[pl.BlockSpec((BB, N, N), batch3),
                   pl.BlockSpec((BB, N, N), batch3)],
        scratch_shapes=[pltpu.VMEM((N, BB, 2 * D), jnp.float32)],        # layer-1 hidden states
    )

    return pl.pallas_call(
        kern,
        out_shape=(jax.ShapeDtypeStruct((B, N, N), jnp.float32),   # pre-mask adjacency
                   jax.ShapeDtypeStruct((B, N, N), jnp.float32)),  # masked adjacency (module output)
        grid_spec=grid_spec,
        compiler_params=pltpu.CompilerParams(
            dimension_semantics=("parallel",),
            vmem_limit_bytes=vmem_limit),
    )(idx_arr, *params, noise)


# ---------------------------------------------------------------------------
# Parameter init (deterministic, PyTorch-style) and pure-JAX reference.
# ---------------------------------------------------------------------------
def init_gru_params(key, D):
    bound = 1.0 / math.sqrt(D)
    keys = jax.random.split(key, 8)
    u = lambda kk, shape: jax.random.uniform(kk, shape, jnp.float32, -bound, bound)
    return (u(keys[0], (3 * D, D)), u(keys[1], (3 * D, D)),
            u(keys[2], (3 * D,)),   u(keys[3], (3 * D,)),
            u(keys[4], (3 * D, D)), u(keys[5], (3 * D, D)),
            u(keys[6], (3 * D,)),   u(keys[7], (3 * D,)))


def gru_ref(x, p):
    wih0, whh0, bih0, bhh0, wih1, whh1, bih1, bhh1 = p

    def run_layer(x, wih, whh, bih, bhh):
        B, N, D = x.shape

        def step(h, xt):
            xg = jnp.dot(xt, wih.T, precision=lax.Precision.HIGHEST) + bih
            hg = jnp.dot(h, whh.T, precision=lax.Precision.HIGHEST) + bhh
            r = jax.nn.sigmoid(xg[:, :D] + hg[:, :D])
            z = jax.nn.sigmoid(xg[:, D:2 * D] + hg[:, D:2 * D])
            n = jnp.tanh(xg[:, 2 * D:] + r * hg[:, 2 * D:])
            h_new = (1.0 - z) * n + z * h
            return h_new, h_new

        h0 = jnp.zeros((B, D), jnp.float32)
        _, ys = lax.scan(step, h0, jnp.swapaxes(x, 0, 1))
        return jnp.swapaxes(ys, 0, 1)

    y = run_layer(x, wih0, whh0, bih0, bhh0)
    return run_layer(y, wih1, whh1, bih1, bhh1)


def ref_adj_full(idx, emb1, emb2, gru1_p, gru2_p, alpha):
    g1 = gru_ref(emb1[idx], gru1_p)
    g2 = gru_ref(emb2[idx], gru2_p)
    t1 = jnp.tanh(alpha * g1)
    t2 = jnp.tanh(alpha * g2)
    a = (jnp.einsum('bnd,bmd->bnm', t1, t2, precision=lax.Precision.HIGHEST)
         - jnp.einsum('bnd,bmd->bnm', t2, t1, precision=lax.Precision.HIGHEST))
    return jax.nn.relu(jnp.tanh(alpha * a))


if __name__ == "__main__":
    B, N, NNODES, D, K = 2, 8, 20, 32, 3
    ALPHA = 3.0

    key = jax.random.PRNGKey(0)
    k_e1, k_e2, k_g1, k_g2, k_idx, k_noise = jax.random.split(key, 6)
    emb1 = jax.random.normal(k_e1, (NNODES, D), jnp.float32)     # nn.Embedding weights
    emb2 = jax.random.normal(k_e2, (NNODES, D), jnp.float32)
    gru1_p = init_gru_params(k_g1, D)
    gru2_p = init_gru_params(k_g2, D)
    idx = jax.random.randint(k_idx, (B, N), 0, NNODES, jnp.int32)
    noise = jax.random.uniform(k_noise, (B, N, N), jnp.float32)  # torch.rand_like stand-in

    adj_full, adj = graph_constructor_forward(idx, emb1, emb2, gru1_p, gru2_p,
                                              noise, ALPHA, K)
    adj_full, adj = jax.block_until_ready((adj_full, adj))

    # Check 1: pre-mask adjacency vs pure-JAX reference (HIGHEST precision);
    # kernel matmuls run at default MXU precision, hence the small tolerance.
    ref_full = np.asarray(ref_adj_full(idx, emb1, emb2, gru1_p, gru2_p, ALPHA))
    assert np.allclose(np.asarray(adj_full), ref_full, atol=5e-3, rtol=0.0), \
        "adjacency (pre-mask) mismatch"

    # Check 2: in-kernel top-k masking vs lax.top_k on the kernel's own scores.
    scored = adj_full + noise * 0.01
    _, top_idx = lax.top_k(scored, K)
    mask = jnp.sum(jax.nn.one_hot(top_idx, N, dtype=jnp.float32), axis=-2)
    adj_check = np.asarray(adj_full * mask)
    assert np.allclose(np.asarray(adj), adj_check, atol=1e-6), "top-k mask mismatch"

    print("KERNEL_OK")
</pallas_src>

<mosaic_0001>
module attributes {stable_mosaic.version = 11 : i64} {
  func.func @magnet_graph_kernel(%arg0: i32, %arg1: memref<16x1xi32, #tpu.memory_space<vmem>>, %arg2: memref<20x192xf32, #tpu.memory_space<vmem>>, %arg3: memref<64x192xf32, #tpu.memory_space<vmem>>, %arg4: memref<1x192xf32, #tpu.memory_space<vmem>>, %arg5: memref<1x64xf32, #tpu.memory_space<vmem>>, %arg6: memref<64x192xf32, #tpu.memory_space<vmem>>, %arg7: memref<64x192xf32, #tpu.memory_space<vmem>>, %arg8: memref<1x192xf32, #tpu.memory_space<vmem>>, %arg9: memref<1x64xf32, #tpu.memory_space<vmem>>, %arg10: memref<2x8x8xf32, #tpu.memory_space<vmem>>, %arg11: memref<2x8x8xf32, #tpu.memory_space<vmem>>, %arg12: memref<2x8x8xf32, #tpu.memory_space<vmem>>, %arg13: memref<8x2x64xf32, #tpu.memory_space<vmem>>) attributes {dimension_semantics = [#tpu.dimension_semantics<parallel>], iteration_bounds = array<i64: 1>, scalar_prefetch = 0 : i64, scratch_operands = 1 : i64, tpu.core_type = #tpu.core_type<tc>, window_params = [{transform_indices = @transform_0, window_bounds = array<i64: 16, 1>}, {pipeline_mode = #tpu.pipeline_mode<synchronous>, transform_indices = @transform_1, window_bounds = array<i64: 20, 192>}, {pipeline_mode = #tpu.pipeline_mode<synchronous>, transform_indices = @transform_2, window_bounds = array<i64: 64, 192>}, {pipeline_mode = #tpu.pipeline_mode<synchronous>, transform_indices = @transform_3, window_bounds = array<i64: 1, 192>}, {pipeline_mode = #tpu.pipeline_mode<synchronous>, transform_indices = @transform_4, window_bounds = array<i64: 1, 64>}, {pipeline_mode = #tpu.pipeline_mode<synchronous>, transform_indices = @transform_5, window_bounds = array<i64: 64, 192>}, {pipeline_mode = #tpu.pipeline_mode<synchronous>, transform_indices = @transform_6, window_bounds = array<i64: 64, 192>}, {pipeline_mode = #tpu.pipeline_mode<synchronous>, transform_indices = @transform_7, window_bounds = array<i64: 1, 192>}, {pipeline_mode = #tpu.pipeline_mode<synchronous>, transform_indices = @transform_8, window_bounds = array<i64: 1, 64>}, {transform_indices = @transform_9, window_bounds = array<i64: 2, 8, 8>}, {transform_indices = @transform_10, window_bounds = array<i64: 2, 8, 8>}, {transform_indices = @transform_11, window_bounds = array<i64: 2, 8, 8>}]} {
    %c0 = arith.constant 0 : index
    %c0_0 = arith.constant 0 : index
    %0 = vector.load %arg1[%c0, %c0_0] : memref<16x1xi32, #tpu.memory_space<vmem>>, vector<16x1xi32>
    %1 = tpu.iota {dimensions = array<i32: 1>} : vector<16x20xi32>
    %2 = vector.broadcast %0 : vector<16x1xi32> to vector<16x20xi32>
    %3 = arith.cmpi eq, %1, %2 : vector<16x20xi32>
    %4 = arith.extui %3 : vector<16x20xi1> to vector<16x20xi32>
    %5 = arith.sitofp %4 : vector<16x20xi32> to vector<16x20xf32>
    %c0_1 = arith.constant 0 : index
    %c0_2 = arith.constant 0 : index
    %6 = vector.load %arg2[%c0_1, %c0_2] : memref<20x192xf32, #tpu.memory_space<vmem>>, vector<20x192xf32>
    %cst = arith.constant dense<0.000000e+00> : vector<16x192xf32>
    %7 = tpu.matmul %5, %6, %cst {dimension_numbers = #tpu.dot_dimension_numbers<[1], [0], [0], [1], [0, 0, 1, 1], [], []>} : vector<16x20xf32>, vector<20x192xf32>, vector<16x192xf32> -> vector<16x192xf32>
    %c0_3 = arith.constant 0 : index
    %c0_4 = arith.constant 0 : index
    %8 = vector.load %arg4[%c0_3, %c0_4] : memref<1x192xf32, #tpu.memory_space<vmem>>, vector<1x192xf32>
    %9 = vector.broadcast %8 : vector<1x192xf32> to vector<16x192xf32>
    %10 = arith.addf %7, %9 : vector<16x192xf32>
    %c0_5 = arith.constant 0 : index
    %c0_6 = arith.constant 0 : index
    %11 = vector.load %arg3[%c0_5, %c0_6] : memref<64x192xf32, #tpu.memory_space<vmem>>, vector<64x192xf32>
    %c0_7 = arith.constant 0 : index
    %c0_8 = arith.constant 0 : index
    %12 = vector.load %arg7[%c0_7, %c0_8] : memref<64x192xf32, #tpu.memory_space<vmem>>, vector<64x192xf32>
    %c0_9 = arith.constant 0 : index
    %c0_10 = arith.constant 0 : index
    %13 = vector.load %arg6[%c0_9, %c0_10] : memref<64x192xf32, #tpu.memory_space<vmem>>, vector<64x192xf32>
    %c0_11 = arith.constant 0 : index
    %c0_12 = arith.constant 0 : index
    %14 = vector.load %arg8[%c0_11, %c0_12] : memref<1x192xf32, #tpu.memory_space<vmem>>, vector<1x192xf32>
    %c0_13 = arith.constant 0 : index
    %c0_14 = arith.constant 0 : index
    %15 = vector.load %arg5[%c0_13, %c0_14] : memref<1x64xf32, #tpu.memory_space<vmem>>, vector<1x64xf32>
    %c0_15 = arith.constant 0 : index
    %c0_16 = arith.constant 0 : index
    %16 = vector.load %arg9[%c0_15, %c0_16] : memref<1x64xf32, #tpu.memory_space<vmem>>, vector<1x64xf32>
    %cst_17 = arith.constant 0.000000e+00 : f32
    %17 = vector.broadcast %cst_17 : f32 to vector<2x192xf32>
    %cst_18 = arith.constant 0.000000e+00 : f32
    %18 = vector.broadcast %cst_18 : f32 to vector<2x64xf32>
    %cst_19 = arith.constant 0.000000e+00 : f32
    %19 = vector.broadcast %cst_19 : f32 to vector<2x64xf32>
    %20 = vector.extract_strided_slice %10 {offsets = [0, 0], sizes = [2, 192], strides = [1, 1]} : vector<16x192xf32> to vector<2x192xf32>
    %21 = vector.extract_strided_slice %20 {offsets = [0, 0], sizes = [2, 64], strides = [1, 1]} : vector<2x192xf32> to vector<2x64xf32>
    %22 = vector.extract_strided_slice %17 {offsets = [0, 0], sizes = [2, 64], strides = [1, 1]} : vector<2x192xf32> to vector<2x64xf32>
    %23 = arith.addf %21, %22 : vector<2x64xf32>
    %24 = arith.negf %23 : vector<2x64xf32>
    %25 = math.exp %24 : vector<2x64xf32>
    %cst_20 = arith.constant 1.000000e+00 : f32
    %26 = vector.broadcast %cst_20 : f32 to vector<2x64xf32>
    %27 = arith.addf %26, %25 : vector<2x64xf32>
    %28 = arith.divf %26, %27 : vector<2x64xf32>
    %29 = vector.extract_strided_slice %20 {offsets = [0, 64], sizes = [2, 64], strides = [1, 1]} : vector<2x192xf32> to vector<2x64xf32>
    %30 = vector.extract_strided_slice %17 {offsets = [0, 64], sizes = [2, 64], strides = [1, 1]} : vector<2x192xf32> to vector<2x64xf32>
    %31 = arith.addf %29, %30 : vector<2x64xf32>
    %32 = arith.negf %31 : vector<2x64xf32>
    %33 = math.exp %32 : vector<2x64xf32>
    %cst_21 = arith.constant 1.000000e+00 : f32
    %34 = vector.broadcast %cst_21 : f32 to vector<2x64xf32>
    %35 = arith.addf %34, %33 : vector<2x64xf32>
    %36 = arith.divf %34, %35 : vector<2x64xf32>
    %37 = vector.extract_strided_slice %20 {offsets = [0, 128], sizes = [2, 64], strides = [1, 1]} : vector<2x192xf32> to vector<2x64xf32>
    %38 = vector.extract_strided_slice %17 {offsets = [0, 128], sizes = [2, 64], strides = [1, 1]} : vector<2x192xf32> to vector<2x64xf32>
    %39 = vector.broadcast %15 : vector<1x64xf32> to vector<2x64xf32>
    %40 = arith.addf %38, %39 : vector<2x64xf32>
    %41 = arith.mulf %28, %40 : vector<2x64xf32>
    %42 = arith.addf %37, %41 : vector<2x64xf32>
    %43 = math.tanh %42 : vector<2x64xf32>
    %cst_22 = arith.constant 1.000000e+00 : f32
    %44 = vector.broadcast %cst_22 : f32 to vector<2x64xf32>
    %45 = arith.subf %44, %36 : vector<2x64xf32>
    %46 = arith.mulf %45, %43 : vector<2x64xf32>
    %47 = arith.mulf %36, %18 : vector<2x64xf32>
    %48 = arith.addf %46, %47 : vector<2x64xf32>
    %cst_23 = arith.constant dense<0.000000e+00> : vector<2x192xf32>
    %49 = tpu.matmul %48, %13, %cst_23 {dimension_numbers = #tpu.dot_dimension_numbers<[1], [0], [0], [1], [0, 0, 1, 1], [], []>} : vector<2x64xf32>, vector<64x192xf32>, vector<2x192xf32> -> vector<2x192xf32>
    %50 = vector.broadcast %14 : vector<1x192xf32> to vector<2x192xf32>
    %51 = arith.addf %49, %50 : vector<2x192xf32>
    %52 = vector.extract_strided_slice %51 {offsets = [0, 0], sizes = [2, 64], strides = [1, 1]} : vector<2x192xf32> to vector<2x64xf32>
    %53 = vector.extract_strided_slice %17 {offsets = [0, 0], sizes = [2, 64], strides = [1, 1]} : vector<2x192xf32> to vector<2x64xf32>
    %54 = arith.addf %52, %53 : vector<2x64xf32>
    %55 = arith.negf %54 : vector<2x64xf32>
    %56 = math.exp %55 : vector<2x64xf32>
    %cst_24 = arith.constant 1.000000e+00 : f32
    %57 = vector.broadcast %cst_24 : f32 to vector<2x64xf32>
    %58 = arith.addf %57, %56 : vector<2x64xf32>
    %59 = arith.divf %57, %58 : vector<2x64xf32>
    %60 = vector.extract_strided_slice %51 {offsets = [0, 64], sizes = [2, 64], strides = [1, 1]} : vector<2x192xf32> to vector<2x64xf32>
    %61 = vector.extract_strided_slice %17 {offsets = [0, 64], sizes = [2, 64], strides = [1, 1]} : vector<2x192xf32> to vector<2x64xf32>
    %62 = arith.addf %60, %61 : vector<2x64xf32>
    %63 = arith.negf %62 : vector<2x64xf32>
    %64 = math.exp %63 : vector<2x64xf32>
    %cst_25 = arith.constant 1.000000e+00 : f32
    %65 = vector.broadcast %cst_25 : f32 to vector<2x64xf32>
    %66 = arith.addf %65, %64 : vector<2x64xf32>
    %67 = arith.divf %65, %66 : vector<2x64xf32>
    %68 = vector.extract_strided_slice %51 {offsets = [0, 128], sizes = [2, 64], strides = [1, 1]} : vector<2x192xf32> to vector<2x64xf32>
    %69 = vector.extract_strided_slice %17 {offsets = [0, 128], sizes = [2, 64], strides = [1, 1]} : vector<2x192xf32> to vector<2x64xf32>
    %70 = vector.broadcast %16 : vector<1x64xf32> to vector<2x64xf32>
    %71 = arith.addf %69, %70 : vector<2x64xf32>
    %72 = arith.mulf %59, %71 : vector<2x64xf32>
    %73 = arith.addf %68, %72 : vector<2x64xf32>
    %74 = math.tanh %73 : vector<2x64xf32>
    %cst_26 = arith.constant 1.000000e+00 : f32
    %75 = vector.broadcast %cst_26 : f32 to vector<2x64xf32>
    %76 = arith.subf %75, %67 : vector<2x64xf32>
    %77 = arith.mulf %76, %74 : vector<2x64xf32>
    %78 = arith.mulf %67, %19 : vector<2x64xf32>
    %79 = arith.addf %77, %78 : vector<2x64xf32>
    %c0_27 = arith.constant 0 : index
    %c0_28 = arith.constant 0 : index
    %c0_29 = arith.constant 0 : index
    %80 = vector.load %arg13[%c0_27, %c0_28, %c0_29] : memref<8x2x64xf32, #tpu.memory_space<vmem>>, vector<1x2x64xf32>
    %81 = vector.shape_cast %80 : vector<1x2x64xf32> to vector<2x64xf32>
    %82 = vector.shape_cast %79 : vector<2x64xf32> to vector<1x2x64xf32>
    tpu.vector_store %arg13[%c0_27, %c0_28, %c0_29], %82 {strides = array<i32>} : memref<8x2x64xf32, #tpu.memory_space<vmem>>, vector<1x2x64xf32>,
    %83 = vector.extract_strided_slice %10 {offsets = [2, 0], sizes = [2, 192], strides = [1, 1]} : vector<16x192xf32> to vector<2x192xf32>
    %cst_30 = arith.constant dense<0.000000e+00> : vector<2x192xf32>
    %84 = tpu.matmul %48, %11, %cst_30 {dimension_numbers = #tpu.dot_dimension_numbers<[1], [0], [0], [1], [0, 0, 1, 1], [], []>} : vector<2x64xf32>, vector<64x192xf32>, vector<2x192xf32> -> vector<2x192xf32>
    %85 = vector.extract_strided_slice %83 {offsets = [0, 0], sizes = [2, 64], strides = [1, 1]} : vector<2x192xf32> to vector<2x64xf32>
    %86 = vector.extract_strided_slice %84 {offsets = [0, 0], sizes = [2, 64], strides = [1, 1]} : vector<2x192xf32> to vector<2x64xf32>
    %87 = arith.addf %85, %86 : vector<2x64xf32>
    %88 = arith.negf %87 : vector<2x64xf32>
    %89 = math.exp %88 : vector<2x64xf32>
    %cst_31 = arith.constant 1.000000e+00 : f32
    %90 = vector.broadcast %cst_31 : f32 to vector<2x64xf32>
    %91 = arith.addf %90, %89 : vector<2x64xf32>
    %92 = arith.divf %90, %91 : vector<2x64xf32>
    %93 = vector.extract_strided_slice %83 {offsets = [0, 64], sizes = [2, 64], strides = [1, 1]} : vector<2x192xf32> to vector<2x64xf32>
    %94 = vector.extract_strided_slice %84 {offsets = [0, 64], sizes = [2, 64], strides = [1, 1]} : vector<2x192xf32> to vector<2x64xf32>
    %95 = arith.addf %93, %94 : vector<2x64xf32>
    %96 = arith.negf %95 : vector<2x64xf32>
    %97 = math.exp %96 : vector<2x64xf32>
    %cst_32 = arith.constant 1.000000e+00 : f32
    %98 = vector.broadcast %cst_32 : f32 to vector<2x64xf32>
    %99 = arith.addf %98, %97 : vector<2x64xf32>
    %100 = arith.divf %98, %99 : vector<2x64xf32>
    %101 = vector.extract_strided_slice %83 {offsets = [0, 128], sizes = [2, 64], strides = [1, 1]} : vector<2x192xf32> to vector<2x64xf32>
    %102 = vector.extract_strided_slice %84 {offsets = [0, 128], sizes = [2, 64], strides = [1, 1]} : vector<2x192xf32> to vector<2x64xf32>
    %103 = vector.broadcast %15 : vector<1x64xf32> to vector<2x64xf32>
    %104 = arith.addf %102, %103 : vector<2x64xf32>
    %105 = arith.mulf %92, %104 : vector<2x64xf32>
    %106 = arith.addf %101, %105 : vector<2x64xf32>
    %107 = math.tanh %106 : vector<2x64xf32>
    %cst_33 = arith.constant 1.000000e+00 : f32
    %108 = vector.broadcast %cst_33 : f32 to vector<2x64xf32>
    %109 = arith.subf %108, %100 : vector<2x64xf32>
    %110 = arith.mulf %109, %107 : vector<2x64xf32>
    %111 = arith.mulf %100, %48 : vector<2x64xf32>
    %112 = arith.addf %110, %111 : vector<2x64xf32>
    %cst_34 = arith.constant dense<0.000000e+00> : vector<2x192xf32>
    %113 = tpu.matmul %112, %13, %cst_34 {dimension_numbers = #tpu.dot_dimension_numbers<[1], [0], [0], [1], [0, 0, 1, 1], [], []>} : vector<2x64xf32>, vector<64x192xf32>, vector<2x192xf32> -> vector<2x192xf32>
    %114 = vector.broadcast %14 : vector<1x192xf32> to vector<2x192xf32>
    %115 = arith.addf %113, %114 : vector<2x192xf32>
    %cst_35 = arith.constant dense<0.000000e+00> : vector<2x192xf32>
    %116 = tpu.matmul %79, %12, %cst_35 {dimension_numbers = #tpu.dot_dimension_numbers<[1], [0], [0], [1], [0, 0, 1, 1], [], []>} : vector<2x64xf32>, vector<64x192xf32>, vector<2x192xf32> -> vector<2x192xf32>
    %117 = vector.extract_strided_slice %115 {offsets = [0, 0], sizes = [2, 64], strides = [1, 1]} : vector<2x192xf32> to vector<2x64xf32>
    %118 = vector.extract_strided_slice %116 {offsets = [0, 0], sizes = [2, 64], strides = [1, 1]} : vector<2x192xf32> to vector<2x64xf32>
    %119 = arith.addf %117, %118 : vector<2x64xf32>
    %120 = arith.negf %119 : vector<2x64xf32>
    %121 = math.exp %120 : vector<2x64xf32>
    %cst_36 = arith.constant 1.000000e+00 : f32
    %122 = vector.broadcast %cst_36 : f32 to vector<2x64xf32>
    %123 = arith.addf %122, %121 : vector<2x64xf32>
    %124 = arith.divf %122, %123 : vector<2x64xf32>
    %125 = vector.extract_strided_slice %115 {offsets = [0, 64], sizes = [2, 64], strides = [1, 1]} : vector<2x192xf32> to vector<2x64xf32>
    %126 = vector.extract_strided_slice %116 {offsets = [0, 64], sizes = [2, 64], strides = [1, 1]} : vector<2x192xf32> to vector<2x64xf32>
    %127 = arith.addf %125, %126 : vector<2x64xf32>
    %128 = arith.negf %127 : vector<2x64xf32>
    %129 = math.exp %128 : vector<2x64xf32>
    %cst_37 = arith.constant 1.000000e+00 : f32
    %130 = vector.broadcast %cst_37 : f32 to vector<2x64xf32>
    %131 = arith.addf %130, %129 : vector<2x64xf32>
    %132 = arith.divf %130, %131 : vector<2x64xf32>
    %133 = vector.extract_strided_slice %115 {offsets = [0, 128], sizes = [2, 64], strides = [1, 1]} : vector<2x192xf32> to vector<2x64xf32>
    %134 = vector.extract_strided_slice %116 {offsets = [0, 128], sizes = [2, 64], strides = [1, 1]} : vector<2x192xf32> to vector<2x64xf32>
    %135 = vector.broadcast %16 : vector<1x64xf32> to vector<2x64xf32>
    %136 = arith.addf %134, %135 : vector<2x64xf32>
    %137 = arith.mulf %124, %136 : vector<2x64xf32>
    %138 = arith.addf %133, %137 : vector<2x64xf32>
    %139 = math.tanh %138 : vector<2x64xf32>
    %cst_38 = arith.constant 1.000000e+00 : f32
    %140 = vector.broadcast %cst_38 : f32 to vector<2x64xf32>
    %141 = arith.subf %140, %132 : vector<2x64xf32>
    %142 = arith.mulf %141, %139 : vector<2x64xf32>
    %143 = arith.mulf %132, %79 : vector<2x64xf32>
    %144 = arith.addf %142, %143 : vector<2x64xf32>
    %c1 = arith.constant 1 : index
    %c0_39 = arith.constant 0 : index
    %c0_40 = arith.constant 0 : index
    %145 = vector.load %arg13[%c1, %c0_39, %c0_40] : memref<8x2x64xf32, #tpu.memory_space<vmem>>, vector<1x2x64xf32>
    %146 = vector.shape_cast %145 : vector<1x2x64xf32> to vector<2x64xf32>
    %147 = vector.shape_cast %144 : vector<2x64xf32> to vector<1x2x64xf32>
    tpu.vector_store %arg13[%c1, %c0_39, %c0_40], %147 {strides = array<i32>} : memref<8x2x64xf32, #tpu.memory_space<vmem>>, vector<1x2x64xf32>,
    %148 = vector.extract_strided_slice %10 {offsets = [4, 0], sizes = [2, 192], strides = [1, 1]} : vector<16x192xf32> to vector<2x192xf32>
    %cst_41 = arith.constant dense<0.000000e+00> : vector<2x192xf32>
    %149 = tpu.matmul %112, %11, %cst_41 {dimension_numbers = #tpu.dot_dimension_numbers<[1], [0], [0], [1], [0, 0, 1, 1], [], []>} : vector<2x64xf32>, vector<64x192xf32>, vector<2x192xf32> -> vector<2x192xf32>
    %150 = vector.extract_strided_slice %148 {offsets = [0, 0], sizes = [2, 64], strides = [1, 1]} : vector<2x192xf32> to vector<2x64xf32>
    %151 = vector.extract_strided_slice %149 {offsets = [0, 0], sizes = [2, 64], strides = [1, 1]} : vector<2x192xf32> to vector<2x64xf32>
    %152 = arith.addf %150, %151 : vector<2x64xf32>
    %153 = arith.negf %152 : vector<2x64xf32>
    %154 = math.exp %153 : vector<2x64xf32>
    %cst_42 = arith.constant 1.000000e+00 : f32
    %155 = vector.broadcast %cst_42 : f32 to vector<2x64xf32>
    %156 = arith.addf %155, %154 : vector<2x64xf32>
    %157 = arith.divf %155, %156 : vector<2x64xf32>
    %158 = vector.extract_strided_slice %148 {offsets = [0, 64], sizes = [2, 64], strides = [1, 1]} : vector<2x192xf32> to vector<2x64xf32>
    %159 = vector.extract_strided_slice %149 {offsets = [0, 64], sizes = [2, 64], strides = [1, 1]} : vector<2x192xf32> to vector<2x64xf32>
    %160 = arith.addf %158, %159 : vector<2x64xf32>
    %161 = arith.negf %160 : vector<2x64xf32>
    %162 = math.exp %161 : vector<2x64xf32>
    %cst_43 = arith.constant 1.000000e+00 : f32
    %163 = vector.broadcast %cst_43 : f32 to vector<2x64xf32>
    %164 = arith.addf %163, %162 : vector<2x64xf32>
    %165 = arith.divf %163, %164 : vector<2x64xf32>
    %166 = vector.extract_strided_slice %148 {offsets = [0, 128], sizes = [2, 64], strides = [1, 1]} : vector<2x192xf32> to vector<2x64xf32>
    %167 = vector.extract_strided_slice %149 {offsets = [0, 128], sizes = [2, 64], strides = [1, 1]} : vector<2x192xf32> to vector<2x64xf32>
    %168 = vector.broadcast %15 : vector<1x64xf32> to vector<2x64xf32>
    %169 = arith.addf %167, %168 : vector<2x64xf32>
    %170 = arith.mulf %157, %169 : vector<2x64xf32>
    %171 = arith.addf %166, %170 : vector<2x64xf32>
    %172 = math.tanh %171 : vector<2x64xf32>
    %cst_44 = arith.constant 1.000000e+00 : f32
    %173 = vector.broadcast %cst_44 : f32 to vector<2x64xf32>
    %174 = arith.subf %173, %165 : vector<2x64xf32>
    %175 = arith.mulf %174, %172 : vector<2x64xf32>
    %176 = arith.mulf %165, %112 : vector<2x64xf32>
    %177 = arith.addf %175, %176 : vector<2x64xf32>
    %cst_45 = arith.constant dense<0.000000e+00> : vector<2x192xf32>
    %178 = tpu.matmul %177, %13, %cst_45 {dimension_numbers = #tpu.dot_dimension_numbers<[1], [0], [0], [1], [0, 0, 1, 1], [], []>} : vector<2x64xf32>, vector<64x192xf32>, vector<2x192xf32> -> vector<2x192xf32>
    %179 = vector.broadcast %14 : vector<1x192xf32> to vector<2x192xf32>
    %180 = arith.addf %178, %179 : vector<2x192xf32>
    %cst_46 = arith.constant dense<0.000000e+00> : vector<2x192xf32>
    %181 = tpu.matmul %144, %12, %cst_46 {dimension_numbers = #tpu.dot_dimension_numbers<[1], [0], [0], [1], [0, 0, 1, 1], [], []>} : vector<2x64xf32>, vector<64x192xf32>, vector<2x192xf32> -> vector<2x192xf32>
    %182 = vector.extract_strided_slice %180 {offsets = [0, 0], sizes = [2, 64], strides = [1, 1]} : vector<2x192xf32> to vector<2x64xf32>
    %183 = vector.extract_strided_slice %181 {offsets = [0, 0], sizes = [2, 64], strides = [1, 1]} : vector<2x192xf32> to vector<2x64xf32>
    %184 = arith.addf %182, %183 : vector<2x64xf32>
    %185 = arith.negf %184 : vector<2x64xf32>
    %186 = math.exp %185 : vector<2x64xf32>
    %cst_47 = arith.constant 1.000000e+00 : f32
    %187 = vector.broadcast %cst_47 : f32 to vector<2x64xf32>
    %188 = arith.addf %187, %186 : vector<2x64xf32>
    %189 = arith.divf %187, %188 : vector<2x64xf32>
    %190 = vector.extract_strided_slice %180 {offsets = [0, 64], sizes = [2, 64], strides = [1, 1]} : vector<2x192xf32> to vector<2x64xf32>
    %191 = vector.extract_strided_slice %181 {offsets = [0, 64], sizes = [2, 64], strides = [1, 1]} : vector<2x192xf32> to vector<2x64xf32>
    %192 = arith.addf %190, %191 : vector<2x64xf32>
    %193 = arith.negf %192 : vector<2x64xf32>
    %194 = math.exp %193 : vector<2x64xf32>
    %cst_48 = arith.constant 1.000000e+00 : f32
    %195 = vector.broadcast %cst_48 : f32 to vector<2x64xf32>
    %196 = arith.addf %195, %194 : vector<2x64xf32>
    %197 = arith.divf %195, %196 : vector<2x64xf32>
    %198 = vector.extract_strided_slice %180 {offsets = [0, 128], sizes = [2, 64], strides = [1, 1]} : vector<2x192xf32> to vector<2x64xf32>
    %199 = vector.extract_strided_slice %181 {offsets = [0, 128], sizes = [2, 64], strides = [1, 1]} : vector<2x192xf32> to vector<2x64xf32>
    %200 = vector.broadcast %16 : vector<1x64xf32> to vector<2x64xf32>
    %201 = arith.addf %199, %200 : vector<2x64xf32>
    %202 = arith.mulf %189, %201 : vector<2x64xf32>
    %203 = arith.addf %198, %202 : vector<2x64xf32>
    %204 = math.tanh %203 : vector<2x64xf32>
    %cst_49 = arith.constant 1.000000e+00 : f32
    %205 = vector.broadcast %cst_49 : f32 to vector<2x64xf32>
    %206 = arith.subf %205, %197 : vector<2x64xf32>
    %207 = arith.mulf %206, %204 : vector<2x64xf32>
    %208 = arith.mulf %197, %144 : vector<2x64xf32>
    %209 = arith.addf %207, %208 : vector<2x64xf32>
    %c2 = arith.constant 2 : index
    %c0_50 = arith.constant 0 : index
    %c0_51 = arith.constant 0 : index
    %210 = vector.load %arg13[%c2, %c0_50, %c0_51] : memref<8x2x64xf32, #tpu.memory_space<vmem>>, vector<1x2x64xf32>
    %211 = vector.shape_cast %210 : vector<1x2x64xf32> to vector<2x64xf32>
    %212 = vector.shape_cast %209 : vector<2x64xf32> to vector<1x2x64xf32>
    tpu.vector_store %arg13[%c2, %c0_50, %c0_51], %212 {strides = array<i32>} : memref<8x2x64xf32, #tpu.memory_space<vmem>>, vector<1x2x64xf32>,
    %213 = vector.extract_strided_slice %10 {offsets = [6, 0], sizes = [2, 192], strides = [1, 1]} : vector<16x192xf32> to vector<2x192xf32>
    %cst_52 = arith.constant dense<0.000000e+00> : vector<2x192xf32>
    %214 = tpu.matmul %177, %11, %cst_52 {dimension_numbers = #tpu.dot_dimension_numbers<[1], [0], [0], [1], [0, 0, 1, 1], [], []>} : vector<2x64xf32>, vector<64x192xf32>, vector<2x192xf32> -> vector<2x192xf32>
    %215 = vector.extract_strided_slice %213 {offsets = [0, 0], sizes = [2, 64], strides = [1, 1]} : vector<2x192xf32> to vector<2x64xf32>
    %216 = vector.extract_strided_slice %214 {offsets = [0, 0], sizes = [2, 64], strides = [1, 1]} : vector<2x192xf32> to vector<2x64xf32>
    %217 = arith.addf %215, %216 : vector<2x64xf32>
    %218 = arith.negf %217 : vector<2x64xf32>
    %219 = math.exp %218 : vector<2x64xf32>
    %cst_53 = arith.constant 1.000000e+00 : f32
    %220 = vector.broadcast %cst_53 : f32 to vector<2x64xf32>
    %221 = arith.addf %220, %219 : vector<2x64xf32>
    %222 = arith.divf %220, %221 : vector<2x64xf32>
    %223 = vector.extract_strided_slice %213 {offsets = [0, 64], sizes = [2, 64], strides = [1, 1]} : vector<2x192xf32> to vector<2x64xf32>
    %224 = vector.extract_strided_slice %214 {offsets = [0, 64], sizes = [2, 64], strides = [1, 1]} : vector<2x192xf32> to vector<2x64xf32>
    %225 = arith.addf %223, %224 : vector<2x64xf32>
    %226 = arith.negf %225 : vector<2x64xf32>
    %227 = math.exp %226 : vector<2x64xf32>
    %cst_54 = arith.constant 1.000000e+00 : f32
    %228 = vector.broadcast %cst_54 : f32 to vector<2x64xf32>
    %229 = arith.addf %228, %227 : vector<2x64xf32>
    %230 = arith.divf %228, %229 : vector<2x64xf32>
    %231 = vector.extract_strided_slice %213 {offsets = [0, 128], sizes = [2, 64], strides = [1, 1]} : vector<2x192xf32> to vector<2x64xf32>
    %232 = vector.extract_strided_slice %214 {offsets = [0, 128], sizes = [2, 64], strides = [1, 1]} : vector<2x192xf32> to vector<2x64xf32>
    %233 = vector.broadcast %15 : vector<1x64xf32> to vector<2x64xf32>
    %234 = arith.addf %232, %233 : vector<2x64xf32>
    %235 = arith.mulf %222, %234 : vector<2x64xf32>
    %236 = arith.addf %231, %235 : vector<2x64xf32>
    %237 = math.tanh %236 : vector<2x64xf32>
    %cst_55 = arith.constant 1.000000e+00 : f32
    %238 = vector.broadcast %cst_55 : f32 to vector<2x64xf32>
    %239 = arith.subf %238, %230 : vector<2x64xf32>
    %240 = arith.mulf %239, %237 : vector<2x64xf32>
    %241 = arith.mulf %230, %177 : vector<2x64xf32>
    %242 = arith.addf %240, %241 : vector<2x64xf32>
    %cst_56 = arith.constant dense<0.000000e+00> : vector<2x192xf32>
    %243 = tpu.matmul %242, %13, %cst_56 {dimension_numbers = #tpu.dot_dimension_numbers<[1], [0], [0], [1], [0, 0, 1, 1], [], []>} : vector<2x64xf32>, vector<64x192xf32>, vector<2x192xf32> -> vector<2x192xf32>
    %244 = vector.broadcast %14 : vector<1x192xf32> to vector<2x192xf32>
    %245 = arith.addf %243, %244 : vector<2x192xf32>
    %cst_57 = arith.constant dense<0.000000e+00> : vector<2x192xf32>
    %246 = tpu.matmul %209, %12, %cst_57 {dimension_numbers = #tpu.dot_dimension_numbers<[1], [0], [0], [1], [0, 0, 1, 1], [], []>} : vector<2x64xf32>, vector<64x192xf32>, vector<2x192xf32> -> vector<2x192xf32>
    %247 = vector.extract_strided_slice %245 {offsets = [0, 0], sizes = [2, 64], strides = [1, 1]} : vector<2x192xf32> to vector<2x64xf32>
    %248 = vector.extract_strided_slice %246 {offsets = [0, 0], sizes = [2, 64], strides = [1, 1]} : vector<2x192xf32> to vector<2x64xf32>
    %249 = arith.addf %247, %248 : vector<2x64xf32>
    %250 = arith.negf %249 : vector<2x64xf32>
    %251 = math.exp %250 : vector<2x64xf32>
    %cst_58 = arith.constant 1.000000e+00 : f32
    %252 = vector.broadcast %cst_58 : f32 to vector<2x64xf32>
    %253 = arith.addf %252, %251 : vector<2x64xf32>
    %254 = arith.divf %252, %253 : vector<2x64xf32>
    %255 = vector.extract_strided_slice %245 {offsets = [0, 64], sizes = [2, 64], strides = [1, 1]} : vector<2x192xf32> to vector<2x64xf32>
    %256 = vector.extract_strided_slice %246 {offsets = [0, 64], sizes = [2, 64], strides = [1, 1]} : vector<2x192xf32> to vector<2x64xf32>
    %257 = arith.addf %255, %256 : vector<2x64xf32>
    %258 = arith.negf %257 : vector<2x64xf32>
    %259 = math.exp %258 : vector<2x64xf32>
    %cst_59 = arith.constant 1.000000e+00 : f32
    %260 = vector.broadcast %cst_59 : f32 to vector<2x64xf32>
    %261 = arith.addf %260, %259 : vector<2x64xf32>
    %262 = arith.divf %260, %261 : vector<2x64xf32>
    %263 = vector.extract_strided_slice %245 {offsets = [0, 128], sizes = [2, 64], strides = [1, 1]} : vector<2x192xf32> to vector<2x64xf32>
    %264 = vector.extract_strided_slice %246 {offsets = [0, 128], sizes = [2, 64], strides = [1, 1]} : vector<2x192xf32> to vector<2x64xf32>
    %265 = vector.broadcast %16 : vector<1x64xf32> to vector<2x64xf32>
    %266 = arith.addf %264, %265 : vector<2x64xf32>
    %267 = arith.mulf %254, %266 : vector<2x64xf32>
    %268 = arith.addf %263, %267 : vector<2x64xf32>
    %269 = math.tanh %268 : vector<2x64xf32>
    %cst_60 = arith.constant 1.000000e+00 : f32
    %270 = vector.broadcast %cst_60 : f32 to vector<2x64xf32>
    %271 = arith.subf %270, %262 : vector<2x64xf32>
    %272 = arith.mulf %271, %269 : vector<2x64xf32>
    %273 = arith.mulf %262, %209 : vector<2x64xf32>
    %274 = arith.addf %272, %273 : vector<2x64xf32>
    %c3 = arith.constant 3 : index
    %c0_61 = arith.constant 0 : index
    %c0_62 = arith.constant 0 : index
    %275 = vector.load %arg13[%c3, %c0_61, %c0_62] : memref<8x2x64xf32, #tpu.memory_space<vmem>>, vector<1x2x64xf32>
    %276 = vector.shape_cast %275 : vector<1x2x64xf32> to vector<2x64xf32>
    %277 = vector.shape_cast %274 : vector<2x64xf32> to vector<1x2x64xf32>
    tpu.vector_store %arg13[%c3, %c0_61, %c0_62], %277 {strides = array<i32>} : memref<8x2x64xf32, #tpu.memory_space<vmem>>, vector<1x2x64xf32>,
    %278 = vector.extract_strided_slice %10 {offsets = [8, 0], sizes = [2, 192], strides = [1, 1]} : vector<16x192xf32> to vector<2x192xf32>
    %cst_63 = arith.constant dense<0.000000e+00> : vector<2x192xf32>
    %279 = tpu.matmul %242, %11, %cst_63 {dimension_numbers = #tpu.dot_dimension_numbers<[1], [0], [0], [1], [0, 0, 1, 1], [], []>} : vector<2x64xf32>, vector<64x192xf32>, vector<2x192xf32> -> vector<2x192xf32>
    %280 = vector.extract_strided_slice %278 {offsets = [0, 0], sizes = [2, 64], strides = [1, 1]} : vector<2x192xf32> to vector<2x64xf32>
    %281 = vector.extract_strided_slice %279 {offsets = [0, 0], sizes = [2, 64], strides = [1, 1]} : vector<2x192xf32> to vector<2x64xf32>
    %282 = arith.addf %280, %281 : vector<2x64xf32>
    %283 = arith.negf %282 : vector<2x64xf32>
    %284 = math.exp %283 : vector<2x64xf32>
    %cst_64 = arith.constant 1.000000e+00 : f32
    %285 = vector.broadcast %cst_64 : f32 to vector<2x64xf32>
    %286 = arith.addf %285, %284 : vector<2x64xf32>
    %287 = arith.divf %285, %286 : vector<2x64xf32>
    %288 = vector.extract_strided_slice %278 {offsets = [0, 64], sizes = [2, 64], strides = [1, 1]} : vector<2x192xf32> to vector<2x64xf32>
    %289 = vector.extract_strided_slice %279 {offsets = [0, 64], sizes = [2, 64], strides = [1, 1]} : vector<2x192xf32> to vector<2x64xf32>
    %290 = arith.addf %288, %289 : vector<2x64xf32>
    %291 = arith.negf %290 : vector<2x64xf32>
    %292 = math.exp %291 : vector<2x64xf32>
    %cst_65 = arith.constant 1.000000e+00 : f32
    %293 = vector.broadcast %cst_65 : f32 to vector<2x64xf32>
    %294 = arith.addf %293, %292 : vector<2x64xf32>
    %295 = arith.divf %293, %294 : vector<2x64xf32>
    %296 = vector.extract_strided_slice %278 {offsets = [0, 128], sizes = [2, 64], strides = [1, 1]} : vector<2x192xf32> to vector<2x64xf32>
    %297 = vector.extract_strided_slice %279 {offsets = [0, 128], sizes = [2, 64], strides = [1, 1]} : vector<2x192xf32> to vector<2x64xf32>
    %298 = vector.broadcast %15 : vector<1x64xf32> to vector<2x64xf32>
    %299 = arith.addf %297, %298 : vector<2x64xf32>
    %300 = arith.mulf %287, %299 : vector<2x64xf32>
    %301 = arith.addf %296, %300 : vector<2x64xf32>
    %302 = math.tanh %301 : vector<2x64xf32>
    %cst_66 = arith.constant 1.000000e+00 : f32
    %303 = vector.broadcast %cst_66 : f32 to vector<2x64xf32>
    %304 = arith.subf %303, %295 : vector<2x64xf32>
    %305 = arith.mulf %304, %302 : vector<2x64xf32>
    %306 = arith.mulf %295, %242 : vector<2x64xf32>
    %307 = arith.addf %305, %306 : vector<2x64xf32>
    %cst_67 = arith.constant dense<0.000000e+00> : vector<2x192xf32>
    %308 = tpu.matmul %307, %13, %cst_67 {dimension_numbers = #tpu.dot_dimension_numbers<[1], [0], [0], [1], [0, 0, 1, 1], [], []>} : vector<2x64xf32>, vector<64x192xf32>, vector<2x192xf32> -> vector<2x192xf32>
    %309 = vector.broadcast %14 : vector<1x192xf32> to vector<2x192xf32>
    %310 = arith.addf %308, %309 : vector<2x192xf32>
    %cst_68 = arith.constant dense<0.000000e+00> : vector<2x192xf32>
    %311 = tpu.matmul %274, %12, %cst_68 {dimension_numbers = #tpu.dot_dimension_numbers<[1], [0], [0], [1], [0, 0, 1, 1], [], []>} : vector<2x64xf32>, vector<64x192xf32>, vector<2x192xf32> -> vector<2x192xf32>
    %312 = vector.extract_strided_slice %310 {offsets = [0, 0], sizes = [2, 64], strides = [1, 1]} : vector<2x192xf32> to vector<2x64xf32>
    %313 = vector.extract_strided_slice %311 {offsets = [0, 0], sizes = [2, 64], strides = [1, 1]} : vector<2x192xf32> to vector<2x64xf32>
    %314 = arith.addf %312, %313 : vector<2x64xf32>
    %315 = arith.negf %314 : vector<2x64xf32>
    %316 = math.exp %315 : vector<2x64xf32>
    %cst_69 = arith.constant 1.000000e+00 : f32
    %317 = vector.broadcast %cst_69 : f32 to vector<2x64xf32>
    %318 = arith.addf %317, %316 : vector<2x64xf32>
    %319 = arith.divf %317, %318 : vector<2x64xf32>
    %320 = vector.extract_strided_slice %310 {offsets = [0, 64], sizes = [2, 64], strides = [1, 1]} : vector<2x192xf32> to vector<2x64xf32>
    %321 = vector.extract_strided_slice %311 {offsets = [0, 64], sizes = [2, 64], strides = [1, 1]} : vector<2x192xf32> to vector<2x64xf32>
    %322 = arith.addf %320, %321 : vector<2x64xf32>
    %323 = arith.negf %322 : vector<2x64xf32>
    %324 = math.exp %323 : vector<2x64xf32>
    %cst_70 = arith.constant 1.000000e+00 : f32
    %325 = vector.broadcast %cst_70 : f32 to vector<2x64xf32>
    %326 = arith.addf %325, %324 : vector<2x64xf32>
    %327 = arith.divf %325, %326 : vector<2x64xf32>
    %328 = vector.extract_strided_slice %310 {offsets = [0, 128], sizes = [2, 64], strides = [1, 1]} : vector<2x192xf32> to vector<2x64xf32>
    %329 = vector.extract_strided_slice %311 {offsets = [0, 128], sizes = [2, 64], strides = [1, 1]} : vector<2x192xf32> to vector<2x64xf32>
    %330 = vector.broadcast %16 : vector<1x64xf32> to vector<2x64xf32>
    %331 = arith.addf %329, %330 : vector<2x64xf32>
    %332 = arith.mulf %319, %331 : vector<2x64xf32>
    %333 = arith.addf %328, %332 : vector<2x64xf32>
    %334 = math.tanh %333 : vector<2x64xf32>
    %cst_71 = arith.constant 1.000000e+00 : f32
    %335 = vector.broadcast %cst_71 : f32 to vector<2x64xf32>
    %336 = arith.subf %335, %327 : vector<2x64xf32>
    %337 = arith.mulf %336, %334 : vector<2x64xf32>
    %338 = arith.mulf %327, %274 : vector<2x64xf32>
    %339 = arith.addf %337, %338 : vector<2x64xf32>
    %c4 = arith.constant 4 : index
    %c0_72 = arith.constant 0 : index
    %c0_73 = arith.constant 0 : index
    %340 = vector.load %arg13[%c4, %c0_72, %c0_73] : memref<8x2x64xf32, #tpu.memory_space<vmem>>, vector<1x2x64xf32>
    %341 = vector.shape_cast %340 : vector<1x2x64xf32> to vector<2x64xf32>
    %342 = vector.shape_cast %339 : vector<2x64xf32> to vector<1x2x64xf32>
    tpu.vector_store %arg13[%c4, %c0_72, %c0_73], %342 {strides = array<i32>} : memref<8x2x64xf32, #tpu.memory_space<vmem>>, vector<1x2x64xf32>,
    %343 = vector.extract_strided_slice %10 {offsets = [10, 0], sizes = [2, 192], strides = [1, 1]} : vector<16x192xf32> to vector<2x192xf32>
    %cst_74 = arith.constant dense<0.000000e+00> : vector<2x192xf32>
    %344 = tpu.matmul %307, %11, %cst_74 {dimension_numbers = #tpu.dot_dimension_numbers<[1], [0], [0], [1], [0, 0, 1, 1], [], []>} : vector<2x64xf32>, vector<64x192xf32>, vector<2x192xf32> -> vector<2x192xf32>
    %345 = vector.extract_strided_slice %343 {offsets = [0, 0], sizes = [2, 64], strides = [1, 1]} : vector<2x192xf32> to vector<2x64xf32>
    %346 = vector.extract_strided_slice %344 {offsets = [0, 0], sizes = [2, 64], strides = [1, 1]} : vector<2x192xf32> to vector<2x64xf32>
    %347 = arith.addf %345, %346 : vector<2x64xf32>
    %348 = arith.negf %347 : vector<2x64xf32>
    %349 = math.exp %348 : vector<2x64xf32>
    %cst_75 = arith.constant 1.000000e+00 : f32
    %350 = vector.broadcast %cst_75 : f32 to vector<2x64xf32>
    %351 = arith.addf %350, %349 : vector<2x64xf32>
    %352 = arith.divf %350, %351 : vector<2x64xf32>
    %353 = vector.extract_strided_slice %343 {offsets = [0, 64], sizes = [2, 64], strides = [1, 1]} : vector<2x192xf32> to vector<2x64xf32>
    %354 = vector.extract_strided_slice %344 {offsets = [0, 64], sizes = [2, 64], strides = [1, 1]} : vector<2x192xf32> to vector<2x64xf32>
    %355 = arith.addf %353, %354 : vector<2x64xf32>
    %356 = arith.negf %355 : vector<2x64xf32>
    %357 = math.exp %356 : vector<2x64xf32>
    %cst_76 = arith.constant 1.000000e+00 : f32
    %358 = vector.broadcast %cst_76 : f32 to vector<2x64xf32>
    %359 = arith.addf %358, %357 : vector<2x64xf32>
    %360 = arith.divf %358, %359 : vector<2x64xf32>
    %361 = vector.extract_strided_slice %343 {offsets = [0, 128], sizes = [2, 64], strides = [1, 1]} : vector<2x192xf32> to vector<2x64xf32>
    %362 = vector.extract_strided_slice %344 {offsets = [0, 128], sizes = [2, 64], strides = [1, 1]} : vector<2x192xf32> to vector<2x64xf32>
    %363 = vector.broadcast %15 : vector<1x64xf32> to vector<2x64xf32>
    %364 = arith.addf %362, %363 : vector<2x64xf32>
    %365 = arith.mulf %352, %364 : vector<2x64xf32>
    %366 = arith.addf %361, %365 : vector<2x64xf32>
    %367 = math.tanh %366 : vector<2x64xf32>
    %cst_77 = arith.constant 1.000000e+00 : f32
    %368 = vector.broadcast %cst_77 : f32 to vector<2x64xf32>
    %369 = arith.subf %368, %360 : vector<2x64xf32>
    %370 = arith.mulf %369, %367 : vector<2x64xf32>
    %371 = arith.mulf %360, %307 : vector<2x64xf32>
    %372 = arith.addf %370, %371 : vector<2x64xf32>
    %cst_78 = arith.constant dense<0.000000e+00> : vector<2x192xf32>
    %373 = tpu.matmul %372, %13, %cst_78 {dimension_numbers = #tpu.dot_dimension_numbers<[1], [0], [0], [1], [0, 0, 1, 1], [], []>} : vector<2x64xf32>, vector<64x192xf32>, vector<2x192xf32> -> vector<2x192xf32>
    %374 = vector.broadcast %14 : vector<1x192xf32> to vector<2x192xf32>
    %375 = arith.addf %373, %374 : vector<2x192xf32>
    %cst_79 = arith.constant dense<0.000000e+00> : vector<2x192xf32>
    %376 = tpu.matmul %339, %12, %cst_79 {dimension_numbers = #tpu.dot_dimension_numbers<[1], [0], [0], [1], [0, 0, 1, 1], [], []>} : vector<2x64xf32>, vector<64x192xf32>, vector<2x192xf32> -> vector<2x192xf32>
    %377 = vector.extract_strided_slice %375 {offsets = [0, 0], sizes = [2, 64], strides = [1, 1]} : vector<2x192xf32> to vector<2x64xf32>
    %378 = vector.extract_strided_slice %376 {offsets = [0, 0], sizes = [2, 64], strides = [1, 1]} : vector<2x192xf32> to vector<2x64xf32>
    %379 = arith.addf %377, %378 : vector<2x64xf32>
    %380 = arith.negf %379 : vector<2x64xf32>
    %381 = math.exp %380 : vector<2x64xf32>
    %cst_80 = arith.constant 1.000000e+00 : f32
    %382 = vector.broadcast %cst_80 : f32 to vector<2x64xf32>
    %383 = arith.addf %382, %381 : vector<2x64xf32>
    %384 = arith.divf %382, %383 : vector<2x64xf32>
    %385 = vector.extract_strided_slice %375 {offsets = [0, 64], sizes = [2, 64], strides = [1, 1]} : vector<2x192xf32> to vector<2x64xf32>
    %386 = vector.extract_strided_slice %376 {offsets = [0, 64], sizes = [2, 64], strides = [1, 1]} : vector<2x192xf32> to vector<2x64xf32>
    %387 = arith.addf %385, %386 : vector<2x64xf32>
    %388 = arith.negf %387 : vector<2x64xf32>
    %389 = math.exp %388 : vector<2x64xf32>
    %cst_81 = arith.constant 1.000000e+00 : f32
    %390 = vector.broadcast %cst_81 : f32 to vector<2x64xf32>
    %391 = arith.addf %390, %389 : vector<2x64xf32>
    %392 = arith.divf %390, %391 : vector<2x64xf32>
    %393 = vector.extract_strided_slice %375 {offsets = [0, 128], sizes = [2, 64], strides = [1, 1]} : vector<2x192xf32> to vector<2x64xf32>
    %394 = vector.extract_strided_slice %376 {offsets = [0, 128], sizes = [2, 64], strides = [1, 1]} : vector<2x192xf32> to vector<2x64xf32>
    %395 = vector.broadcast %16 : vector<1x64xf32> to vector<2x64xf32>
    %396 = arith.addf %394, %395 : vector<2x64xf32>
    %397 = arith.mulf %384, %396 : vector<2x64xf32>
    %398 = arith.addf %393, %397 : vector<2x64xf32>
    %399 = math.tanh %398 : vector<2x64xf32>
    %cst_82 = arith.constant 1.000000e+00 : f32
    %400 = vector.broadcast %cst_82 : f32 to vector<2x64xf32>
    %401 = arith.subf %400, %392 : vector<2x64xf32>
    %402 = arith.mulf %401, %399 : vector<2x64xf32>
    %403 = arith.mulf %392, %339 : vector<2x64xf32>
    %404 = arith.addf %402, %403 : vector<2x64xf32>
    %c5 = arith.constant 5 : index
    %c0_83 = arith.constant 0 : index
    %c0_84 = arith.constant 0 : index
    %405 = vector.load %arg13[%c5, %c0_83, %c0_84] : memref<8x2x64xf32, #tpu.memory_space<vmem>>, vector<1x2x64xf32>
    %406 = vector.shape_cast %405 : vector<1x2x64xf32> to vector<2x64xf32>
    %407 = vector.shape_cast %404 : vector<2x64xf32> to vector<1x2x64xf32>
    tpu.vector_store %arg13[%c5, %c0_83, %c0_84], %407 {strides = array<i32>} : memref<8x2x64xf32, #tpu.memory_space<vmem>>, vector<1x2x64xf32>,
    %408 = vector.extract_strided_slice %10 {offsets = [12, 0], sizes = [2, 192], strides = [1, 1]} : vector<16x192xf32> to vector<2x192xf32>
    %cst_85 = arith.constant dense<0.000000e+00> : vector<2x192xf32>
    %409 = tpu.matmul %372, %11, %cst_85 {dimension_numbers = #tpu.dot_dimension_numbers<[1], [0], [0], [1], [0, 0, 1, 1], [], []>} : vector<2x64xf32>, vector<64x192xf32>, vector<2x192xf32> -> vector<2x192xf32>
    %410 = vector.extract_strided_slice %408 {offsets = [0, 0], sizes = [2, 64], strides = [1, 1]} : vector<2x192xf32> to vector<2x64xf32>
    %411 = vector.extract_strided_slice %409 {offsets = [0, 0], sizes = [2, 64], strides = [1, 1]} : vector<2x192xf32> to vector<2x64xf32>
    %412 = arith.addf %410, %411 : vector<2x64xf32>
    %413 = arith.negf %412 : vector<2x64xf32>
    %414 = math.exp %413 : vector<2x64xf32>
    %cst_86 = arith.constant 1.000000e+00 : f32
    %415 = vector.broadcast %cst_86 : f32 to vector<2x64xf32>
    %416 = arith.addf %415, %414 : vector<2x64xf32>
    %417 = arith.divf %415, %416 : vector<2x64xf32>
    %418 = vector.extract_strided_slice %408 {offsets = [0, 64], sizes = [2, 64], strides = [1, 1]} : vector<2x192xf32> to vector<2x64xf32>
    %419 = vector.extract_strided_slice %409 {offsets = [0, 64], sizes = [2, 64], strides = [1, 1]} : vector<2x192xf32> to vector<2x64xf32>
    %420 = arith.addf %418, %419 : vector<2x64xf32>
    %421 = arith.negf %420 : vector<2x64xf32>
    %422 = math.exp %421 : vector<2x64xf32>
    %cst_87 = arith.constant 1.000000e+00 : f32
    %423 = vector.broadcast %cst_87 : f32 to vector<2x64xf32>
    %424 = arith.addf %423, %422 : vector<2x64xf32>
    %425 = arith.divf %423, %424 : vector<2x64xf32>
    %426 = vector.extract_strided_slice %408 {offsets = [0, 128], sizes = [2, 64], strides = [1, 1]} : vector<2x192xf32> to vector<2x64xf32>
    %427 = vector.extract_strided_slice %409 {offsets = [0, 128], sizes = [2, 64], strides = [1, 1]} : vector<2x192xf32> to vector<2x64xf32>
    %428 = vector.broadcast %15 : vector<1x64xf32> to vector<2x64xf32>
    %429 = arith.addf %427, %428 : vector<2x64xf32>
    %430 = arith.mulf %417, %429 : vector<2x64xf32>
    %431 = arith.addf %426, %430 : vector<2x64xf32>
    %432 = math.tanh %431 : vector<2x64xf32>
    %cst_88 = arith.constant 1.000000e+00 : f32
    %433 = vector.broadcast %cst_88 : f32 to vector<2x64xf32>
    %434 = arith.subf %433, %425 : vector<2x64xf32>
    %435 = arith.mulf %434, %432 : vector<2x64xf32>
    %436 = arith.mulf %425, %372 : vector<2x64xf32>
    %437 = arith.addf %435, %436 : vector<2x64xf32>
    %cst_89 = arith.constant dense<0.000000e+00> : vector<2x192xf32>
    %438 = tpu.matmul %437, %13, %cst_89 {dimension_numbers = #tpu.dot_dimension_numbers<[1], [0], [0], [1], [0, 0, 1, 1], [], []>} : vector<2x64xf32>, vector<64x192xf32>, vector<2x192xf32> -> vector<2x192xf32>
    %439 = vector.broadcast %14 : vector<1x192xf32> to vector<2x192xf32>
    %440 = arith.addf %438, %439 : vector<2x192xf32>
    %cst_90 = arith.constant dense<0.000000e+00> : vector<2x192xf32>
    %441 = tpu.matmul %404, %12, %cst_90 {dimension_numbers = #tpu.dot_dimension_numbers<[1], [0], [0], [1], [0, 0, 1, 1], [], []>} : vector<2x64xf32>, vector<64x192xf32>, vector<2x192xf32> -> vector<2x192xf32>
    %442 = vector.extract_strided_slice %440 {offsets = [0, 0], sizes = [2, 64], strides = [1, 1]} : vector<2x192xf32> to vector<2x64xf32>
    %443 = vector.extract_strided_slice %441 {offsets = [0, 0], sizes = [2, 64], strides = [1, 1]} : vector<2x192xf32> to vector<2x64xf32>
    %444 = arith.addf %442, %443 : vector<2x64xf32>
    %445 = arith.negf %444 : vector<2x64xf32>
    %446 = math.exp %445 : vector<2x64xf32>
    %cst_91 = arith.constant 1.000000e+00 : f32
    %447 = vector.broadcast %cst_91 : f32 to vector<2x64xf32>
    %448 = arith.addf %447, %446 : vector<2x64xf32>
    %449 = arith.divf %447, %448 : vector<2x64xf32>
    %450 = vector.extract_strided_slice %440 {offsets = [0, 64], sizes = [2, 64], strides = [1, 1]} : vector<2x192xf32> to vector<2x64xf32>
    %451 = vector.extract_strided_slice %441 {offsets = [0, 64], sizes = [2, 64], strides = [1, 1]} : vector<2x192xf32> to vector<2x64xf32>
    %452 = arith.addf %450, %451 : vector<2x64xf32>
    %453 = arith.negf %452 : vector<2x64xf32>
    %454 = math.exp %453 : vector<2x64xf32>
    %cst_92 = arith.constant 1.000000e+00 : f32
    %455 = vector.broadcast %cst_92 : f32 to vector<2x64xf32>
    %456 = arith.addf %455, %454 : vector<2x64xf32>
    %457 = arith.divf %455, %456 : vector<2x64xf32>
    %458 = vector.extract_strided_slice %440 {offsets = [0, 128], sizes = [2, 64], strides = [1, 1]} : vector<2x192xf32> to vector<2x64xf32>
    %459 = vector.extract_strided_slice %441 {offsets = [0, 128], sizes = [2, 64], strides = [1, 1]} : vector<2x192xf32> to vector<2x64xf32>
    %460 = vector.broadcast %16 : vector<1x64xf32> to vector<2x64xf32>
    %461 = arith.addf %459, %460 : vector<2x64xf32>
    %462 = arith.mulf %449, %461 : vector<2x64xf32>
    %463 = arith.addf %458, %462 : vector<2x64xf32>
    %464 = math.tanh %463 : vector<2x64xf32>
    %cst_93 = arith.constant 1.000000e+00 : f32
    %465 = vector.broadcast %cst_93 : f32 to vector<2x64xf32>
    %466 = arith.subf %465, %457 : vector<2x64xf32>
    %467 = arith.mulf %466, %464 : vector<2x64xf32>
    %468 = arith.mulf %457, %404 : vector<2x64xf32>
    %469 = arith.addf %467, %468 : vector<2x64xf32>
    %c6 = arith.constant 6 : index
    %c0_94 = arith.constant 0 : index
    %c0_95 = arith.constant 0 : index
    %470 = vector.load %arg13[%c6, %c0_94, %c0_95] : memref<8x2x64xf32, #tpu.memory_space<vmem>>, vector<1x2x64xf32>
    %471 = vector.shape_cast %470 : vector<1x2x64xf32> to vector<2x64xf32>
    %472 = vector.shape_cast %469 : vector<2x64xf32> to vector<1x2x64xf32>
    tpu.vector_store %arg13[%c6, %c0_94, %c0_95], %472 {strides = array<i32>} : memref<8x2x64xf32, #tpu.memory_space<vmem>>, vector<1x2x64xf32>,
    %473 = vector.extract_strided_slice %10 {offsets = [14, 0], sizes = [2, 192], strides = [1, 1]} : vector<16x192xf32> to vector<2x192xf32>
    %cst_96 = arith.constant dense<0.000000e+00> : vector<2x192xf32>
    %474 = tpu.matmul %437, %11, %cst_96 {dimension_numbers = #tpu.dot_dimension_numbers<[1], [0], [0], [1], [0, 0, 1, 1], [], []>} : vector<2x64xf32>, vector<64x192xf32>, vector<2x192xf32> -> vector<2x192xf32>
    %475 = vector.extract_strided_slice %473 {offsets = [0, 0], sizes = [2, 64], strides = [1, 1]} : vector<2x192xf32> to vector<2x64xf32>
    %476 = vector.extract_strided_slice %474 {offsets = [0, 0], sizes = [2, 64], strides = [1, 1]} : vector<2x192xf32> to vector<2x64xf32>
    %477 = arith.addf %475, %476 : vector<2x64xf32>
    %478 = arith.negf %477 : vector<2x64xf32>
    %479 = math.exp %478 : vector<2x64xf32>
    %cst_97 = arith.constant 1.000000e+00 : f32
    %480 = vector.broadcast %cst_97 : f32 to vector<2x64xf32>
    %481 = arith.addf %480, %479 : vector<2x64xf32>
    %482 = arith.divf %480, %481 : vector<2x64xf32>
    %483 = vector.extract_strided_slice %473 {offsets = [0, 64], sizes = [2, 64], strides = [1, 1]} : vector<2x192xf32> to vector<2x64xf32>
    %484 = vector.extract_strided_slice %474 {offsets = [0, 64], sizes = [2, 64], strides = [1, 1]} : vector<2x192xf32> to vector<2x64xf32>
    %485 = arith.addf %483, %484 : vector<2x64xf32>
    %486 = arith.negf %485 : vector<2x64xf32>
    %487 = math.exp %486 : vector<2x64xf32>
    %cst_98 = arith.constant 1.000000e+00 : f32
    %488 = vector.broadcast %cst_98 : f32 to vector<2x64xf32>
    %489 = arith.addf %488, %487 : vector<2x64xf32>
    %490 = arith.divf %488, %489 : vector<2x64xf32>
    %491 = vector.extract_strided_slice %473 {offsets = [0, 128], sizes = [2, 64], strides = [1, 1]} : vector<2x192xf32> to vector<2x64xf32>
    %492 = vector.extract_strided_slice %474 {offsets = [0, 128], sizes = [2, 64], strides = [1, 1]} : vector<2x192xf32> to vector<2x64xf32>
    %493 = vector.broadcast %15 : vector<1x64xf32> to vector<2x64xf32>
    %494 = arith.addf %492, %493 : vector<2x64xf32>
    %495 = arith.mulf %482, %494 : vector<2x64xf32>
    %496 = arith.addf %491, %495 : vector<2x64xf32>
    %497 = math.tanh %496 : vector<2x64xf32>
    %cst_99 = arith.constant 1.000000e+00 : f32
    %498 = vector.broadcast %cst_99 : f32 to vector<2x64xf32>
    %499 = arith.subf %498, %490 : vector<2x64xf32>
    %500 = arith.mulf %499, %497 : vector<2x64xf32>
    %501 = arith.mulf %490, %437 : vector<2x64xf32>
    %502 = arith.addf %500, %501 : vector<2x64xf32>
    %cst_100 = arith.constant dense<0.000000e+00> : vector<2x192xf32>
    %503 = tpu.matmul %502, %13, %cst_100 {dimension_numbers = #tpu.dot_dimension_numbers<[1], [0], [0], [1], [0, 0, 1, 1], [], []>} : vector<2x64xf32>, vector<64x192xf32>, vector<2x192xf32> -> vector<2x192xf32>
    %504 = vector.broadcast %14 : vector<1x192xf32> to vector<2x192xf32>
    %505 = arith.addf %503, %504 : vector<2x192xf32>
    %cst_101 = arith.constant dense<0.000000e+00> : vector<2x192xf32>
    %506 = tpu.matmul %469, %12, %cst_101 {dimension_numbers = #tpu.dot_dimension_numbers<[1], [0], [0], [1], [0, 0, 1, 1], [], []>} : vector<2x64xf32>, vector<64x192xf32>, vector<2x192xf32> -> vector<2x192xf32>
    %507 = vector.extract_strided_slice %505 {offsets = [0, 0], sizes = [2, 64], strides = [1, 1]} : vector<2x192xf32> to vector<2x64xf32>
    %508 = vector.extract_strided_slice %506 {offsets = [0, 0], sizes = [2, 64], strides = [1, 1]} : vector<2x192xf32> to vector<2x64xf32>
    %509 = arith.addf %507, %508 : vector<2x64xf32>
    %510 = arith.negf %509 : vector<2x64xf32>
    %511 = math.exp %510 : vector<2x64xf32>
    %cst_102 = arith.constant 1.000000e+00 : f32
    %512 = vector.broadcast %cst_102 : f32 to vector<2x64xf32>
    %513 = arith.addf %512, %511 : vector<2x64xf32>
    %514 = arith.divf %512, %513 : vector<2x64xf32>
    %515 = vector.extract_strided_slice %505 {offsets = [0, 64], sizes = [2, 64], strides = [1, 1]} : vector<2x192xf32> to vector<2x64xf32>
    %516 = vector.extract_strided_slice %506 {offsets = [0, 64], sizes = [2, 64], strides = [1, 1]} : vector<2x192xf32> to vector<2x64xf32>
    %517 = arith.addf %515, %516 : vector<2x64xf32>
    %518 = arith.negf %517 : vector<2x64xf32>
    %519 = math.exp %518 : vector<2x64xf32>
    %cst_103 = arith.constant 1.000000e+00 : f32
    %520 = vector.broadcast %cst_103 : f32 to vector<2x64xf32>
    %521 = arith.addf %520, %519 : vector<2x64xf32>
    %522 = arith.divf %520, %521 : vector<2x64xf32>
    %523 = vector.extract_strided_slice %505 {offsets = [0, 128], sizes = [2, 64], strides = [1, 1]} : vector<2x192xf32> to vector<2x64xf32>
    %524 = vector.extract_strided_slice %506 {offsets = [0, 128], sizes = [2, 64], strides = [1, 1]} : vector<2x192xf32> to vector<2x64xf32>
    %525 = vector.broadcast %16 : vector<1x64xf32> to vector<2x64xf32>
    %526 = arith.addf %524, %525 : vector<2x64xf32>
    %527 = arith.mulf %514, %526 : vector<2x64xf32>
    %528 = arith.addf %523, %527 : vector<2x64xf32>
    %529 = math.tanh %528 : vector<2x64xf32>
    %cst_104 = arith.constant 1.000000e+00 : f32
    %530 = vector.broadcast %cst_104 : f32 to vector<2x64xf32>
    %531 = arith.subf %530, %522 : vector<2x64xf32>
    %532 = arith.mulf %531, %529 : vector<2x64xf32>
    %533 = arith.mulf %522, %469 : vector<2x64xf32>
    %534 = arith.addf %532, %533 : vector<2x64xf32>
    %c7 = arith.constant 7 : index
    %c0_105 = arith.constant 0 : index
    %c0_106 = arith.constant 0 : index
    %535 = vector.load %arg13[%c7, %c0_105, %c0_106] : memref<8x2x64xf32, #tpu.memory_space<vmem>>, vector<1x2x64xf32>
    %536 = vector.shape_cast %535 : vector<1x2x64xf32> to vector<2x64xf32>
    %537 = vector.shape_cast %534 : vector<2x64xf32> to vector<1x2x64xf32>
    tpu.vector_store %arg13[%c7, %c0_105, %c0_106], %537 {strides = array<i32>} : memref<8x2x64xf32, #tpu.memory_space<vmem>>, vector<1x2x64xf32>,
    %c0_107 = arith.constant 0 : index
    %c0_108 = arith.constant 0 : index
    %c0_109 = arith.constant 0 : index
    %538 = vector.load %arg13[%c0_107, %c0_108, %c0_109] : memref<8x2x64xf32, #tpu.memory_space<vmem>>, vector<8x2x64xf32>
    %cst_110 = arith.constant 3.000000e+00 : f32
    %539 = vector.broadcast %cst_110 : f32 to vector<8x2x64xf32>
    %540 = arith.mulf %539, %538 : vector<8x2x64xf32>
    %541 = math.tanh %540 : vector<8x2x64xf32>
    %542 = tpu.transpose %541, [1, 0, 2] : vector<8x2x64xf32> -> vector<2x8x64xf32>
    %543 = vector.extract_strided_slice %542 {offsets = [0, 0, 0], sizes = [2, 8, 32], strides = [1, 1, 1]} : vector<2x8x64xf32> to vector<2x8x32xf32>
    %544 = vector.extract_strided_slice %542 {offsets = [0, 0, 32], sizes = [2, 8, 32], strides = [1, 1, 1]} : vector<2x8x64xf32> to vector<2x8x32xf32>
    %cst_111 = arith.constant 0.000000e+00 : f32
    %545 = vector.broadcast %cst_111 : f32 to vector<2x8x32xf32>
    %546 = arith.subf %545, %543 : vector<2x8x32xf32>
    %547 = tpu.concatenate %544, %546 in 2 : vector<2x8x32xf32>, vector<2x8x32xf32> -> vector<2x8x64xf32>
    "tpu.trace_start"() <{level = 10 : i32, message = "bnd,bmd->bnm"}> : () -> ()
    %cst_112 = arith.constant dense<0.000000e+00> : vector<2x8x8xf32>
    %548 = tpu.matmul %542, %547, %cst_112 {dimension_numbers = #tpu.dot_dimension_numbers<[2], [2], [1], [1], [0, 0, 0, 1, 1, 1], [0], [0]>} : vector<2x8x64xf32>, vector<2x8x64xf32>, vector<2x8x8xf32> -> vector<2x8x8xf32>
    "tpu.trace_stop"() : () -> ()
    %cst_113 = arith.constant 3.000000e+00 : f32
    %549 = vector.broadcast %cst_113 : f32 to vector<2x8x8xf32>
    %550 = arith.mulf %549, %548 : vector<2x8x8xf32>
    %551 = math.tanh %550 : vector<2x8x8xf32>
    %cst_114 = arith.constant 0.000000e+00 : f32
    %552 = vector.broadcast %cst_114 : f32 to vector<2x8x8xf32>
    %553 = arith.maximumf %551, %552 : vector<2x8x8xf32>
    %c0_115 = arith.constant 0 : index
    %c0_116 = arith.constant 0 : index
    %c0_117 = arith.constant 0 : index
    %554 = vector.load %arg11[%c0_115, %c0_116, %c0_117] : memref<2x8x8xf32, #tpu.memory_space<vmem>>, vector<2x8x8xf32>
    tpu.vector_store %arg11[%c0_115, %c0_116, %c0_117], %553 {strides = array<i32>} : memref<2x8x8xf32, #tpu.memory_space<vmem>>, vector<2x8x8xf32>,
    %c0_118 = arith.constant 0 : index
    %c0_119 = arith.constant 0 : index
    %c0_120 = arith.constant 0 : index
    %555 = vector.load %arg10[%c0_118, %c0_119, %c0_120] : memref<2x8x8xf32, #tpu.memory_space<vmem>>, vector<2x8x8xf32>
    %cst_121 = arith.constant 0.00999999977 : f32
    %556 = vector.broadcast %cst_121 : f32 to vector<2x8x8xf32>
    %557 = arith.mulf %555, %556 : vector<2x8x8xf32>
    %558 = arith.addf %553, %557 : vector<2x8x8xf32>
    %cst_122 = arith.constant dense<0xFF800000> : vector<2x8xf32>
    %559 = vector.multi_reduction <maximumf>, %558, %cst_122 [2] : vector<2x8x8xf32> to vector<2x8xf32>
    %560 = vector.shape_cast %559 : vector<2x8xf32> to vector<2x8x1xf32>
    %561 = vector.broadcast %560 : vector<2x8x1xf32> to vector<2x8x8xf32>
    %562 = arith.cmpf oge, %558, %561 : vector<2x8x8xf32>
    %cst_123 = arith.constant 0xFF800000 : f32
    %563 = vector.broadcast %cst_123 : f32 to vector<2x8x8xf32>
    %564 = arith.select %562, %563, %558 : vector<2x8x8xi1>, vector<2x8x8xf32>
    %cst_124 = arith.constant dense<0xFF800000> : vector<2x8xf32>
    %565 = vector.multi_reduction <maximumf>, %564, %cst_124 [2] : vector<2x8x8xf32> to vector<2x8xf32>
    %566 = vector.shape_cast %565 : vector<2x8xf32> to vector<2x8x1xf32>
    %567 = vector.broadcast %566 : vector<2x8x1xf32> to vector<2x8x8xf32>
    %568 = arith.cmpf oge, %564, %567 : vector<2x8x8xf32>
    %cst_125 = arith.constant 0xFF800000 : f32
    %569 = vector.broadcast %cst_125 : f32 to vector<2x8x8xf32>
    %570 = arith.select %568, %569, %564 : vector<2x8x8xi1>, vector<2x8x8xf32>
    %cst_126 = arith.constant dense<0xFF800000> : vector<2x8xf32>
    %571 = vector.multi_reduction <maximumf>, %570, %cst_126 [2] : vector<2x8x8xf32> to vector<2x8xf32>
    %572 = vector.shape_cast %571 : vector<2x8xf32> to vector<2x8x1xf32>
    %573 = vector.broadcast %572 : vector<2x8x1xf32> to vector<2x8x8xf32>
    %574 = arith.cmpf oge, %558, %573 : vector<2x8x8xf32>
    %575 = arith.extui %574 : vector<2x8x8xi1> to vector<2x8x8xi32>
    %576 = arith.sitofp %575 : vector<2x8x8xi32> to vector<2x8x8xf32>
    %577 = arith.mulf %553, %576 : vector<2x8x8xf32>
    %c0_127 = arith.constant 0 : index
    %c0_128 = arith.constant 0 : index
    %c0_129 = arith.constant 0 : index
    %578 = vector.load %arg12[%c0_127, %c0_128, %c0_129] : memref<2x8x8xf32, #tpu.memory_space<vmem>>, vector<2x8x8xf32>
    tpu.vector_store %arg12[%c0_127, %c0_128, %c0_129], %577 {strides = array<i32>} : memref<2x8x8xf32, #tpu.memory_space<vmem>>, vector<2x8x8xf32>,
    return
  }
  func.func @transform_0(%arg0: i32) -> (i32, i32) {
    %c0_i32 = arith.constant 0 : i32
    %c0_i32_0 = arith.constant 0 : i32
    return %arg0, %c0_i32 : i32, i32
  }
  func.func @transform_1(%arg0: i32) -> (i32, i32) {
    %c0_i32 = arith.constant 0 : i32
    %c0_i32_0 = arith.constant 0 : i32
    %c0_i32_1 = arith.constant 0 : i32
    return %c0_i32, %c0_i32_0 : i32, i32
  }
  func.func @transform_2(%arg0: i32) -> (i32, i32) {
    %c0_i32 = arith.constant 0 : i32
    %c0_i32_0 = arith.constant 0 : i32
    %c0_i32_1 = arith.constant 0 : i32
    return %c0_i32, %c0_i32_0 : i32, i32
  }
  func.func @transform_3(%arg0: i32) -> (i32, i32) {
    %c0_i32 = arith.constant 0 : i32
    %c0_i32_0 = arith.constant 0 : i32
    %c0_i32_1 = arith.constant 0 : i32
    return %c0_i32, %c0_i32_0 : i32, i32
  }
  func.func @transform_4(%arg0: i32) -> (i32, i32) {
    %c0_i32 = arith.constant 0 : i32
    %c0_i32_0 = arith.constant 0 : i32
    %c0_i32_1 = arith.constant 0 : i32
    return %c0_i32, %c0_i32_0 : i32, i32
  }
  func.func @transform_5(%arg0: i32) -> (i32, i32) {
    %c0_i32 = arith.constant 0 : i32
    %c0_i32_0 = arith.constant 0 : i32
    %c0_i32_1 = arith.constant 0 : i32
    return %c0_i32, %c0_i32_0 : i32, i32
  }
  func.func @transform_6(%arg0: i32) -> (i32, i32) {
    %c0_i32 = arith.constant 0 : i32
    %c0_i32_0 = arith.constant 0 : i32
    %c0_i32_1 = arith.constant 0 : i32
    return %c0_i32, %c0_i32_0 : i32, i32
  }
  func.func @transform_7(%arg0: i32) -> (i32, i32) {
    %c0_i32 = arith.constant 0 : i32
    %c0_i32_0 = arith.constant 0 : i32
    %c0_i32_1 = arith.constant 0 : i32
    return %c0_i32, %c0_i32_0 : i32, i32
  }
  func.func @transform_8(%arg0: i32) -> (i32, i32) {
    %c0_i32 = arith.constant 0 : i32
    %c0_i32_0 = arith.constant 0 : i32
    %c0_i32_1 = arith.constant 0 : i32
    return %c0_i32, %c0_i32_0 : i32, i32
  }
  func.func @transform_9(%arg0: i32) -> (i32, i32, i32) {
    %c0_i32 = arith.constant 0 : i32
    %c0_i32_0 = arith.constant 0 : i32
    %c0_i32_1 = arith.constant 0 : i32
    return %arg0, %c0_i32, %c0_i32_0 : i32, i32, i32
  }
  func.func @transform_10(%arg0: i32) -> (i32, i32, i32) {
    %c0_i32 = arith.constant 0 : i32
    %c0_i32_0 = arith.constant 0 : i32
    %c0_i32_1 = arith.constant 0 : i32
    return %arg0, %c0_i32, %c0_i32_0 : i32, i32, i32
  }
  func.func @transform_11(%arg0: i32) -> (i32, i32, i32) {
    %c0_i32 = arith.constant 0 : i32
    %c0_i32_0 = arith.constant 0 : i32
    %c0_i32_1 = arith.constant 0 : i32
    return %arg0, %c0_i32, %c0_i32_0 : i32, i32, i32
  }
}

</mosaic_0001>

<llo_original>
// kernel: tpu_custom_call.1
$region0: #{tpu_custom_call.1}
  #allocation0 [shape = 'u32[]', space=smem, size = 0x4, offset = 0x4, fixed_abs, tag = 'smem constant byte address 0x4 - core index']
  #allocation1 [shape = 'u32[144,128]{1,0:T(1,128)}', space=vmem, size = 0x12000, scoped, tag = 'internal scratch']
  #allocation2 [shape = 'f32[8,2,64]{2,1,0:T(2,128)}', space=vmem, size = 0x2000, scoped, tag = 'scratch operand']
  %s0 = inlined_call_operand.vmem [shape: s32[16,1], index: 0, kind: input, shape index: {}]
  %s1 = inlined_call_operand.hbm [shape: f32[20,192], index: 1, kind: input, shape index: {}]
  %s2 = inlined_call_operand.hbm [shape: f32[64,192], index: 2, kind: input, shape index: {}]
  %s3 = inlined_call_operand.vmem [shape: f32[1,192], index: 3, kind: input, shape index: {}]
  %s4 = inlined_call_operand.vmem [shape: f32[1,64], index: 4, kind: input, shape index: {}]
  %s5 = inlined_call_operand.hbm [shape: f32[64,192], index: 5, kind: input, shape index: {}]
  %s6 = inlined_call_operand.hbm [shape: f32[64,192], index: 6, kind: input, shape index: {}]
  %s7 = inlined_call_operand.vmem [shape: f32[1,192], index: 7, kind: input, shape index: {}]
  %s8 = inlined_call_operand.vmem [shape: f32[1,64], index: 8, kind: input, shape index: {}]
  %s9 = inlined_call_operand.vmem [shape: f32[2,8,8], index: 9, kind: input, shape index: {}]
  %s10 = inlined_call_operand.hbm [shape: f32[2,8,8], index: 10, kind: output, shape index: {0}]
  %s11 = inlined_call_operand.hbm [shape: f32[2,8,8], index: 11, kind: output, shape index: {1}]
  %12 = xla_tuple %s10, %s11
  %s13 = sld [smem:[#allocation0]]
  $region74: #{tpu_custom_call.1} parent=0
    _
  %s15 = ssub.s32 1, %s13
  %s16 = scalar_select 0, %s15, %s13
  $region1: #{tpu_custom_call.1} parent=0
    #allocation3 [shape = 'u8[24576]{0}', space=vmem, size = 0x6000, scoped, tag = 'input window, operand 1, single buffered']
    #allocation4 [shape = 's32[1]{0}', space=sflag, size = 0x4, scoped, tag = 'scoped memory for tpu_custom_call.1']
    #allocation5 [shape = 's32[1]{0}', space=sflag, size = 0x4, scoped, tag = 'scoped memory for tpu_custom_call.1']
    #allocation6 [shape = 'u8[65536]{0}', space=vmem, size = 0x10000, scoped, tag = 'input window, operand 2, single buffered']
    #allocation7 [shape = 's32[1]{0}', space=sflag, size = 0x4, scoped, tag = 'scoped memory for tpu_custom_call.1']
    #allocation8 [shape = 'u8[65536]{0}', space=vmem, size = 0x10000, scoped, tag = 'input window, operand 5, single buffered']
    #allocation9 [shape = 'u8[65536]{0}', space=vmem, size = 0x10000, scoped, tag = 'input window, operand 6, single buffered']
    #allocation10 [shape = 's32[1]{0}', space=sflag, size = 0x4, scoped, tag = 'scoped memory for tpu_custom_call.1']
    #allocation11 [shape = 'u8[8192]{0}', space=vmem, size = 0x2000, scoped, tag = 'output window, operand 0, single buffered']
    #allocation12 [shape = 'u8[8192]{0}', space=vmem, size = 0x2000, scoped, tag = 'output window, operand 1, single buffered']
    #allocation13 [shape = 's32[1]{0}', space=sflag, size = 0x4, scoped, tag = 'scoped memory for tpu_custom_call.1']
    %17 = vsyncpa [#allocation4], 0
    %18 = vsyncpa [#allocation7], 0
    %19 = vsyncpa [#allocation10], 0
    %20 = vsyncpa [#allocation5], 0
    %21 = vsyncpa [#allocation13], 0
    // Predicated region
    $region2: #{tpu_custom_call.1} parent=1 // pred_check
      _
    $region3: #{tpu_custom_call.1} parent=1 // pred_check_branch
      %23 = sbr.rel (0) target = $region5
    $region4: #{tpu_custom_call.1} parent=1 // pred_region
      _
    $region5: #{tpu_custom_call.1} parent=1 // pred_fallthru
      _
    // Predicated region
    $region6: #{tpu_custom_call.1} parent=1 // pred_check
      _
    $region7: #{tpu_custom_call.1} parent=1 // pred_check_branch
      %25 = sbr.rel (0) target = $region9
    $region8: #{tpu_custom_call.1} parent=1 // pred_region
      %s27 = ssub.s32 768, 768
      %28 = vsyncadd [#allocation4], %s27
      %s29 = sshll.u32 [#allocation3], 4
      %s30 = int_to_ptr.vmem [resolvable:$true] %s29
      %35 = dma.hbm_to_vmem [thread:$0]  %s1, 768, %s30, [#allocation4], 256, 256, 16
    $region9: #{tpu_custom_call.1} parent=1 // pred_fallthru
      _
    // Predicated region
    $region10: #{tpu_custom_call.1} parent=1 // pred_check
      _
    $region11: #{tpu_custom_call.1} parent=1 // pred_check_branch
      %37 = sbr.rel (0) target = $region13
    $region12: #{tpu_custom_call.1} parent=1 // pred_region
      %s39 = ssub.s32 2048, 2048
      %40 = vsyncadd [#allocation7], %s39
      %s41 = sshll.u32 [#allocation6], 4
      %s42 = int_to_ptr.vmem [resolvable:$true] %s41
      %47 = dma.hbm_to_vmem [thread:$0]  %s2, 2048, %s42, [#allocation7], 256, 256, 16
    $region13: #{tpu_custom_call.1} parent=1 // pred_fallthru
      _
    // Predicated region
    $region14: #{tpu_custom_call.1} parent=1 // pred_check
      _
    $region15: #{tpu_custom_call.1} parent=1 // pred_check_branch
      %49 = sbr.rel (0) target = $region17
    $region16: #{tpu_custom_call.1} parent=1 // pred_region
      _
    $region17: #{tpu_custom_call.1} parent=1 // pred_fallthru
      _
    // Predicated region
    $region18: #{tpu_custom_call.1} parent=1 // pred_check
      _
    $region19: #{tpu_custom_call.1} parent=1 // pred_check_branch
      %51 = sbr.rel (0) target = $region21
    $region20: #{tpu_custom_call.1} parent=1 // pred_region
      _
    $region21: #{tpu_custom_call.1} parent=1 // pred_fallthru
      _
    // Predicated region
    $region22: #{tpu_custom_call.1} parent=1 // pred_check
      _
    $region23: #{tpu_custom_call.1} parent=1 // pred_check_branch
      %53 = sbr.rel (0) target = $region25
    $region24: #{tpu_custom_call.1} parent=1 // pred_region
      %s55 = ssub.s32 2048, 2048
      %56 = vsyncadd [#allocation7], %s55
      %s57 = sshll.u32 [#allocation8], 4
      %s58 = int_to_ptr.vmem [resolvable:$true] %s57
      %63 = dma.hbm_to_vmem [thread:$0]  %s5, 2048, %s58, [#allocation7], 256, 256, 16
    $region25: #{tpu_custom_call.1} parent=1 // pred_fallthru
      _
    // Predicated region
    $region26: #{tpu_custom_call.1} parent=1 // pred_check
      _
    $region27: #{tpu_custom_call.1} parent=1 // pred_check_branch
      %65 = sbr.rel (0) target = $region29
    $region28: #{tpu_custom_call.1} parent=1 // pred_region
      %s67 = ssub.s32 2048, 2048
      %68 = vsyncadd [#allocation10], %s67
      %s69 = sshll.u32 [#allocation9], 4
      %s70 = int_to_ptr.vmem [resolvable:$true] %s69
      %75 = dma.hbm_to_vmem [thread:$0]  %s6, 2048, %s70, [#allocation10], 256, 256, 16
    $region29: #{tpu_custom_call.1} parent=1 // pred_fallthru
      _
    // Predicated region
    $region30: #{tpu_custom_call.1} parent=1 // pred_check
      _
    $region31: #{tpu_custom_call.1} parent=1 // pred_check_branch
      %77 = sbr.rel (0) target = $region33
    $region32: #{tpu_custom_call.1} parent=1 // pred_region
      _
    $region33: #{tpu_custom_call.1} parent=1 // pred_fallthru
      _
    // Predicated region
    $region34: #{tpu_custom_call.1} parent=1 // pred_check
      _
    $region35: #{tpu_custom_call.1} parent=1 // pred_check_branch
      %79 = sbr.rel (0) target = $region37
    $region36: #{tpu_custom_call.1} parent=1 // pred_region
      _
    $region37: #{tpu_custom_call.1} parent=1 // pred_fallthru
      _
    // Predicated region
    $region38: #{tpu_custom_call.1} parent=1 // pred_check
      _
    $region39: #{tpu_custom_call.1} parent=1 // pred_check_branch
      %81 = sbr.rel (0) target = $region41
    $region40: #{tpu_custom_call.1} parent=1 // pred_region
      _
    $region41: #{tpu_custom_call.1} parent=1 // pred_fallthru
      _
    // Predicated region
    $region42: #{tpu_custom_call.1} parent=1 // pred_check
      _
    $region43: #{tpu_custom_call.1} parent=1 // pred_check_branch
      %83 = sbr.rel (0) target = $region45
    $region44: #{tpu_custom_call.1} parent=1 // pred_region
      %84 = dma.done [#allocation4], 768
    $region45: #{tpu_custom_call.1} parent=1 // pred_fallthru
      _
    // Predicated region
    $region46: #{tpu_custom_call.1} parent=1 // pred_check
      _
    $region47: #{tpu_custom_call.1} parent=1 // pred_check_branch
      %86 = sbr.rel (0) target = $region49
    $region48: #{tpu_custom_call.1} parent=1 // pred_region
      %87 = dma.done [#allocation7], 2048
    $region49: #{tpu_custom_call.1} parent=1 // pred_fallthru
      _
    // Predicated region
    $region50: #{tpu_custom_call.1} parent=1 // pred_check
      _
    $region51: #{tpu_custom_call.1} parent=1 // pred_check_branch
      %89 = sbr.rel (0) target = $region53
    $region52: #{tpu_custom_call.1} parent=1 // pred_region
      %90 = dma.done [#allocation7], 2048
    $region53: #{tpu_custom_call.1} parent=1 // pred_fallthru
      _
    // Predicated region
    $region54: #{tpu_custom_call.1} parent=1 // pred_check
      _
    $region55: #{tpu_custom_call.1} parent=1 // pred_check_branch
      %92 = sbr.rel (0) target = $region57
    $region56: #{tpu_custom_call.1} parent=1 // pred_region
      %93 = dma.done [#allocation10], 2048
    $region57: #{tpu_custom_call.1} parent=1 // pred_fallthru
      _
    %v94 = vld [vmem:[%s0] sm:$0xff]
    %v95 = vld [vmem:[%s0 + $0x8] sm:$0xff]
    %v96 = vlaneseq
    %v97 = vand.u32 %v96, 127
    %98 = vset.pattern.permute.xlu0 0
    %99 = vperm.xlu0 %98, %v94
    %v100 = vpop.permute.xlu0 %99
    %101 = vset.pattern.permute.xlu0 0
    %102 = vperm.xlu0 %101, %v95
    %v103 = vpop.permute.xlu0 %102
    %vm104 = vcmp.eq.s32.totalorder %v97, %v100
    %vm105 = vcmp.eq.s32.totalorder %v97, %v103
    %v106 = vsel %vm104, 1, 0
    %v107 = vsel %vm105, 1, 0
    %v108 = vcvt.s32.f32 %v106
    %v109 = vcvt.s32.f32 %v107
    %v110 = vld [vmem:[#allocation3] sm:$0xff]
    %v111 = vld [vmem:[#allocation3 + $0x8] sm:$0xff]
    %v112 = vld [vmem:[#allocation3 + $0x10] sm:$0xff]
    %v113 = vld [vmem:[#allocation3 + $0x18] sm:$0xff]
    %v114 = vld [vmem:[#allocation3 + $0x20] sm:$0xf]
    %v115 = vld [vmem:[#allocation3 + $0x28] sm:$0xf]
    %v116 = vld [vmem:[%s3] sm:$0x3]
    %v118 = vlaneseq
    %v119 = vshrl.u32 %v118, 7
    %v120 = vsub.s32 0, %v119
    %v121 = vrot.slane %v116, %v120
    %v122 = vlaneseq
    %v123 = vshrl.u32 %v122, 7
    %v124 = vsub.s32 1, %v123
    %v125 = vrot.slane %v116, %v124
    %vm128 = vcmask 162816
    %v130 = vsel %vm128, %v108, 0
    %v133 = vsel %vm128, %v109, 0
    %vm135 = vcmask 1043456
    %v137 = vsel %vm135, %v114, 0
    %v140 = vsel %vm135, %v115, 0
    %142 = vmatprep.subr.mxu0 %v111
    %143 = vmatpush1.msra.mxu0 %v110
    %144 = vmatprep.subr.mxu0 %v113
    %145 = vmatpush1.msra.mxu0 %v112
    %146 = vmatprep.subr.mxu0 %v140
    %147 = vmatpush1.msra.mxu0 %v137
    %148 = vmatprep.subr.mxu0 0.0
    %149 = vmatpush1.msra.mxu0 0.0
    %150 = vmatprep.subr.mxu0 0.0
    %151 = vmatpush1.msra.mxu0 0.0
    %152 = vmatprep.subr.mxu0 0.0
    %153 = vmatpush1.msra.mxu0 0.0
    %154 = vmatprep.subr.mxu0 0.0
    %155 = vmatpush1.msra.mxu0 0.0
    %156 = vmatprep.subr.mxu0 0.0
    %157 = vmatpush1.msra.mxu0 0.0
    %158 = vmatprep.subr.mxu0 0.0
    %159 = vmatpush1.msra.mxu0 0.0
    %160 = vmatprep.subr.mxu0 0.0
    %161 = vmatpush1.msra.mxu0 0.0
    %162 = vmatprep.subr.mxu0 0.0
    %163 = vmatpush1.msra.mxu0 0.0
    %164 = vmatprep.subr.mxu0 0.0
    %165 = vmatpush1.msra.mxu0 0.0
    %166 = vmatprep.subr.mxu0 0.0
    %167 = vmatpush1.msra.mxu0 0.0
    %168 = vmatprep.subr.mxu0 0.0
    %169 = vmatpush1.msra.mxu0 0.0
    %170 = vmatprep.subr.mxu0 0.0
    %171 = vmatpush1.msra.mxu0 0.0
    %172 = vmatprep.subr.mxu0 0.0
    %173 = vmatpush1.msra.mxu0 0.0
    %174 = vmatprep.subr.mxu0 0.0
    %175 = vmatpush1.msra.mxu0 0.0
    %176 = vmatprep.subr.mxu0 0.0
    %177 = vmatpush1.msra.mxu0 0.0
    %178 = vmatprep.subr.mxu0 0.0
    %179 = vmatpush1.msra.mxu0 0.0
    %180 = vmatprep.subr.mxu0 0.0
    %181 = vmatpush1.msra.mxu0 0.0
    %182 = vmatprep.subr.mxu0 0.0
    %183 = vmatpush1.msra.mxu0 0.0
    %184 = vmatprep.subr.mxu0 0.0
    %185 = vmatpush1.msra.mxu0 0.0
    %186 = vmatprep.subr.mxu0 0.0
    %187 = vmatpush1.msra.mxu0 0.0
    %188 = vmatprep.subr.mxu0 0.0
    %189 = vmatpush1.msra.mxu0 0.0
    %190 = vmatprep.subr.mxu0 0.0
    %191 = vmatpush1.msra.mxu0 0.0
    %192 = vmatprep.subr.mxu0 0.0
    %193 = vmatpush1.msra.mxu0 0.0
    %194 = vmatprep.subr.mxu0 0.0
    %195 = vmatpush1.msra.mxu0 0.0
    %196 = vmatprep.subr.mxu0 0.0
    %197 = vmatpush1.msra.mxu0 0.0
    %198 = vmatprep.subr.mxu0 0.0
    %199 = vmatpush1.msra.mxu0 0.0
    %200 = vmatprep.subr.mxu0 0.0
    %201 = vmatpush1.msra.mxu0 0.0
    %202 = vmatprep.subr.mxu0 0.0
    %203 = vmatpush1.msra.mxu0 0.0
    %204 = vmatprep.subr.mxu0 0.0
    %205 = vmatpush1.msra.mxu0 0.0
    %206 = vmatprep.mubr.f32.mxu0 0.0
    %207 = vmatmul.mubr.f32.gmra.mrb[0].mxu0 %v130
    %v208 = vpop.f32.mrb[0].mxu0
    %v209 = vadd.f32 %v121, %v208
    %v210 = vpop.f32.mrb[0].mxu0
    %v211 = vadd.f32 %v125, %v210
    %212 = vmatprep.mubr.f32.mxu0 0.0
    %213 = vmatmul.mubr.f32.gmra.mrb[0].mxu0 %v133
    %v214 = vpop.f32.mrb[0].mxu0
    %v215 = vadd.f32 %v121, %v214
    %v216 = vpop.f32.mrb[0].mxu0
    %v217 = vadd.f32 %v125, %v216
    %218 = vdwg.mxu0
    %v219 = vld [vmem:[#allocation6] sm:$0xff]
    %v220 = vld [vmem:[#allocation6 + $0x8] sm:$0xff]
    %v221 = vld [vmem:[#allocation6 + $0x10] sm:$0xff]
    %v222 = vld [vmem:[#allocation6 + $0x18] sm:$0xff]
    %v223 = vld [vmem:[#allocation6 + $0x20] sm:$0xff]
    %v224 = vld [vmem:[#allocation6 + $0x28] sm:$0xff]
    %v225 = vld [vmem:[#allocation6 + $0x30] sm:$0xff]
    %v226 = vld [vmem:[#allocation6 + $0x38] sm:$0xff]
    %v227 = vld [vmem:[#allocation6 + $0x40] sm:$0xff]
    %v228 = vld [vmem:[#allocation6 + $0x48] sm:$0xff]
    %v229 = vld [vmem:[#allocation6 + $0x50] sm:$0xff]
    %v230 = vld [vmem:[#allocation6 + $0x58] sm:$0xff]
    %v231 = vld [vmem:[#allocation6 + $0x60] sm:$0xff]
    %v232 = vld [vmem:[#allocation6 + $0x68] sm:$0xff]
    %v233 = vld [vmem:[#allocation6 + $0x70] sm:$0xff]
    %v234 = vld [vmem:[#allocation6 + $0x78] sm:$0xff]
    %v235 = vld [vmem:[#allocation9] sm:$0xff]
    %v236 = vld [vmem:[#allocation9 + $0x8] sm:$0xff]
    %v237 = vld [vmem:[#allocation9 + $0x10] sm:$0xff]
    %v238 = vld [vmem:[#allocation9 + $0x18] sm:$0xff]
    %v239 = vld [vmem:[#allocation9 + $0x20] sm:$0xff]
    %v240 = vld [vmem:[#allocation9 + $0x28] sm:$0xff]
    %v241 = vld [vmem:[#allocation9 + $0x30] sm:$0xff]
    %v242 = vld [vmem:[#allocation9 + $0x38] sm:$0xff]
    %v243 = vld [vmem:[#allocation9 + $0x40] sm:$0xff]
    %v244 = vld [vmem:[#allocation9 + $0x48] sm:$0xff]
    %v245 = vld [vmem:[#allocation9 + $0x50] sm:$0xff]
    %v246 = vld [vmem:[#allocation9 + $0x58] sm:$0xff]
    %v247 = vld [vmem:[#allocation9 + $0x60] sm:$0xff]
    %v248 = vld [vmem:[#allocation9 + $0x68] sm:$0xff]
    %v249 = vld [vmem:[#allocation9 + $0x70] sm:$0xff]
    %v250 = vld [vmem:[#allocation9 + $0x78] sm:$0xff]
    %v251 = vld [vmem:[#allocation8] sm:$0xff]
    %v252 = vld [vmem:[#allocation8 + $0x8] sm:$0xff]
    %v253 = vld [vmem:[#allocation8 + $0x10] sm:$0xff]
    %v254 = vld [vmem:[#allocation8 + $0x18] sm:$0xff]
    %v255 = vld [vmem:[#allocation8 + $0x20] sm:$0xff]
    %v256 = vld [vmem:[#allocation8 + $0x28] sm:$0xff]
    %v257 = vld [vmem:[#allocation8 + $0x30] sm:$0xff]
    %v258 = vld [vmem:[#allocation8 + $0x38] sm:$0xff]
    %v259 = vld [vmem:[#allocation8 + $0x40] sm:$0xff]
    %v260 = vld [vmem:[#allocation8 + $0x48] sm:$0xff]
    %v261 = vld [vmem:[#allocation8 + $0x50] sm:$0xff]
    %v262 = vld [vmem:[#allocation8 + $0x58] sm:$0xff]
    %v263 = vld [vmem:[#allocation8 + $0x60] sm:$0xff]
    %v264 = vld [vmem:[#allocation8 + $0x68] sm:$0xff]
    %v265 = vld [vmem:[#allocation8 + $0x70] sm:$0xff]
    %v266 = vld [vmem:[#allocation8 + $0x78] sm:$0xff]
    %v267 = vld [vmem:[%s7] sm:$0x3]
    %v268 = vld [vmem:[%s4] sm:$0x1]
    %v269 = vld [vmem:[%s8] sm:$0x1]
    %v270 = vadd.f32 %v209, 0.0
    %v271 = vxor.u32 %v270, 2147483648
    %v272 = vmul.f32 %v271, 1.442695
    %v273 = vpow.pop %v272
    %v274 = vadd.f32 %v273, 1.0
    %v275 = vrcp.pop %v274
    %v276 = vmul.f32 1.0, %v275
    %v278 = vlaneseq
    %v279 = vshrl.u32 %v278, 7
    %v280 = vsub.s32 0, %v279
    %v281 = vrot.slane %v268, %v280
    %v283 = vadd.f32 %v281, 0.0
    %v284 = vmul.f32 %v276, %v283
    %v285 = vadd.f32 %v211, %v284
    %v286 = vtanh.pop %v285
    %v287 = vsub.f32 1.0, %v276
    %289 = vrot.lane.b32.xlu0 %v286, 64
    %v290 = vpop.permute.xlu0 %289
    %v292 = vmul.f32 %v287, %v290
    %v293 = vmul.f32 %v276, 0.0
    %v294 = vadd.f32 %v292, %v293
    %v296 = vlaneseq
    %v297 = vshrl.u32 %v296, 7
    %v298 = vsub.s32 0, %v297
    %v299 = vrot.slane %v267, %v298
    %v300 = vlaneseq
    %v301 = vshrl.u32 %v300, 7
    %v302 = vsub.s32 1, %v301
    %v303 = vrot.slane %v267, %v302
    %307 = vrot.lane.b32.xlu0 %v294, 64
    %v308 = vpop.permute.xlu0 %307
    %vm309 = vcmask 523264
    %v310 = vsel %vm309, %v308, 0
    %312 = vmatprep.subr.mxu0 %v252
    %313 = vmatpush1.msra.mxu0 %v251
    %314 = vmatprep.subr.mxu0 %v254
    %315 = vmatpush1.msra.mxu0 %v253
    %316 = vmatprep.subr.mxu0 %v256
    %317 = vmatpush1.msra.mxu0 %v255
    %318 = vmatprep.subr.mxu0 %v258
    %319 = vmatpush1.msra.mxu0 %v257
    %320 = vmatprep.subr.mxu0 %v260
    %321 = vmatpush1.msra.mxu0 %v259
    %322 = vmatprep.subr.mxu0 %v262
    %323 = vmatpush1.msra.mxu0 %v261
    %324 = vmatprep.subr.mxu0 %v264
    %325 = vmatpush1.msra.mxu0 %v263
    %326 = vmatprep.subr.mxu0 %v266
    %327 = vmatpush1.msra.mxu0 %v265
    %328 = vmatprep.subr.mxu0 0.0
    %329 = vmatpush1.msra.mxu0 0.0
    %330 = vmatprep.subr.mxu0 0.0
    %331 = vmatpush1.msra.mxu0 0.0
    %332 = vmatprep.subr.mxu0 0.0
    %333 = vmatpush1.msra.mxu0 0.0
    %334 = vmatprep.subr.mxu0 0.0
    %335 = vmatpush1.msra.mxu0 0.0
    %336 = vmatprep.subr.mxu0 0.0
    %337 = vmatpush1.msra.mxu0 0.0
    %338 = vmatprep.subr.mxu0 0.0
    %339 = vmatpush1.msra.mxu0 0.0
    %340 = vmatprep.subr.mxu0 0.0
    %341 = vmatpush1.msra.mxu0 0.0
    %342 = vmatprep.subr.mxu0 0.0
    %343 = vmatpush1.msra.mxu0 0.0
    %344 = vmatprep.subr.mxu0 0.0
    %345 = vmatpush1.msra.mxu0 0.0
    %346 = vmatprep.subr.mxu0 0.0
    %347 = vmatpush1.msra.mxu0 0.0
    %348 = vmatprep.subr.mxu0 0.0
    %349 = vmatpush1.msra.mxu0 0.0
    %350 = vmatprep.subr.mxu0 0.0
    %351 = vmatpush1.msra.mxu0 0.0
    %352 = vmatprep.subr.mxu0 0.0
    %353 = vmatpush1.msra.mxu0 0.0
    %354 = vmatprep.subr.mxu0 0.0
    %355 = vmatpush1.msra.mxu0 0.0
    %356 = vmatprep.subr.mxu0 0.0
    %357 = vmatpush1.msra.mxu0 0.0
    %358 = vmatprep.subr.mxu0 0.0
    %359 = vmatpush1.msra.mxu0 0.0
    %360 = vmatprep.subr.mxu0 0.0
    %361 = vmatpush1.msra.mxu0 0.0
    %362 = vmatprep.subr.mxu0 0.0
    %363 = vmatpush1.msra.mxu0 0.0
    %364 = vmatprep.subr.mxu0 0.0
    %365 = vmatpush1.msra.mxu0 0.0
    %366 = vmatprep.subr.mxu0 0.0
    %367 = vmatpush1.msra.mxu0 0.0
    %368 = vmatprep.subr.mxu0 0.0
    %369 = vmatpush1.msra.mxu0 0.0
    %370 = vmatprep.subr.mxu0 0.0
    %371 = vmatpush1.msra.mxu0 0.0
    %372 = vmatprep.subr.mxu0 0.0
    %373 = vmatpush1.msra.mxu0 0.0
    %374 = vmatprep.subr.mxu0 0.0
    %375 = vmatpush1.msra.mxu0 0.0
    %376 = vmatprep.mubr.f32.mxu0 0.0
    %377 = vmatmul.mubr.f32.gmra.mrb[0].mxu0 %v310
    %v378 = vpop.f32.mrb[0].mxu0
    %v379 = vadd.f32 %v299, %v378
    %v380 = vpop.f32.mrb[0].mxu0
    %v381 = vadd.f32 %v303, %v380
    %382 = vdwg.mxu0
    %v383 = vadd.f32 %v379, 0.0
    %v384 = vxor.u32 %v383, 2147483648
    %v385 = vmul.f32 %v384, 1.442695
    %v386 = vpow.pop %v385
    %v387 = vadd.f32 %v386, 1.0
    %v388 = vrcp.pop %v387
    %v389 = vmul.f32 1.0, %v388
    %v391 = vlaneseq
    %v392 = vshrl.u32 %v391, 7
    %v393 = vsub.s32 0, %v392
    %v394 = vrot.slane %v269, %v393
    %v396 = vadd.f32 %v394, 0.0
    %v397 = vmul.f32 %v389, %v396
    %v398 = vadd.f32 %v381, %v397
    %v399 = vtanh.pop %v398
    %v400 = vsub.f32 1.0, %v389
    %402 = vrot.lane.b32.xlu0 %v399, 64
    %v403 = vpop.permute.xlu0 %402
    %v405 = vmul.f32 %v400, %v403
    %v406 = vmul.f32 %v389, 0.0
    %v407 = vadd.f32 %v405, %v406
    %409 = vrot.lane.b32.xlu0 %v407, 64
    %v410 = vpop.permute.xlu0 %409
    %vm412 = vcmask 517120
    %413 = vst.msk [vmem:[#allocation2] sm:$0x3] %vm412, %v410
    %414 = vmatprep.subr.mxu0 %v220
    %415 = vmatpush1.msra.mxu0 %v219
    %416 = vmatprep.subr.mxu0 %v222
    %417 = vmatpush1.msra.mxu0 %v221
    %418 = vmatprep.subr.mxu0 %v224
    %419 = vmatpush1.msra.mxu0 %v223
    %420 = vmatprep.subr.mxu0 %v226
    %421 = vmatpush1.msra.mxu0 %v225
    %422 = vmatprep.subr.mxu0 %v228
    %423 = vmatpush1.msra.mxu0 %v227
    %424 = vmatprep.subr.mxu0 %v230
    %425 = vmatpush1.msra.mxu0 %v229
    %426 = vmatprep.subr.mxu0 %v232
    %427 = vmatpush1.msra.mxu0 %v231
    %428 = vmatprep.subr.mxu0 %v234
    %429 = vmatpush1.msra.mxu0 %v233
    %430 = vmatprep.subr.mxu0 0.0
    %431 = vmatpush1.msra.mxu0 0.0
    %432 = vmatprep.subr.mxu0 0.0
    %433 = vmatpush1.msra.mxu0 0.0
    %434 = vmatprep.subr.mxu0 0.0
    %435 = vmatpush1.msra.mxu0 0.0
    %436 = vmatprep.subr.mxu0 0.0
    %437 = vmatpush1.msra.mxu0 0.0
    %438 = vmatprep.subr.mxu0 0.0
    %439 = vmatpush1.msra.mxu0 0.0
    %440 = vmatprep.subr.mxu0 0.0
    %441 = vmatpush1.msra.mxu0 0.0
    %442 = vmatprep.subr.mxu0 0.0
    %443 = vmatpush1.msra.mxu0 0.0
    %444 = vmatprep.subr.mxu0 0.0
    %445 = vmatpush1.msra.mxu0 0.0
    %446 = vmatprep.subr.mxu0 0.0
    %447 = vmatpush1.msra.mxu0 0.0
    %448 = vmatprep.subr.mxu0 0.0
    %449 = vmatpush1.msra.mxu0 0.0
    %450 = vmatprep.subr.mxu0 0.0
    %451 = vmatpush1.msra.mxu0 0.0
    %452 = vmatprep.subr.mxu0 0.0
    %453 = vmatpush1.msra.mxu0 0.0
    %454 = vmatprep.subr.mxu0 0.0
    %455 = vmatpush1.msra.mxu0 0.0
    %456 = vmatprep.subr.mxu0 0.0
    %457 = vmatpush1.msra.mxu0 0.0
    %458 = vmatprep.subr.mxu0 0.0
    %459 = vmatpush1.msra.mxu0 0.0
    %460 = vmatprep.subr.mxu0 0.0
    %461 = vmatpush1.msra.mxu0 0.0
    %462 = vmatprep.subr.mxu0 0.0
    %463 = vmatpush1.msra.mxu0 0.0
    %464 = vmatprep.subr.mxu0 0.0
    %465 = vmatpush1.msra.mxu0 0.0
    %466 = vmatprep.subr.mxu0 0.0
    %467 = vmatpush1.msra.mxu0 0.0
    %468 = vmatprep.subr.mxu0 0.0
    %469 = vmatpush1.msra.mxu0 0.0
    %470 = vmatprep.subr.mxu0 0.0
    %471 = vmatpush1.msra.mxu0 0.0
    %472 = vmatprep.subr.mxu0 0.0
    %473 = vmatpush1.msra.mxu0 0.0
    %474 = vmatprep.subr.mxu0 0.0
    %475 = vmatpush1.msra.mxu0 0.0
    %476 = vmatprep.subr.mxu0 0.0
    %477 = vmatpush1.msra.mxu0 0.0
    %478 = vmatprep.mubr.f32.mxu0 0.0
    %479 = vmatmul.mubr.f32.gmra.mrb[0].mxu0 %v310
    %v480 = vpop.f32.mrb[0].mxu0
    %v481 = vadd.f32 0.0, %v480
    %v482 = vpop.f32.mrb[0].mxu0
    %v483 = vadd.f32 0.0, %v482
    %484 = vdwg.mxu0
    %v486 = vrot.slane %v481, 6
    %v488 = vadd.f32 %v209, %v486
    %v489 = vxor.u32 %v488, 2147483648
    %v490 = vmul.f32 %v489, 1.442695
    %v491 = vpow.pop %v490
    %v492 = vadd.f32 %v491, 1.0
    %v493 = vrcp.pop %v492
    %v494 = vmul.f32 1.0, %v493
    %v495 = vadd.f32 %v483, %v281
    %v497 = vrot.slane %v495, 6
    %v499 = vmul.f32 %v494, %v497
    %v500 = vadd.f32 %v211, %v499
    %v501 = vtanh.pop %v500
    %v502 = vsub.f32 1.0, %v494
    %504 = vrot.lane.b32.xlu0 %v501, 64
    %v505 = vpop.permute.xlu0 %504
    %v507 = vmul.f32 %v502, %v505
    %v508 = vrot.slane %v294, 6
    %v510 = vmul.f32 %v494, %v508
    %v511 = vadd.f32 %v507, %v510
    %v513 = vrot.slane %v511, 2
    %514 = vrot.lane.b32.xlu0 %v513, 64
    %v515 = vpop.permute.xlu0 %514
    %v516 = vsel %vm309, %v515, 0
    %518 = vmatprep.subr.mxu0 %v252
    %519 = vmatpush1.msra.mxu0 %v251
    %520 = vmatprep.subr.mxu0 %v254
    %521 = vmatpush1.msra.mxu0 %v253
    %522 = vmatprep.subr.mxu0 %v256
    %523 = vmatpush1.msra.mxu0 %v255
    %524 = vmatprep.subr.mxu0 %v258
    %525 = vmatpush1.msra.mxu0 %v257
    %526 = vmatprep.subr.mxu0 %v260
    %527 = vmatpush1.msra.mxu0 %v259
    %528 = vmatprep.subr.mxu0 %v262
    %529 = vmatpush1.msra.mxu0 %v261
    %530 = vmatprep.subr.mxu0 %v264
    %531 = vmatpush1.msra.mxu0 %v263
    %532 = vmatprep.subr.mxu0 %v266
    %533 = vmatpush1.msra.mxu0 %v265
    %534 = vmatprep.subr.mxu0 0.0
    %535 = vmatpush1.msra.mxu0 0.0
    %536 = vmatprep.subr.mxu0 0.0
    %537 = vmatpush1.msra.mxu0 0.0
    %538 = vmatprep.subr.mxu0 0.0
    %539 = vmatpush1.msra.mxu0 0.0
    %540 = vmatprep.subr.mxu0 0.0
    %541 = vmatpush1.msra.mxu0 0.0
    %542 = vmatprep.subr.mxu0 0.0
    %543 = vmatpush1.msra.mxu0 0.0
    %544 = vmatprep.subr.mxu0 0.0
    %545 = vmatpush1.msra.mxu0 0.0
    %546 = vmatprep.subr.mxu0 0.0
    %547 = vmatpush1.msra.mxu0 0.0
    %548 = vmatprep.subr.mxu0 0.0
    %549 = vmatpush1.msra.mxu0 0.0
    %550 = vmatprep.subr.mxu0 0.0
    %551 = vmatpush1.msra.mxu0 0.0
    %552 = vmatprep.subr.mxu0 0.0
    %553 = vmatpush1.msra.mxu0 0.0
    %554 = vmatprep.subr.mxu0 0.0
    %555 = vmatpush1.msra.mxu0 0.0
    %556 = vmatprep.subr.mxu0 0.0
    %557 = vmatpush1.msra.mxu0 0.0
    %558 = vmatprep.subr.mxu0 0.0
    %559 = vmatpush1.msra.mxu0 0.0
    %560 = vmatprep.subr.mxu0 0.0
    %561 = vmatpush1.msra.mxu0 0.0
    %562 = vmatprep.subr.mxu0 0.0
    %563 = vmatpush1.msra.mxu0 0.0
    %564 = vmatprep.subr.mxu0 0.0
    %565 = vmatpush1.msra.mxu0 0.0
    %566 = vmatprep.subr.mxu0 0.0
    %567 = vmatpush1.msra.mxu0 0.0
    %568 = vmatprep.subr.mxu0 0.0
    %569 = vmatpush1.msra.mxu0 0.0
    %570 = vmatprep.subr.mxu0 0.0
    %571 = vmatpush1.msra.mxu0 0.0
    %572 = vmatprep.subr.mxu0 0.0
    %573 = vmatpush1.msra.mxu0 0.0
    %574 = vmatprep.subr.mxu0 0.0
    %575 = vmatpush1.msra.mxu0 0.0
    %576 = vmatprep.subr.mxu0 0.0
    %577 = vmatpush1.msra.mxu0 0.0
    %578 = vmatprep.subr.mxu0 0.0
    %579 = vmatpush1.msra.mxu0 0.0
    %580 = vmatprep.subr.mxu0 0.0
    %581 = vmatpush1.msra.mxu0 0.0
    %582 = vmatprep.mubr.f32.mxu0 0.0
    %583 = vmatmul.mubr.f32.gmra.mrb[0].mxu0 %v516
    %v584 = vpop.f32.mrb[0].mxu0
    %v585 = vadd.f32 %v299, %v584
    %v586 = vpop.f32.mrb[0].mxu0
    %v587 = vadd.f32 %v303, %v586
    %588 = vdwg.mxu0
    %v589 = vsel %vm309, %v410, 0
    %591 = vmatprep.subr.mxu0 %v236
    %592 = vmatpush1.msra.mxu0 %v235
    %593 = vmatprep.subr.mxu0 %v238
    %594 = vmatpush1.msra.mxu0 %v237
    %595 = vmatprep.subr.mxu0 %v240
    %596 = vmatpush1.msra.mxu0 %v239
    %597 = vmatprep.subr.mxu0 %v242
    %598 = vmatpush1.msra.mxu0 %v241
    %599 = vmatprep.subr.mxu0 %v244
    %600 = vmatpush1.msra.mxu0 %v243
    %601 = vmatprep.subr.mxu0 %v246
    %602 = vmatpush1.msra.mxu0 %v245
    %603 = vmatprep.subr.mxu0 %v248
    %604 = vmatpush1.msra.mxu0 %v247
    %605 = vmatprep.subr.mxu0 %v250
    %606 = vmatpush1.msra.mxu0 %v249
    %607 = vmatprep.subr.mxu0 0.0
    %608 = vmatpush1.msra.mxu0 0.0
    %609 = vmatprep.subr.mxu0 0.0
    %610 = vmatpush1.msra.mxu0 0.0
    %611 = vmatprep.subr.mxu0 0.0
    %612 = vmatpush1.msra.mxu0 0.0
    %613 = vmatprep.subr.mxu0 0.0
    %614 = vmatpush1.msra.mxu0 0.0
    %615 = vmatprep.subr.mxu0 0.0
    %616 = vmatpush1.msra.mxu0 0.0
    %617 = vmatprep.subr.mxu0 0.0
    %618 = vmatpush1.msra.mxu0 0.0
    %619 = vmatprep.subr.mxu0 0.0
    %620 = vmatpush1.msra.mxu0 0.0
    %621 = vmatprep.subr.mxu0 0.0
    %622 = vmatpush1.msra.mxu0 0.0
    %623 = vmatprep.subr.mxu0 0.0
    %624 = vmatpush1.msra.mxu0 0.0
    %625 = vmatprep.subr.mxu0 0.0
    %626 = vmatpush1.msra.mxu0 0.0
    %627 = vmatprep.subr.mxu0 0.0
    %628 = vmatpush1.msra.mxu0 0.0
    %629 = vmatprep.subr.mxu0 0.0
    %630 = vmatpush1.msra.mxu0 0.0
    %631 = vmatprep.subr.mxu0 0.0
    %632 = vmatpush1.msra.mxu0 0.0
    %633 = vmatprep.subr.mxu0 0.0
    %634 = vmatpush1.msra.mxu0 0.0
    %635 = vmatprep.subr.mxu0 0.0
    %636 = vmatpush1.msra.mxu0 0.0
    %637 = vmatprep.subr.mxu0 0.0
    %638 = vmatpush1.msra.mxu0 0.0
    %639 = vmatprep.subr.mxu0 0.0
    %640 = vmatpush1.msra.mxu0 0.0
    %641 = vmatprep.subr.mxu0 0.0
    %642 = vmatpush1.msra.mxu0 0.0
    %643 = vmatprep.subr.mxu0 0.0
    %644 = vmatpush1.msra.mxu0 0.0
    %645 = vmatprep.subr.mxu0 0.0
    %646 = vmatpush1.msra.mxu0 0.0
    %647 = vmatprep.subr.mxu0 0.0
    %648 = vmatpush1.msra.mxu0 0.0
    %649 = vmatprep.subr.mxu0 0.0
    %650 = vmatpush1.msra.mxu0 0.0
    %651 = vmatprep.subr.mxu0 0.0
    %652 = vmatpush1.msra.mxu0 0.0
    %653 = vmatprep.subr.mxu0 0.0
    %654 = vmatpush1.msra.mxu0 0.0
    %655 = vmatprep.mubr.f32.mxu0 0.0
    %656 = vmatmul.mubr.f32.gmra.mrb[0].mxu0 %v589
    %v657 = vpop.f32.mrb[0].mxu0
    %v658 = vadd.f32 0.0, %v657
    %v659 = vpop.f32.mrb[0].mxu0
    %v660 = vadd.f32 0.0, %v659
    %661 = vdwg.mxu0
    %v662 = vadd.f32 %v585, %v658
    %v663 = vxor.u32 %v662, 2147483648
    %v664 = vmul.f32 %v663, 1.442695
    %v665 = vpow.pop %v664
    %v666 = vadd.f32 %v665, 1.0
    %v667 = vrcp.pop %v666
    %v668 = vmul.f32 1.0, %v667
    %v669 = vadd.f32 %v660, %v394
    %v670 = vmul.f32 %v668, %v669
    %v671 = vadd.f32 %v587, %v670
    %v672 = vtanh.pop %v671
    %v673 = vsub.f32 1.0, %v668
    %675 = vrot.lane.b32.xlu0 %v672, 64
    %v676 = vpop.permute.xlu0 %675
    %v678 = vmul.f32 %v673, %v676
    %v679 = vmul.f32 %v668, %v407
    %v680 = vadd.f32 %v678, %v679
    %682 = vrot.lane.b32.xlu0 %v680, 64
    %v683 = vpop.permute.xlu0 %682
    %s685 = scalar_lea.vmem [#allocation2], 2
    %686 = vst.msk [vmem:[%s685] sm:$0x3] %vm412, %v683
    %687 = vmatprep.subr.mxu0 %v220
    %688 = vmatpush1.msra.mxu0 %v219
    %689 = vmatprep.subr.mxu0 %v222
    %690 = vmatpush1.msra.mxu0 %v221
    %691 = vmatprep.subr.mxu0 %v224
    %692 = vmatpush1.msra.mxu0 %v223
    %693 = vmatprep.subr.mxu0 %v226
    %694 = vmatpush1.msra.mxu0 %v225
    %695 = vmatprep.subr.mxu0 %v228
    %696 = vmatpush1.msra.mxu0 %v227
    %697 = vmatprep.subr.mxu0 %v230
    %698 = vmatpush1.msra.mxu0 %v229
    %699 = vmatprep.subr.mxu0 %v232
    %700 = vmatpush1.msra.mxu0 %v231
    %701 = vmatprep.subr.mxu0 %v234
    %702 = vmatpush1.msra.mxu0 %v233
    %703 = vmatprep.subr.mxu0 0.0
    %704 = vmatpush1.msra.mxu0 0.0
    %705 = vmatprep.subr.mxu0 0.0
    %706 = vmatpush1.msra.mxu0 0.0
    %707 = vmatprep.subr.mxu0 0.0
    %708 = vmatpush1.msra.mxu0 0.0
    %709 = vmatprep.subr.mxu0 0.0
    %710 = vmatpush1.msra.mxu0 0.0
    %711 = vmatprep.subr.mxu0 0.0
    %712 = vmatpush1.msra.mxu0 0.0
    %713 = vmatprep.subr.mxu0 0.0
    %714 = vmatpush1.msra.mxu0 0.0
    %715 = vmatprep.subr.mxu0 0.0
    %716 = vmatpush1.msra.mxu0 0.0
    %717 = vmatprep.subr.mxu0 0.0
    %718 = vmatpush1.msra.mxu0 0.0
    %719 = vmatprep.subr.mxu0 0.0
    %720 = vmatpush1.msra.mxu0 0.0
    %721 = vmatprep.subr.mxu0 0.0
    %722 = vmatpush1.msra.mxu0 0.0
    %723 = vmatprep.subr.mxu0 0.0
    %724 = vmatpush1.msra.mxu0 0.0
    %725 = vmatprep.subr.mxu0 0.0
    %726 = vmatpush1.msra.mxu0 0.0
    %727 = vmatprep.subr.mxu0 0.0
    %728 = vmatpush1.msra.mxu0 0.0
    %729 = vmatprep.subr.mxu0 0.0
    %730 = vmatpush1.msra.mxu0 0.0
    %731 = vmatprep.subr.mxu0 0.0
    %732 = vmatpush1.msra.mxu0 0.0
    %733 = vmatprep.subr.mxu0 0.0
    %734 = vmatpush1.msra.mxu0 0.0
    %735 = vmatprep.subr.mxu0 0.0
    %736 = vmatpush1.msra.mxu0 0.0
    %737 = vmatprep.subr.mxu0 0.0
    %738 = vmatpush1.msra.mxu0 0.0
    %739 = vmatprep.subr.mxu0 0.0
    %740 = vmatpush1.msra.mxu0 0.0
    %741 = vmatprep.subr.mxu0 0.0
    %742 = vmatpush1.msra.mxu0 0.0
    %743 = vmatprep.subr.mxu0 0.0
    %744 = vmatpush1.msra.mxu0 0.0
    %745 = vmatprep.subr.mxu0 0.0
    %746 = vmatpush1.msra.mxu0 0.0
    %747 = vmatprep.subr.mxu0 0.0
    %748 = vmatpush1.msra.mxu0 0.0
    %749 = vmatprep.subr.mxu0 0.0
    %750 = vmatpush1.msra.mxu0 0.0
    %751 = vmatprep.mubr.f32.mxu0 0.0
    %752 = vmatmul.mubr.f32.gmra.mrb[0].mxu0 %v516
    %v753 = vpop.f32.mrb[0].mxu0
    %v754 = vadd.f32 0.0, %v753
    %v755 = vpop.f32.mrb[0].mxu0
    %v756 = vadd.f32 0.0, %v755
    %757 = vdwg.mxu0
    %v759 = vrot.slane %v754, 4
    %v761 = vadd.f32 %v209, %v759
    %v762 = vxor.u32 %v761, 2147483648
    %v763 = vmul.f32 %v762, 1.442695
    %v764 = vpow.pop %v763
    %v765 = vadd.f32 %v764, 1.0
    %v766 = vrcp.pop %v765
    %v767 = vmul.f32 1.0, %v766
    %v768 = vadd.f32 %v756, %v281
    %v770 = vrot.slane %v768, 4
    %v772 = vmul.f32 %v767, %v770
    %v773 = vadd.f32 %v211, %v772
    %v774 = vtanh.pop %v773
    %v775 = vsub.f32 1.0, %v767
    %777 = vrot.lane.b32.xlu0 %v774, 64
    %v778 = vpop.permute.xlu0 %777
    %v780 = vmul.f32 %v775, %v778
    %v781 = vrot.slane %v511, 6
    %v783 = vmul.f32 %v767, %v781
    %v784 = vadd.f32 %v780, %v783
    %v786 = vrot.slane %v784, 4
    %787 = vrot.lane.b32.xlu0 %v786, 64
    %v788 = vpop.permute.xlu0 %787
    %v789 = vsel %vm309, %v788, 0
    %791 = vmatprep.subr.mxu0 %v252
    %792 = vmatpush1.msra.mxu0 %v251
    %793 = vmatprep.subr.mxu0 %v254
    %794 = vmatpush1.msra.mxu0 %v253
    %795 = vmatprep.subr.mxu0 %v256
    %796 = vmatpush1.msra.mxu0 %v255
    %797 = vmatprep.subr.mxu0 %v258
    %798 = vmatpush1.msra.mxu0 %v257
    %799 = vmatprep.subr.mxu0 %v260
    %800 = vmatpush1.msra.mxu0 %v259
    %801 = vmatprep.subr.mxu0 %v262
    %802 = vmatpush1.msra.mxu0 %v261
    %803 = vmatprep.subr.mxu0 %v264
    %804 = vmatpush1.msra.mxu0 %v263
    %805 = vmatprep.subr.mxu0 %v266
    %806 = vmatpush1.msra.mxu0 %v265
    %807 = vmatprep.subr.mxu0 0.0
    %808 = vmatpush1.msra.mxu0 0.0
    %809 = vmatprep.subr.mxu0 0.0
    %810 = vmatpush1.msra.mxu0 0.0
    %811 = vmatprep.subr.mxu0 0.0
    %812 = vmatpush1.msra.mxu0 0.0
    %813 = vmatprep.subr.mxu0 0.0
    %814 = vmatpush1.msra.mxu0 0.0
    %815 = vmatprep.subr.mxu0 0.0
    %816 = vmatpush1.msra.mxu0 0.0
    %817 = vmatprep.subr.mxu0 0.0
    %818 = vmatpush1.msra.mxu0 0.0
    %819 = vmatprep.subr.mxu0 0.0
    %820 = vmatpush1.msra.mxu0 0.0
    %821 = vmatprep.subr.mxu0 0.0
    %822 = vmatpush1.msra.mxu0 0.0
    %823 = vmatprep.subr.mxu0 0.0
    %824 = vmatpush1.msra.mxu0 0.0
    %825 = vmatprep.subr.mxu0 0.0
    %826 = vmatpush1.msra.mxu0 0.0
    %827 = vmatprep.subr.mxu0 0.0
    %828 = vmatpush1.msra.mxu0 0.0
    %829 = vmatprep.subr.mxu0 0.0
    %830 = vmatpush1.msra.mxu0 0.0
    %831 = vmatprep.subr.mxu0 0.0
    %832 = vmatpush1.msra.mxu0 0.0
    %833 = vmatprep.subr.mxu0 0.0
    %834 = vmatpush1.msra.mxu0 0.0
    %835 = vmatprep.subr.mxu0 0.0
    %836 = vmatpush1.msra.mxu0 0.0
    %837 = vmatprep.subr.mxu0 0.0
    %838 = vmatpush1.msra.mxu0 0.0
    %839 = vmatprep.subr.mxu0 0.0
    %840 = vmatpush1.msra.mxu0 0.0
    %841 = vmatprep.subr.mxu0 0.0
    %842 = vmatpush1.msra.mxu0 0.0
    %843 = vmatprep.subr.mxu0 0.0
    %844 = vmatpush1.msra.mxu0 0.0
    %845 = vmatprep.subr.mxu0 0.0
    %846 = vmatpush1.msra.mxu0 0.0
    %847 = vmatprep.subr.mxu0 0.0
    %848 = vmatpush1.msra.mxu0 0.0
    %849 = vmatprep.subr.mxu0 0.0
    %850 = vmatpush1.msra.mxu0 0.0
    %851 = vmatprep.subr.mxu0 0.0
    %852 = vmatpush1.msra.mxu0 0.0
    %853 = vmatprep.subr.mxu0 0.0
    %854 = vmatpush1.msra.mxu0 0.0
    %855 = vmatprep.mubr.f32.mxu0 0.0
    %856 = vmatmul.mubr.f32.gmra.mrb[0].mxu0 %v789
    %v857 = vpop.f32.mrb[0].mxu0
    %v858 = vadd.f32 %v299, %v857
    %v859 = vpop.f32.mrb[0].mxu0
    %v860 = vadd.f32 %v303, %v859
    %861 = vdwg.mxu0
    %v862 = vsel %vm309, %v683, 0
    %864 = vmatprep.subr.mxu0 %v236
    %865 = vmatpush1.msra.mxu0 %v235
    %866 = vmatprep.subr.mxu0 %v238
    %867 = vmatpush1.msra.mxu0 %v237
    %868 = vmatprep.subr.mxu0 %v240
    %869 = vmatpush1.msra.mxu0 %v239
    %870 = vmatprep.subr.mxu0 %v242
    %871 = vmatpush1.msra.mxu0 %v241
    %872 = vmatprep.subr.mxu0 %v244
    %873 = vmatpush1.msra.mxu0 %v243
    %874 = vmatprep.subr.mxu0 %v246
    %875 = vmatpush1.msra.mxu0 %v245
    %876 = vmatprep.subr.mxu0 %v248
    %877 = vmatpush1.msra.mxu0 %v247
    %878 = vmatprep.subr.mxu0 %v250
    %879 = vmatpush1.msra.mxu0 %v249
    %880 = vmatprep.subr.mxu0 0.0
    %881 = vmatpush1.msra.mxu0 0.0
    %882 = vmatprep.subr.mxu0 0.0
    %883 = vmatpush1.msra.mxu0 0.0
    %884 = vmatprep.subr.mxu0 0.0
    %885 = vmatpush1.msra.mxu0 0.0
    %886 = vmatprep.subr.mxu0 0.0
    %887 = vmatpush1.msra.mxu0 0.0
    %888 = vmatprep.subr.mxu0 0.0
    %889 = vmatpush1.msra.mxu0 0.0
    %890 = vmatprep.subr.mxu0 0.0
    %891 = vmatpush1.msra.mxu0 0.0
    %892 = vmatprep.subr.mxu0 0.0
    %893 = vmatpush1.msra.mxu0 0.0
    %894 = vmatprep.subr.mxu0 0.0
    %895 = vmatpush1.msra.mxu0 0.0
    %896 = vmatprep.subr.mxu0 0.0
    %897 = vmatpush1.msra.mxu0 0.0
    %898 = vmatprep.subr.mxu0 0.0
    %899 = vmatpush1.msra.mxu0 0.0
    %900 = vmatprep.subr.mxu0 0.0
    %901 = vmatpush1.msra.mxu0 0.0
    %902 = vmatprep.subr.mxu0 0.0
    %903 = vmatpush1.msra.mxu0 0.0
    %904 = vmatprep.subr.mxu0 0.0
    %905 = vmatpush1.msra.mxu0 0.0
    %906 = vmatprep.subr.mxu0 0.0
    %907 = vmatpush1.msra.mxu0 0.0
    %908 = vmatprep.subr.mxu0 0.0
    %909 = vmatpush1.msra.mxu0 0.0
    %910 = vmatprep.subr.mxu0 0.0
    %911 = vmatpush1.msra.mxu0 0.0
    %912 = vmatprep.subr.mxu0 0.0
    %913 = vmatpush1.msra.mxu0 0.0
    %914 = vmatprep.subr.mxu0 0.0
    %915 = vmatpush1.msra.mxu0 0.0
    %916 = vmatprep.subr.mxu0 0.0
    %917 = vmatpush1.msra.mxu0 0.0
    %918 = vmatprep.subr.mxu0 0.0
    %919 = vmatpush1.msra.mxu0 0.0
    %920 = vmatprep.subr.mxu0 0.0
    %921 = vmatpush1.msra.mxu0 0.0
    %922 = vmatprep.subr.mxu0 0.0
    %923 = vmatpush1.msra.mxu0 0.0
    %924 = vmatprep.subr.mxu0 0.0
    %925 = vmatpush1.msra.mxu0 0.0
    %926 = vmatprep.subr.mxu0 0.0
    %927 = vmatpush1.msra.mxu0 0.0
    %928 = vmatprep.mubr.f32.mxu0 0.0
    %929 = vmatmul.mubr.f32.gmra.mrb[0].mxu0 %v862
    %v930 = vpop.f32.mrb[0].mxu0
    %v931 = vadd.f32 0.0, %v930
    %v932 = vpop.f32.mrb[0].mxu0
    %v933 = vadd.f32 0.0, %v932
    %934 = vdwg.mxu0
    %v935 = vadd.f32 %v858, %v931
    %v936 = vxor.u32 %v935, 2147483648
    %v937 = vmul.f32 %v936, 1.442695
    %v938 = vpow.pop %v937
    %v939 = vadd.f32 %v938, 1.0
    %v940 = vrcp.pop %v939
    %v941 = vmul.f32 1.0, %v940
    %v942 = vadd.f32 %v933, %v394
    %v943 = vmul.f32 %v941, %v942
    %v944 = vadd.f32 %v860, %v943
    %v945 = vtanh.pop %v944
    %v946 = vsub.f32 1.0, %v941
    %948 = vrot.lane.b32.xlu0 %v945, 64
    %v949 = vpop.permute.xlu0 %948
    %v951 = vmul.f32 %v946, %v949
    %v952 = vmul.f32 %v941, %v680
    %v953 = vadd.f32 %v951, %v952
    %955 = vrot.lane.b32.xlu0 %v953, 64
    %v956 = vpop.permute.xlu0 %955
    %s958 = scalar_lea.vmem [#allocation2], 4
    %959 = vst.msk [vmem:[%s958] sm:$0x3] %vm412, %v956
    %960 = vmatprep.subr.mxu0 %v220
    %961 = vmatpush1.msra.mxu0 %v219
    %962 = vmatprep.subr.mxu0 %v222
    %963 = vmatpush1.msra.mxu0 %v221
    %964 = vmatprep.subr.mxu0 %v224
    %965 = vmatpush1.msra.mxu0 %v223
    %966 = vmatprep.subr.mxu0 %v226
    %967 = vmatpush1.msra.mxu0 %v225
    %968 = vmatprep.subr.mxu0 %v228
    %969 = vmatpush1.msra.mxu0 %v227
    %970 = vmatprep.subr.mxu0 %v230
    %971 = vmatpush1.msra.mxu0 %v229
    %972 = vmatprep.subr.mxu0 %v232
    %973 = vmatpush1.msra.mxu0 %v231
    %974 = vmatprep.subr.mxu0 %v234
    %975 = vmatpush1.msra.mxu0 %v233
    %976 = vmatprep.subr.mxu0 0.0
    %977 = vmatpush1.msra.mxu0 0.0
    %978 = vmatprep.subr.mxu0 0.0
    %979 = vmatpush1.msra.mxu0 0.0
    %980 = vmatprep.subr.mxu0 0.0
    %981 = vmatpush1.msra.mxu0 0.0
    %982 = vmatprep.subr.mxu0 0.0
    %983 = vmatpush1.msra.mxu0 0.0
    %984 = vmatprep.subr.mxu0 0.0
    %985 = vmatpush1.msra.mxu0 0.0
    %986 = vmatprep.subr.mxu0 0.0
    %987 = vmatpush1.msra.mxu0 0.0
    %988 = vmatprep.subr.mxu0 0.0
    %989 = vmatpush1.msra.mxu0 0.0
    %990 = vmatprep.subr.mxu0 0.0
    %991 = vmatpush1.msra.mxu0 0.0
    %992 = vmatprep.subr.mxu0 0.0
    %993 = vmatpush1.msra.mxu0 0.0
    %994 = vmatprep.subr.mxu0 0.0
    %995 = vmatpush1.msra.mxu0 0.0
    %996 = vmatprep.subr.mxu0 0.0
    %997 = vmatpush1.msra.mxu0 0.0
    %998 = vmatprep.subr.mxu0 0.0
    %999 = vmatpush1.msra.mxu0 0.0
    %1000 = vmatprep.subr.mxu0 0.0
    %1001 = vmatpush1.msra.mxu0 0.0
    %1002 = vmatprep.subr.mxu0 0.0
    %1003 = vmatpush1.msra.mxu0 0.0
    %1004 = vmatprep.subr.mxu0 0.0
    %1005 = vmatpush1.msra.mxu0 0.0
    %1006 = vmatprep.subr.mxu0 0.0
    %1007 = vmatpush1.msra.mxu0 0.0
    %1008 = vmatprep.subr.mxu0 0.0
    %1009 = vmatpush1.msra.mxu0 0.0
    %1010 = vmatprep.subr.mxu0 0.0
    %1011 = vmatpush1.msra.mxu0 0.0
    %1012 = vmatprep.subr.mxu0 0.0
    %1013 = vmatpush1.msra.mxu0 0.0
    %1014 = vmatprep.subr.mxu0 0.0
    %1015 = vmatpush1.msra.mxu0 0.0
    %1016 = vmatprep.subr.mxu0 0.0
    %1017 = vmatpush1.msra.mxu0 0.0
    %1018 = vmatprep.subr.mxu0 0.0
    %1019 = vmatpush1.msra.mxu0 0.0
    %1020 = vmatprep.subr.mxu0 0.0
    %1021 = vmatpush1.msra.mxu0 0.0
    %1022 = vmatprep.subr.mxu0 0.0
    %1023 = vmatpush1.msra.mxu0 0.0
    %1024 = vmatprep.mubr.f32.mxu0 0.0
    %1025 = vmatmul.mubr.f32.gmra.mrb[0].mxu0 %v789
    %v1026 = vpop.f32.mrb[0].mxu0
    %v1027 = vadd.f32 0.0, %v1026
    %v1028 = vpop.f32.mrb[0].mxu0
    %v1029 = vadd.f32 0.0, %v1028
    %1030 = vdwg.mxu0
    %v1032 = vrot.slane %v1027, 2
    %v1034 = vadd.f32 %v209, %v1032
    %v1035 = vxor.u32 %v1034, 2147483648
    %v1036 = vmul.f32 %v1035, 1.442695
    %v1037 = vpow.pop %v1036
    %v1038 = vadd.f32 %v1037, 1.0
    %v1039 = vrcp.pop %v1038
    %v1040 = vmul.f32 1.0, %v1039
    %v1041 = vadd.f32 %v1029, %v281
    %v1043 = vrot.slane %v1041, 2
    %v1045 = vmul.f32 %v1040, %v1043
    %v1046 = vadd.f32 %v211, %v1045
    %v1047 = vtanh.pop %v1046
    %v1048 = vsub.f32 1.0, %v1040
    %1050 = vrot.lane.b32.xlu0 %v1047, 64
    %v1051 = vpop.permute.xlu0 %1050
    %v1053 = vmul.f32 %v1048, %v1051
    %v1054 = vrot.slane %v784, 6
    %v1056 = vmul.f32 %v1040, %v1054
    %v1057 = vadd.f32 %v1053, %v1056
    %v1059 = vrot.slane %v1057, 6
    %1060 = vrot.lane.b32.xlu0 %v1059, 64
    %v1061 = vpop.permute.xlu0 %1060
    %v1062 = vsel %vm309, %v1061, 0
    %1064 = vmatprep.subr.mxu0 %v252
    %1065 = vmatpush1.msra.mxu0 %v251
    %1066 = vmatprep.subr.mxu0 %v254
    %1067 = vmatpush1.msra.mxu0 %v253
    %1068 = vmatprep.subr.mxu0 %v256
    %1069 = vmatpush1.msra.mxu0 %v255
    %1070 = vmatprep.subr.mxu0 %v258
    %1071 = vmatpush1.msra.mxu0 %v257
    %1072 = vmatprep.subr.mxu0 %v260
    %1073 = vmatpush1.msra.mxu0 %v259
    %1074 = vmatprep.subr.mxu0 %v262
    %1075 = vmatpush1.msra.mxu0 %v261
    %1076 = vmatprep.subr.mxu0 %v264
    %1077 = vmatpush1.msra.mxu0 %v263
    %1078 = vmatprep.subr.mxu0 %v266
    %1079 = vmatpush1.msra.mxu0 %v265
    %1080 = vmatprep.subr.mxu0 0.0
    %1081 = vmatpush1.msra.mxu0 0.0
    %1082 = vmatprep.subr.mxu0 0.0
    %1083 = vmatpush1.msra.mxu0 0.0
    %1084 = vmatprep.subr.mxu0 0.0
    %1085 = vmatpush1.msra.mxu0 0.0
    %1086 = vmatprep.subr.mxu0 0.0
    %1087 = vmatpush1.msra.mxu0 0.0
    %1088 = vmatprep.subr.mxu0 0.0
    %1089 = vmatpush1.msra.mxu0 0.0
    %1090 = vmatprep.subr.mxu0 0.0
    %1091 = vmatpush1.msra.mxu0 0.0
    %1092 = vmatprep.subr.mxu0 0.0
    %1093 = vmatpush1.msra.mxu0 0.0
    %1094 = vmatprep.subr.mxu0 0.0
    %1095 = vmatpush1.msra.mxu0 0.0
    %1096 = vmatprep.subr.mxu0 0.0
    %1097 = vmatpush1.msra.mxu0 0.0
    %1098 = vmatprep.subr.mxu0 0.0
    %1099 = vmatpush1.msra.mxu0 0.0
    %1100 = vmatprep.subr.mxu0 0.0
    %1101 = vmatpush1.msra.mxu0 0.0
    %1102 = vmatprep.subr.mxu0 0.0
    %1103 = vmatpush1.msra.mxu0 0.0
    %1104 = vmatprep.subr.mxu0 0.0
    %1105 = vmatpush1.msra.mxu0 0.0
    %1106 = vmatprep.subr.mxu0 0.0
    %1107 = vmatpush1.msra.mxu0 0.0
    %1108 = vmatprep.subr.mxu0 0.0
    %1109 = vmatpush1.msra.mxu0 0.0
    %1110 = vmatprep.subr.mxu0 0.0
    %1111 = vmatpush1.msra.mxu0 0.0
    %1112 = vmatprep.subr.mxu0 0.0
    %1113 = vmatpush1.msra.mxu0 0.0
    %1114 = vmatprep.subr.mxu0 0.0
    %1115 = vmatpush1.msra.mxu0 0.0
    %1116 = vmatprep.subr.mxu0 0.0
    %1117 = vmatpush1.msra.mxu0 0.0
    %1118 = vmatprep.subr.mxu0 0.0
    %1119 = vmatpush1.msra.mxu0 0.0
    %1120 = vmatprep.subr.mxu0 0.0
    %1121 = vmatpush1.msra.mxu0 0.0
    %1122 = vmatprep.subr.mxu0 0.0
    %1123 = vmatpush1.msra.mxu0 0.0
    %1124 = vmatprep.subr.mxu0 0.0
    %1125 = vmatpush1.msra.mxu0 0.0
    %1126 = vmatprep.subr.mxu0 0.0
    %1127 = vmatpush1.msra.mxu0 0.0
    %1128 = vmatprep.mubr.f32.mxu0 0.0
    %1129 = vmatmul.mubr.f32.gmra.mrb[0].mxu0 %v1062
    %v1130 = vpop.f32.mrb[0].mxu0
    %v1131 = vadd.f32 %v299, %v1130
    %v1132 = vpop.f32.mrb[0].mxu0
    %v1133 = vadd.f32 %v303, %v1132
    %1134 = vdwg.mxu0
    %v1135 = vsel %vm309, %v956, 0
    %1137 = vmatprep.subr.mxu0 %v236
    %1138 = vmatpush1.msra.mxu0 %v235
    %1139 = vmatprep.subr.mxu0 %v238
    %1140 = vmatpush1.msra.mxu0 %v237
    %1141 = vmatprep.subr.mxu0 %v240
    %1142 = vmatpush1.msra.mxu0 %v239
    %1143 = vmatprep.subr.mxu0 %v242
    %1144 = vmatpush1.msra.mxu0 %v241
    %1145 = vmatprep.subr.mxu0 %v244
    %1146 = vmatpush1.msra.mxu0 %v243
    %1147 = vmatprep.subr.mxu0 %v246
    %1148 = vmatpush1.msra.mxu0 %v245
    %1149 = vmatprep.subr.mxu0 %v248
    %1150 = vmatpush1.msra.mxu0 %v247
    %1151 = vmatprep.subr.mxu0 %v250
    %1152 = vmatpush1.msra.mxu0 %v249
    %1153 = vmatprep.subr.mxu0 0.0
    %1154 = vmatpush1.msra.mxu0 0.0
    %1155 = vmatprep.subr.mxu0 0.0
    %1156 = vmatpush1.msra.mxu0 0.0
    %1157 = vmatprep.subr.mxu0 0.0
    %1158 = vmatpush1.msra.mxu0 0.0
    %1159 = vmatprep.subr.mxu0 0.0
    %1160 = vmatpush1.msra.mxu0 0.0
    %1161 = vmatprep.subr.mxu0 0.0
    %1162 = vmatpush1.msra.mxu0 0.0
    %1163 = vmatprep.subr.mxu0 0.0
    %1164 = vmatpush1.msra.mxu0 0.0
    %1165 = vmatprep.subr.mxu0 0.0
    %1166 = vmatpush1.msra.mxu0 0.0
    %1167 = vmatprep.subr.mxu0 0.0
    %1168 = vmatpush1.msra.mxu0 0.0
    %1169 = vmatprep.subr.mxu0 0.0
    %1170 = vmatpush1.msra.mxu0 0.0
    %1171 = vmatprep.subr.mxu0 0.0
    %1172 = vmatpush1.msra.mxu0 0.0
    %1173 = vmatprep.subr.mxu0 0.0
    %1174 = vmatpush1.msra.mxu0 0.0
    %1175 = vmatprep.subr.mxu0 0.0
    %1176 = vmatpush1.msra.mxu0 0.0
    %1177 = vmatprep.subr.mxu0 0.0
    %1178 = vmatpush1.msra.mxu0 0.0
    %1179 = vmatprep.subr.mxu0 0.0
    %1180 = vmatpush1.msra.mxu0 0.0
    %1181 = vmatprep.subr.mxu0 0.0
    %1182 = vmatpush1.msra.mxu0 0.0
    %1183 = vmatprep.subr.mxu0 0.0
    %1184 = vmatpush1.msra.mxu0 0.0
    %1185 = vmatprep.subr.mxu0 0.0
    %1186 = vmatpush1.msra.mxu0 0.0
    %1187 = vmatprep.subr.mxu0 0.0
    %1188 = vmatpush1.msra.mxu0 0.0
    %1189 = vmatprep.subr.mxu0 0.0
    %1190 = vmatpush1.msra.mxu0 0.0
    %1191 = vmatprep.subr.mxu0 0.0
    %1192 = vmatpush1.msra.mxu0 0.0
    %1193 = vmatprep.subr.mxu0 0.0
    %1194 = vmatpush1.msra.mxu0 0.0
    %1195 = vmatprep.subr.mxu0 0.0
    %1196 = vmatpush1.msra.mxu0 0.0
    %1197 = vmatprep.subr.mxu0 0.0
    %1198 = vmatpush1.msra.mxu0 0.0
    %1199 = vmatprep.subr.mxu0 0.0
    %1200 = vmatpush1.msra.mxu0 0.0
    %1201 = vmatprep.mubr.f32.mxu0 0.0
    %1202 = vmatmul.mubr.f32.gmra.mrb[0].mxu0 %v1135
    %v1203 = vpop.f32.mrb[0].mxu0
    %v1204 = vadd.f32 0.0, %v1203
    %v1205 = vpop.f32.mrb[0].mxu0
    %v1206 = vadd.f32 0.0, %v1205
    %1207 = vdwg.mxu0
    %v1208 = vadd.f32 %v1131, %v1204
    %v1209 = vxor.u32 %v1208, 2147483648
    %v1210 = vmul.f32 %v1209, 1.442695
    %v1211 = vpow.pop %v1210
    %v1212 = vadd.f32 %v1211, 1.0
    %v1213 = vrcp.pop %v1212
    %v1214 = vmul.f32 1.0, %v1213
    %v1215 = vadd.f32 %v1206, %v394
    %v1216 = vmul.f32 %v1214, %v1215
    %v1217 = vadd.f32 %v1133, %v1216
    %v1218 = vtanh.pop %v1217
    %v1219 = vsub.f32 1.0, %v1214
    %1221 = vrot.lane.b32.xlu0 %v1218, 64
    %v1222 = vpop.permute.xlu0 %1221
    %v1224 = vmul.f32 %v1219, %v1222
    %v1225 = vmul.f32 %v1214, %v953
    %v1226 = vadd.f32 %v1224, %v1225
    %1228 = vrot.lane.b32.xlu0 %v1226, 64
    %v1229 = vpop.permute.xlu0 %1228
    %s1231 = scalar_lea.vmem [#allocation2], 6
    %1232 = vst.msk [vmem:[%s1231] sm:$0x3] %vm412, %v1229
    %1233 = vmatprep.subr.mxu0 %v220
    %1234 = vmatpush1.msra.mxu0 %v219
    %1235 = vmatprep.subr.mxu0 %v222
    %1236 = vmatpush1.msra.mxu0 %v221
    %1237 = vmatprep.subr.mxu0 %v224
    %1238 = vmatpush1.msra.mxu0 %v223
    %1239 = vmatprep.subr.mxu0 %v226
    %1240 = vmatpush1.msra.mxu0 %v225
    %1241 = vmatprep.subr.mxu0 %v228
    %1242 = vmatpush1.msra.mxu0 %v227
    %1243 = vmatprep.subr.mxu0 %v230
    %1244 = vmatpush1.msra.mxu0 %v229
    %1245 = vmatprep.subr.mxu0 %v232
    %1246 = vmatpush1.msra.mxu0 %v231
    %1247 = vmatprep.subr.mxu0 %v234
    %1248 = vmatpush1.msra.mxu0 %v233
    %1249 = vmatprep.subr.mxu0 0.0
    %1250 = vmatpush1.msra.mxu0 0.0
    %1251 = vmatprep.subr.mxu0 0.0
    %1252 = vmatpush1.msra.mxu0 0.0
    %1253 = vmatprep.subr.mxu0 0.0
    %1254 = vmatpush1.msra.mxu0 0.0
    %1255 = vmatprep.subr.mxu0 0.0
    %1256 = vmatpush1.msra.mxu0 0.0
    %1257 = vmatprep.subr.mxu0 0.0
    %1258 = vmatpush1.msra.mxu0 0.0
    %1259 = vmatprep.subr.mxu0 0.0
    %1260 = vmatpush1.msra.mxu0 0.0
    %1261 = vmatprep.subr.mxu0 0.0
    %1262 = vmatpush1.msra.mxu0 0.0
    %1263 = vmatprep.subr.mxu0 0.0
    %1264 = vmatpush1.msra.mxu0 0.0
    %1265 = vmatprep.subr.mxu0 0.0
    %1266 = vmatpush1.msra.mxu0 0.0
    %1267 = vmatprep.subr.mxu0 0.0
    %1268 = vmatpush1.msra.mxu0 0.0
    %1269 = vmatprep.subr.mxu0 0.0
    %1270 = vmatpush1.msra.mxu0 0.0
    %1271 = vmatprep.subr.mxu0 0.0
    %1272 = vmatpush1.msra.mxu0 0.0
    %1273 = vmatprep.subr.mxu0 0.0
    %1274 = vmatpush1.msra.mxu0 0.0
    %1275 = vmatprep.subr.mxu0 0.0
    %1276 = vmatpush1.msra.mxu0 0.0
    %1277 = vmatprep.subr.mxu0 0.0
    %1278 = vmatpush1.msra.mxu0 0.0
    %1279 = vmatprep.subr.mxu0 0.0
    %1280 = vmatpush1.msra.mxu0 0.0
    %1281 = vmatprep.subr.mxu0 0.0
    %1282 = vmatpush1.msra.mxu0 0.0
    %1283 = vmatprep.subr.mxu0 0.0
    %1284 = vmatpush1.msra.mxu0 0.0
    %1285 = vmatprep.subr.mxu0 0.0
    %1286 = vmatpush1.msra.mxu0 0.0
    %1287 = vmatprep.subr.mxu0 0.0
    %1288 = vmatpush1.msra.mxu0 0.0
    %1289 = vmatprep.subr.mxu0 0.0
    %1290 = vmatpush1.msra.mxu0 0.0
    %1291 = vmatprep.subr.mxu0 0.0
    %1292 = vmatpush1.msra.mxu0 0.0
    %1293 = vmatprep.subr.mxu0 0.0
    %1294 = vmatpush1.msra.mxu0 0.0
    %1295 = vmatprep.subr.mxu0 0.0
    %1296 = vmatpush1.msra.mxu0 0.0
    %1297 = vmatprep.mubr.f32.mxu0 0.0
    %1298 = vmatmul.mubr.f32.gmra.mrb[0].mxu0 %v1062
    %v1299 = vpop.f32.mrb[0].mxu0
    %v1300 = vadd.f32 0.0, %v1299
    %v1301 = vpop.f32.mrb[0].mxu0
    %v1302 = vadd.f32 0.0, %v1301
    %1303 = vdwg.mxu0
    %v1304 = vadd.f32 %v215, %v1300
    %v1305 = vxor.u32 %v1304, 2147483648
    %v1306 = vmul.f32 %v1305, 1.442695
    %v1307 = vpow.pop %v1306
    %v1308 = vadd.f32 %v1307, 1.0
    %v1309 = vrcp.pop %v1308
    %v1310 = vmul.f32 1.0, %v1309
    %v1311 = vadd.f32 %v1302, %v281
    %v1312 = vmul.f32 %v1310, %v1311
    %v1313 = vadd.f32 %v217, %v1312
    %v1314 = vtanh.pop %v1313
    %v1315 = vsub.f32 1.0, %v1310
    %1317 = vrot.lane.b32.xlu0 %v1314, 64
    %v1318 = vpop.permute.xlu0 %1317
    %v1320 = vmul.f32 %v1315, %v1318
    %v1322 = vmul.f32 %v1310, %v1059
    %v1323 = vadd.f32 %v1320, %v1322
    %1325 = vrot.lane.b32.xlu0 %v1323, 64
    %v1326 = vpop.permute.xlu0 %1325
    %v1327 = vsel %vm309, %v1326, 0
    %1329 = vmatprep.subr.mxu0 %v252
    %1330 = vmatpush1.msra.mxu0 %v251
    %1331 = vmatprep.subr.mxu0 %v254
    %1332 = vmatpush1.msra.mxu0 %v253
    %1333 = vmatprep.subr.mxu0 %v256
    %1334 = vmatpush1.msra.mxu0 %v255
    %1335 = vmatprep.subr.mxu0 %v258
    %1336 = vmatpush1.msra.mxu0 %v257
    %1337 = vmatprep.subr.mxu0 %v260
    %1338 = vmatpush1.msra.mxu0 %v259
    %1339 = vmatprep.subr.mxu0 %v262
    %1340 = vmatpush1.msra.mxu0 %v261
    %1341 = vmatprep.subr.mxu0 %v264
    %1342 = vmatpush1.msra.mxu0 %v263
    %1343 = vmatprep.subr.mxu0 %v266
    %1344 = vmatpush1.msra.mxu0 %v265
    %1345 = vmatprep.subr.mxu0 0.0
    %1346 = vmatpush1.msra.mxu0 0.0
    %1347 = vmatprep.subr.mxu0 0.0
    %1348 = vmatpush1.msra.mxu0 0.0
    %1349 = vmatprep.subr.mxu0 0.0
    %1350 = vmatpush1.msra.mxu0 0.0
    %1351 = vmatprep.subr.mxu0 0.0
    %1352 = vmatpush1.msra.mxu0 0.0
    %1353 = vmatprep.subr.mxu0 0.0
    %1354 = vmatpush1.msra.mxu0 0.0
    %1355 = vmatprep.subr.mxu0 0.0
    %1356 = vmatpush1.msra.mxu0 0.0
    %1357 = vmatprep.subr.mxu0 0.0
    %1358 = vmatpush1.msra.mxu0 0.0
    %1359 = vmatprep.subr.mxu0 0.0
    %1360 = vmatpush1.msra.mxu0 0.0
    %1361 = vmatprep.subr.mxu0 0.0
    %1362 = vmatpush1.msra.mxu0 0.0
    %1363 = vmatprep.subr.mxu0 0.0
    %1364 = vmatpush1.msra.mxu0 0.0
    %1365 = vmatprep.subr.mxu0 0.0
    %1366 = vmatpush1.msra.mxu0 0.0
    %1367 = vmatprep.subr.mxu0 0.0
    %1368 = vmatpush1.msra.mxu0 0.0
    %1369 = vmatprep.subr.mxu0 0.0
    %1370 = vmatpush1.msra.mxu0 0.0
    %1371 = vmatprep.subr.mxu0 0.0
    %1372 = vmatpush1.msra.mxu0 0.0
    %1373 = vmatprep.subr.mxu0 0.0
    %1374 = vmatpush1.msra.mxu0 0.0
    %1375 = vmatprep.subr.mxu0 0.0
    %1376 = vmatpush1.msra.mxu0 0.0
    %1377 = vmatprep.subr.mxu0 0.0
    %1378 = vmatpush1.msra.mxu0 0.0
    %1379 = vmatprep.subr.mxu0 0.0
    %1380 = vmatpush1.msra.mxu0 0.0
    %1381 = vmatprep.subr.mxu0 0.0
    %1382 = vmatpush1.msra.mxu0 0.0
    %1383 = vmatprep.subr.mxu0 0.0
    %1384 = vmatpush1.msra.mxu0 0.0
    %1385 = vmatprep.subr.mxu0 0.0
    %1386 = vmatpush1.msra.mxu0 0.0
    %1387 = vmatprep.subr.mxu0 0.0
    %1388 = vmatpush1.msra.mxu0 0.0
    %1389 = vmatprep.subr.mxu0 0.0
    %1390 = vmatpush1.msra.mxu0 0.0
    %1391 = vmatprep.subr.mxu0 0.0
    %1392 = vmatpush1.msra.mxu0 0.0
    %1393 = vmatprep.mubr.f32.mxu0 0.0
    %1394 = vmatmul.mubr.f32.gmra.mrb[0].mxu0 %v1327
    %v1395 = vpop.f32.mrb[0].mxu0
    %v1396 = vadd.f32 %v299, %v1395
    %v1397 = vpop.f32.mrb[0].mxu0
    %v1398 = vadd.f32 %v303, %v1397
    %1399 = vdwg.mxu0
    %v1400 = vsel %vm309, %v1229, 0
    %1402 = vmatprep.subr.mxu0 %v236
    %1403 = vmatpush1.msra.mxu0 %v235
    %1404 = vmatprep.subr.mxu0 %v238
    %1405 = vmatpush1.msra.mxu0 %v237
    %1406 = vmatprep.subr.mxu0 %v240
    %1407 = vmatpush1.msra.mxu0 %v239
    %1408 = vmatprep.subr.mxu0 %v242
    %1409 = vmatpush1.msra.mxu0 %v241
    %1410 = vmatprep.subr.mxu0 %v244
    %1411 = vmatpush1.msra.mxu0 %v243
    %1412 = vmatprep.subr.mxu0 %v246
    %1413 = vmatpush1.msra.mxu0 %v245
    %1414 = vmatprep.subr.mxu0 %v248
    %1415 = vmatpush1.msra.mxu0 %v247
    %1416 = vmatprep.subr.mxu0 %v250
    %1417 = vmatpush1.msra.mxu0 %v249
    %1418 = vmatprep.subr.mxu0 0.0
    %1419 = vmatpush1.msra.mxu0 0.0
    %1420 = vmatprep.subr.mxu0 0.0
    %1421 = vmatpush1.msra.mxu0 0.0
    %1422 = vmatprep.subr.mxu0 0.0
    %1423 = vmatpush1.msra.mxu0 0.0
    %1424 = vmatprep.subr.mxu0 0.0
    %1425 = vmatpush1.msra.mxu0 0.0
    %1426 = vmatprep.subr.mxu0 0.0
    %1427 = vmatpush1.msra.mxu0 0.0
    %1428 = vmatprep.subr.mxu0 0.0
    %1429 = vmatpush1.msra.mxu0 0.0
    %1430 = vmatprep.subr.mxu0 0.0
    %1431 = vmatpush1.msra.mxu0 0.0
    %1432 = vmatprep.subr.mxu0 0.0
    %1433 = vmatpush1.msra.mxu0 0.0
    %1434 = vmatprep.subr.mxu0 0.0
    %1435 = vmatpush1.msra.mxu0 0.0
    %1436 = vmatprep.subr.mxu0 0.0
    %1437 = vmatpush1.msra.mxu0 0.0
    %1438 = vmatprep.subr.mxu0 0.0
    %1439 = vmatpush1.msra.mxu0 0.0
    %1440 = vmatprep.subr.mxu0 0.0
    %1441 = vmatpush1.msra.mxu0 0.0
    %1442 = vmatprep.subr.mxu0 0.0
    %1443 = vmatpush1.msra.mxu0 0.0
    %1444 = vmatprep.subr.mxu0 0.0
    %1445 = vmatpush1.msra.mxu0 0.0
    %1446 = vmatprep.subr.mxu0 0.0
    %1447 = vmatpush1.msra.mxu0 0.0
    %1448 = vmatprep.subr.mxu0 0.0
    %1449 = vmatpush1.msra.mxu0 0.0
    %1450 = vmatprep.subr.mxu0 0.0
    %1451 = vmatpush1.msra.mxu0 0.0
    %1452 = vmatprep.subr.mxu0 0.0
    %1453 = vmatpush1.msra.mxu0 0.0
    %1454 = vmatprep.subr.mxu0 0.0
    %1455 = vmatpush1.msra.mxu0 0.0
    %1456 = vmatprep.subr.mxu0 0.0
    %1457 = vmatpush1.msra.mxu0 0.0
    %1458 = vmatprep.subr.mxu0 0.0
    %1459 = vmatpush1.msra.mxu0 0.0
    %1460 = vmatprep.subr.mxu0 0.0
    %1461 = vmatpush1.msra.mxu0 0.0
    %1462 = vmatprep.subr.mxu0 0.0
    %1463 = vmatpush1.msra.mxu0 0.0
    %1464 = vmatprep.subr.mxu0 0.0
    %1465 = vmatpush1.msra.mxu0 0.0
    %1466 = vmatprep.mubr.f32.mxu0 0.0
    %1467 = vmatmul.mubr.f32.gmra.mrb[0].mxu0 %v1400
    %v1468 = vpop.f32.mrb[0].mxu0
    %v1469 = vadd.f32 0.0, %v1468
    %v1470 = vpop.f32.mrb[0].mxu0
    %v1471 = vadd.f32 0.0, %v1470
    %1472 = vdwg.mxu0
    %v1473 = vadd.f32 %v1396, %v1469
    %v1474 = vxor.u32 %v1473, 2147483648
    %v1475 = vmul.f32 %v1474, 1.442695
    %v1476 = vpow.pop %v1475
    %v1477 = vadd.f32 %v1476, 1.0
    %v1478 = vrcp.pop %v1477
    %v1479 = vmul.f32 1.0, %v1478
    %v1480 = vadd.f32 %v1471, %v394
    %v1481 = vmul.f32 %v1479, %v1480
    %v1482 = vadd.f32 %v1398, %v1481
    %v1483 = vtanh.pop %v1482
    %v1484 = vsub.f32 1.0, %v1479
    %1486 = vrot.lane.b32.xlu0 %v1483, 64
    %v1487 = vpop.permute.xlu0 %1486
    %v1489 = vmul.f32 %v1484, %v1487
    %v1490 = vmul.f32 %v1479, %v1226
    %v1491 = vadd.f32 %v1489, %v1490
    %1493 = vrot.lane.b32.xlu0 %v1491, 64
    %v1494 = vpop.permute.xlu0 %1493
    %s1496 = scalar_lea.vmem [#allocation2], 8
    %1497 = vst.msk [vmem:[%s1496] sm:$0x3] %vm412, %v1494
    %1498 = vmatprep.subr.mxu0 %v220
    %1499 = vmatpush1.msra.mxu0 %v219
    %1500 = vmatprep.subr.mxu0 %v222
    %1501 = vmatpush1.msra.mxu0 %v221
    %1502 = vmatprep.subr.mxu0 %v224
    %1503 = vmatpush1.msra.mxu0 %v223
    %1504 = vmatprep.subr.mxu0 %v226
    %1505 = vmatpush1.msra.mxu0 %v225
    %1506 = vmatprep.subr.mxu0 %v228
    %1507 = vmatpush1.msra.mxu0 %v227
    %1508 = vmatprep.subr.mxu0 %v230
    %1509 = vmatpush1.msra.mxu0 %v229
    %1510 = vmatprep.subr.mxu0 %v232
    %1511 = vmatpush1.msra.mxu0 %v231
    %1512 = vmatprep.subr.mxu0 %v234
    %1513 = vmatpush1.msra.mxu0 %v233
    %1514 = vmatprep.subr.mxu0 0.0
    %1515 = vmatpush1.msra.mxu0 0.0
    %1516 = vmatprep.subr.mxu0 0.0
    %1517 = vmatpush1.msra.mxu0 0.0
    %1518 = vmatprep.subr.mxu0 0.0
    %1519 = vmatpush1.msra.mxu0 0.0
    %1520 = vmatprep.subr.mxu0 0.0
    %1521 = vmatpush1.msra.mxu0 0.0
    %1522 = vmatprep.subr.mxu0 0.0
    %1523 = vmatpush1.msra.mxu0 0.0
    %1524 = vmatprep.subr.mxu0 0.0
    %1525 = vmatpush1.msra.mxu0 0.0
    %1526 = vmatprep.subr.mxu0 0.0
    %1527 = vmatpush1.msra.mxu0 0.0
    %1528 = vmatprep.subr.mxu0 0.0
    %1529 = vmatpush1.msra.mxu0 0.0
    %1530 = vmatprep.subr.mxu0 0.0
    %1531 = vmatpush1.msra.mxu0 0.0
    %1532 = vmatprep.subr.mxu0 0.0
    %1533 = vmatpush1.msra.mxu0 0.0
    %1534 = vmatprep.subr.mxu0 0.0
    %1535 = vmatpush1.msra.mxu0 0.0
    %1536 = vmatprep.subr.mxu0 0.0
    %1537 = vmatpush1.msra.mxu0 0.0
    %1538 = vmatprep.subr.mxu0 0.0
    %1539 = vmatpush1.msra.mxu0 0.0
    %1540 = vmatprep.subr.mxu0 0.0
    %1541 = vmatpush1.msra.mxu0 0.0
    %1542 = vmatprep.subr.mxu0 0.0
    %1543 = vmatpush1.msra.mxu0 0.0
    %1544 = vmatprep.subr.mxu0 0.0
    %1545 = vmatpush1.msra.mxu0 0.0
    %1546 = vmatprep.subr.mxu0 0.0
    %1547 = vmatpush1.msra.mxu0 0.0
    %1548 = vmatprep.subr.mxu0 0.0
    %1549 = vmatpush1.msra.mxu0 0.0
    %1550 = vmatprep.subr.mxu0 0.0
    %1551 = vmatpush1.msra.mxu0 0.0
    %1552 = vmatprep.subr.mxu0 0.0
    %1553 = vmatpush1.msra.mxu0 0.0
    %1554 = vmatprep.subr.mxu0 0.0
    %1555 = vmatpush1.msra.mxu0 0.0
    %1556 = vmatprep.subr.mxu0 0.0
    %1557 = vmatpush1.msra.mxu0 0.0
    %1558 = vmatprep.subr.mxu0 0.0
    %1559 = vmatpush1.msra.mxu0 0.0
    %1560 = vmatprep.subr.mxu0 0.0
    %1561 = vmatpush1.msra.mxu0 0.0
    %1562 = vmatprep.mubr.f32.mxu0 0.0
    %1563 = vmatmul.mubr.f32.gmra.mrb[0].mxu0 %v1327
    %v1564 = vpop.f32.mrb[0].mxu0
    %v1565 = vadd.f32 0.0, %v1564
    %v1566 = vpop.f32.mrb[0].mxu0
    %v1567 = vadd.f32 0.0, %v1566
    %1568 = vdwg.mxu0
    %v1570 = vrot.slane %v1565, 6
    %v1572 = vadd.f32 %v215, %v1570
    %v1573 = vxor.u32 %v1572, 2147483648
    %v1574 = vmul.f32 %v1573, 1.442695
    %v1575 = vpow.pop %v1574
    %v1576 = vadd.f32 %v1575, 1.0
    %v1577 = vrcp.pop %v1576
    %v1578 = vmul.f32 1.0, %v1577
    %v1579 = vadd.f32 %v1567, %v281
    %v1581 = vrot.slane %v1579, 6
    %v1583 = vmul.f32 %v1578, %v1581
    %v1584 = vadd.f32 %v217, %v1583
    %v1585 = vtanh.pop %v1584
    %v1586 = vsub.f32 1.0, %v1578
    %1588 = vrot.lane.b32.xlu0 %v1585, 64
    %v1589 = vpop.permute.xlu0 %1588
    %v1591 = vmul.f32 %v1586, %v1589
    %v1592 = vrot.slane %v1323, 6
    %v1594 = vmul.f32 %v1578, %v1592
    %v1595 = vadd.f32 %v1591, %v1594
    %v1597 = vrot.slane %v1595, 2
    %1598 = vrot.lane.b32.xlu0 %v1597, 64
    %v1599 = vpop.permute.xlu0 %1598
    %v1600 = vsel %vm309, %v1599, 0
    %1602 = vmatprep.subr.mxu0 %v252
    %1603 = vmatpush1.msra.mxu0 %v251
    %1604 = vmatprep.subr.mxu0 %v254
    %1605 = vmatpush1.msra.mxu0 %v253
    %1606 = vmatprep.subr.mxu0 %v256
    %1607 = vmatpush1.msra.mxu0 %v255
    %1608 = vmatprep.subr.mxu0 %v258
    %1609 = vmatpush1.msra.mxu0 %v257
    %1610 = vmatprep.subr.mxu0 %v260
    %1611 = vmatpush1.msra.mxu0 %v259
    %1612 = vmatprep.subr.mxu0 %v262
    %1613 = vmatpush1.msra.mxu0 %v261
    %1614 = vmatprep.subr.mxu0 %v264
    %1615 = vmatpush1.msra.mxu0 %v263
    %1616 = vmatprep.subr.mxu0 %v266
    %1617 = vmatpush1.msra.mxu0 %v265
    %1618 = vmatprep.subr.mxu0 0.0
    %1619 = vmatpush1.msra.mxu0 0.0
    %1620 = vmatprep.subr.mxu0 0.0
    %1621 = vmatpush1.msra.mxu0 0.0
    %1622 = vmatprep.subr.mxu0 0.0
    %1623 = vmatpush1.msra.mxu0 0.0
    %1624 = vmatprep.subr.mxu0 0.0
    %1625 = vmatpush1.msra.mxu0 0.0
    %1626 = vmatprep.subr.mxu0 0.0
    %1627 = vmatpush1.msra.mxu0 0.0
    %1628 = vmatprep.subr.mxu0 0.0
    %1629 = vmatpush1.msra.mxu0 0.0
    %1630 = vmatprep.subr.mxu0 0.0
    %1631 = vmatpush1.msra.mxu0 0.0
    %1632 = vmatprep.subr.mxu0 0.0
    %1633 = vmatpush1.msra.mxu0 0.0
    %1634 = vmatprep.subr.mxu0 0.0
    %1635 = vmatpush1.msra.mxu0 0.0
    %1636 = vmatprep.subr.mxu0 0.0
    %1637 = vmatpush1.msra.mxu0 0.0
    %1638 = vmatprep.subr.mxu0 0.0
    %1639 = vmatpush1.msra.mxu0 0.0
    %1640 = vmatprep.subr.mxu0 0.0
    %1641 = vmatpush1.msra.mxu0 0.0
    %1642 = vmatprep.subr.mxu0 0.0
    %1643 = vmatpush1.msra.mxu0 0.0
    %1644 = vmatprep.subr.mxu0 0.0
    %1645 = vmatpush1.msra.mxu0 0.0
    %1646 = vmatprep.subr.mxu0 0.0
    %1647 = vmatpush1.msra.mxu0 0.0
    %1648 = vmatprep.subr.mxu0 0.0
    %1649 = vmatpush1.msra.mxu0 0.0
    %1650 = vmatprep.subr.mxu0 0.0
    %1651 = vmatpush1.msra.mxu0 0.0
    %1652 = vmatprep.subr.mxu0 0.0
    %1653 = vmatpush1.msra.mxu0 0.0
    %1654 = vmatprep.subr.mxu0 0.0
    %1655 = vmatpush1.msra.mxu0 0.0
    %1656 = vmatprep.subr.mxu0 0.0
    %1657 = vmatpush1.msra.mxu0 0.0
    %1658 = vmatprep.subr.mxu0 0.0
    %1659 = vmatpush1.msra.mxu0 0.0
    %1660 = vmatprep.subr.mxu0 0.0
    %1661 = vmatpush1.msra.mxu0 0.0
    %1662 = vmatprep.subr.mxu0 0.0
    %1663 = vmatpush1.msra.mxu0 0.0
    %1664 = vmatprep.subr.mxu0 0.0
    %1665 = vmatpush1.msra.mxu0 0.0
    %1666 = vmatprep.mubr.f32.mxu0 0.0
    %1667 = vmatmul.mubr.f32.gmra.mrb[0].mxu0 %v1600
    %v1668 = vpop.f32.mrb[0].mxu0
    %v1669 = vadd.f32 %v299, %v1668
    %v1670 = vpop.f32.mrb[0].mxu0
    %v1671 = vadd.f32 %v303, %v1670
    %1672 = vdwg.mxu0
    %v1673 = vsel %vm309, %v1494, 0
    %1675 = vmatprep.subr.mxu0 %v236
    %1676 = vmatpush1.msra.mxu0 %v235
    %1677 = vmatprep.subr.mxu0 %v238
    %1678 = vmatpush1.msra.mxu0 %v237
    %1679 = vmatprep.subr.mxu0 %v240
    %1680 = vmatpush1.msra.mxu0 %v239
    %1681 = vmatprep.subr.mxu0 %v242
    %1682 = vmatpush1.msra.mxu0 %v241
    %1683 = vmatprep.subr.mxu0 %v244
    %1684 = vmatpush1.msra.mxu0 %v243
    %1685 = vmatprep.subr.mxu0 %v246
    %1686 = vmatpush1.msra.mxu0 %v245
    %1687 = vmatprep.subr.mxu0 %v248
    %1688 = vmatpush1.msra.mxu0 %v247
    %1689 = vmatprep.subr.mxu0 %v250
    %1690 = vmatpush1.msra.mxu0 %v249
    %1691 = vmatprep.subr.mxu0 0.0
    %1692 = vmatpush1.msra.mxu0 0.0
    %1693 = vmatprep.subr.mxu0 0.0
    %1694 = vmatpush1.msra.mxu0 0.0
    %1695 = vmatprep.subr.mxu0 0.0
    %1696 = vmatpush1.msra.mxu0 0.0
    %1697 = vmatprep.subr.mxu0 0.0
    %1698 = vmatpush1.msra.mxu0 0.0
    %1699 = vmatprep.subr.mxu0 0.0
    %1700 = vmatpush1.msra.mxu0 0.0
    %1701 = vmatprep.subr.mxu0 0.0
    %1702 = vmatpush1.msra.mxu0 0.0
    %1703 = vmatprep.subr.mxu0 0.0
    %1704 = vmatpush1.msra.mxu0 0.0
    %1705 = vmatprep.subr.mxu0 0.0
    %1706 = vmatpush1.msra.mxu0 0.0
    %1707 = vmatprep.subr.mxu0 0.0
    %1708 = vmatpush1.msra.mxu0 0.0
    %1709 = vmatprep.subr.mxu0 0.0
    %1710 = vmatpush1.msra.mxu0 0.0
    %1711 = vmatprep.subr.mxu0 0.0
    %1712 = vmatpush1.msra.mxu0 0.0
    %1713 = vmatprep.subr.mxu0 0.0
    %1714 = vmatpush1.msra.mxu0 0.0
    %1715 = vmatprep.subr.mxu0 0.0
    %1716 = vmatpush1.msra.mxu0 0.0
    %1717 = vmatprep.subr.mxu0 0.0
    %1718 = vmatpush1.msra.mxu0 0.0
    %1719 = vmatprep.subr.mxu0 0.0
    %1720 = vmatpush1.msra.mxu0 0.0
    %1721 = vmatprep.subr.mxu0 0.0
    %1722 = vmatpush1.msra.mxu0 0.0
    %1723 = vmatprep.subr.mxu0 0.0
    %1724 = vmatpush1.msra.mxu0 0.0
    %1725 = vmatprep.subr.mxu0 0.0
    %1726 = vmatpush1.msra.mxu0 0.0
    %1727 = vmatprep.subr.mxu0 0.0
    %1728 = vmatpush1.msra.mxu0 0.0
    %1729 = vmatprep.subr.mxu0 0.0
    %1730 = vmatpush1.msra.mxu0 0.0
    %1731 = vmatprep.subr.mxu0 0.0
    %1732 = vmatpush1.msra.mxu0 0.0
    %1733 = vmatprep.subr.mxu0 0.0
    %1734 = vmatpush1.msra.mxu0 0.0
    %1735 = vmatprep.subr.mxu0 0.0
    %1736 = vmatpush1.msra.mxu0 0.0
    %1737 = vmatprep.subr.mxu0 0.0
    %1738 = vmatpush1.msra.mxu0 0.0
    %1739 = vmatprep.mubr.f32.mxu0 0.0
    %1740 = vmatmul.mubr.f32.gmra.mrb[0].mxu0 %v1673
    %v1741 = vpop.f32.mrb[0].mxu0
    %v1742 = vadd.f32 0.0, %v1741
    %v1743 = vpop.f32.mrb[0].mxu0
    %v1744 = vadd.f32 0.0, %v1743
    %1745 = vdwg.mxu0
    %v1746 = vadd.f32 %v1669, %v1742
    %v1747 = vxor.u32 %v1746, 2147483648
    %v1748 = vmul.f32 %v1747, 1.442695
    %v1749 = vpow.pop %v1748
    %v1750 = vadd.f32 %v1749, 1.0
    %v1751 = vrcp.pop %v1750
    %v1752 = vmul.f32 1.0, %v1751
    %v1753 = vadd.f32 %v1744, %v394
    %v1754 = vmul.f32 %v1752, %v1753
    %v1755 = vadd.f32 %v1671, %v1754
    %v1756 = vtanh.pop %v1755
    %v1757 = vsub.f32 1.0, %v1752
    %1759 = vrot.lane.b32.xlu0 %v1756, 64
    %v1760 = vpop.permute.xlu0 %1759
    %v1762 = vmul.f32 %v1757, %v1760
    %v1763 = vmul.f32 %v1752, %v1491
    %v1764 = vadd.f32 %v1762, %v1763
    %1766 = vrot.lane.b32.xlu0 %v1764, 64
    %v1767 = vpop.permute.xlu0 %1766
    %s1769 = scalar_lea.vmem [#allocation2], 10
    %1770 = vst.msk [vmem:[%s1769] sm:$0x3] %vm412, %v1767
    %1771 = vmatprep.subr.mxu0 %v220
    %1772 = vmatpush1.msra.mxu0 %v219
    %1773 = vmatprep.subr.mxu0 %v222
    %1774 = vmatpush1.msra.mxu0 %v221
    %1775 = vmatprep.subr.mxu0 %v224
    %1776 = vmatpush1.msra.mxu0 %v223
    %1777 = vmatprep.subr.mxu0 %v226
    %1778 = vmatpush1.msra.mxu0 %v225
    %1779 = vmatprep.subr.mxu0 %v228
    %1780 = vmatpush1.msra.mxu0 %v227
    %1781 = vmatprep.subr.mxu0 %v230
    %1782 = vmatpush1.msra.mxu0 %v229
    %1783 = vmatprep.subr.mxu0 %v232
    %1784 = vmatpush1.msra.mxu0 %v231
    %1785 = vmatprep.subr.mxu0 %v234
    %1786 = vmatpush1.msra.mxu0 %v233
    %1787 = vmatprep.subr.mxu0 0.0
    %1788 = vmatpush1.msra.mxu0 0.0
    %1789 = vmatprep.subr.mxu0 0.0
    %1790 = vmatpush1.msra.mxu0 0.0
    %1791 = vmatprep.subr.mxu0 0.0
    %1792 = vmatpush1.msra.mxu0 0.0
    %1793 = vmatprep.subr.mxu0 0.0
    %1794 = vmatpush1.msra.mxu0 0.0
    %1795 = vmatprep.subr.mxu0 0.0
    %1796 = vmatpush1.msra.mxu0 0.0
    %1797 = vmatprep.subr.mxu0 0.0
    %1798 = vmatpush1.msra.mxu0 0.0
    %1799 = vmatprep.subr.mxu0 0.0
    %1800 = vmatpush1.msra.mxu0 0.0
    %1801 = vmatprep.subr.mxu0 0.0
    %1802 = vmatpush1.msra.mxu0 0.0
    %1803 = vmatprep.subr.mxu0 0.0
    %1804 = vmatpush1.msra.mxu0 0.0
    %1805 = vmatprep.subr.mxu0 0.0
    %1806 = vmatpush1.msra.mxu0 0.0
    %1807 = vmatprep.subr.mxu0 0.0
    %1808 = vmatpush1.msra.mxu0 0.0
    %1809 = vmatprep.subr.mxu0 0.0
    %1810 = vmatpush1.msra.mxu0 0.0
    %1811 = vmatprep.subr.mxu0 0.0
    %1812 = vmatpush1.msra.mxu0 0.0
    %1813 = vmatprep.subr.mxu0 0.0
    %1814 = vmatpush1.msra.mxu0 0.0
    %1815 = vmatprep.subr.mxu0 0.0
    %1816 = vmatpush1.msra.mxu0 0.0
    %1817 = vmatprep.subr.mxu0 0.0
    %1818 = vmatpush1.msra.mxu0 0.0
    %1819 = vmatprep.subr.mxu0 0.0
    %1820 = vmatpush1.msra.mxu0 0.0
    %1821 = vmatprep.subr.mxu0 0.0
    %1822 = vmatpush1.msra.mxu0 0.0
    %1823 = vmatprep.subr.mxu0 0.0
    %1824 = vmatpush1.msra.mxu0 0.0
    %1825 = vmatprep.subr.mxu0 0.0
    %1826 = vmatpush1.msra.mxu0 0.0
    %1827 = vmatprep.subr.mxu0 0.0
    %1828 = vmatpush1.msra.mxu0 0.0
    %1829 = vmatprep.subr.mxu0 0.0
    %1830 = vmatpush1.msra.mxu0 0.0
    %1831 = vmatprep.subr.mxu0 0.0
    %1832 = vmatpush1.msra.mxu0 0.0
    %1833 = vmatprep.subr.mxu0 0.0
    %1834 = vmatpush1.msra.mxu0 0.0
    %1835 = vmatprep.mubr.f32.mxu0 0.0
    %1836 = vmatmul.mubr.f32.gmra.mrb[0].mxu0 %v1600
    %v1837 = vpop.f32.mrb[0].mxu0
    %v1838 = vadd.f32 0.0, %v1837
    %v1839 = vpop.f32.mrb[0].mxu0
    %v1840 = vadd.f32 0.0, %v1839
    %1841 = vdwg.mxu0
    %v1843 = vrot.slane %v1838, 4
    %v1845 = vadd.f32 %v215, %v1843
    %v1846 = vxor.u32 %v1845, 2147483648
    %v1847 = vmul.f32 %v1846, 1.442695
    %v1848 = vpow.pop %v1847
    %v1849 = vadd.f32 %v1848, 1.0
    %v1850 = vrcp.pop %v1849
    %v1851 = vmul.f32 1.0, %v1850
    %v1852 = vadd.f32 %v1840, %v281
    %v1854 = vrot.slane %v1852, 4
    %v1856 = vmul.f32 %v1851, %v1854
    %v1857 = vadd.f32 %v217, %v1856
    %v1858 = vtanh.pop %v1857
    %v1859 = vsub.f32 1.0, %v1851
    %1861 = vrot.lane.b32.xlu0 %v1858, 64
    %v1862 = vpop.permute.xlu0 %1861
    %v1864 = vmul.f32 %v1859, %v1862
    %v1865 = vrot.slane %v1595, 6
    %v1867 = vmul.f32 %v1851, %v1865
    %v1868 = vadd.f32 %v1864, %v1867
    %v1870 = vrot.slane %v1868, 4
    %1871 = vrot.lane.b32.xlu0 %v1870, 64
    %v1872 = vpop.permute.xlu0 %1871
    %v1873 = vsel %vm309, %v1872, 0
    %1875 = vmatprep.subr.mxu0 %v252
    %1876 = vmatpush1.msra.mxu0 %v251
    %1877 = vmatprep.subr.mxu0 %v254
    %1878 = vmatpush1.msra.mxu0 %v253
    %1879 = vmatprep.subr.mxu0 %v256
    %1880 = vmatpush1.msra.mxu0 %v255
    %1881 = vmatprep.subr.mxu0 %v258
    %1882 = vmatpush1.msra.mxu0 %v257
    %1883 = vmatprep.subr.mxu0 %v260
    %1884 = vmatpush1.msra.mxu0 %v259
    %1885 = vmatprep.subr.mxu0 %v262
    %1886 = vmatpush1.msra.mxu0 %v261
    %1887 = vmatprep.subr.mxu0 %v264
    %1888 = vmatpush1.msra.mxu0 %v263
    %1889 = vmatprep.subr.mxu0 %v266
    %1890 = vmatpush1.msra.mxu0 %v265
    %1891 = vmatprep.subr.mxu0 0.0
    %1892 = vmatpush1.msra.mxu0 0.0
    %1893 = vmatprep.subr.mxu0 0.0
    %1894 = vmatpush1.msra.mxu0 0.0
    %1895 = vmatprep.subr.mxu0 0.0
    %1896 = vmatpush1.msra.mxu0 0.0
    %1897 = vmatprep.subr.mxu0 0.0
    %1898 = vmatpush1.msra.mxu0 0.0
    %1899 = vmatprep.subr.mxu0 0.0
    %1900 = vmatpush1.msra.mxu0 0.0
    %1901 = vmatprep.subr.mxu0 0.0
    %1902 = vmatpush1.msra.mxu0 0.0
    %1903 = vmatprep.subr.mxu0 0.0
    %1904 = vmatpush1.msra.mxu0 0.0
    %1905 = vmatprep.subr.mxu0 0.0
    %1906 = vmatpush1.msra.mxu0 0.0
    %1907 = vmatprep.subr.mxu0 0.0
    %1908 = vmatpush1.msra.mxu0 0.0
    %1909 = vmatprep.subr.mxu0 0.0
    %1910 = vmatpush1.msra.mxu0 0.0
    %1911 = vmatprep.subr.mxu0 0.0
    %1912 = vmatpush1.msra.mxu0 0.0
    %1913 = vmatprep.subr.mxu0 0.0
    %1914 = vmatpush1.msra.mxu0 0.0
    %1915 = vmatprep.subr.mxu0 0.0
    %1916 = vmatpush1.msra.mxu0 0.0
    %1917 = vmatprep.subr.mxu0 0.0
    %1918 = vmatpush1.msra.mxu0 0.0
    %1919 = vmatprep.subr.mxu0 0.0
    %1920 = vmatpush1.msra.mxu0 0.0
    %1921 = vmatprep.subr.mxu0 0.0
    %1922 = vmatpush1.msra.mxu0 0.0
    %1923 = vmatprep.subr.mxu0 0.0
    %1924 = vmatpush1.msra.mxu0 0.0
    %1925 = vmatprep.subr.mxu0 0.0
    %1926 = vmatpush1.msra.mxu0 0.0
    %1927 = vmatprep.subr.mxu0 0.0
    %1928 = vmatpush1.msra.mxu0 0.0
    %1929 = vmatprep.subr.mxu0 0.0
    %1930 = vmatpush1.msra.mxu0 0.0
    %1931 = vmatprep.subr.mxu0 0.0
    %1932 = vmatpush1.msra.mxu0 0.0
    %1933 = vmatprep.subr.mxu0 0.0
    %1934 = vmatpush1.msra.mxu0 0.0
    %1935 = vmatprep.subr.mxu0 0.0
    %1936 = vmatpush1.msra.mxu0 0.0
    %1937 = vmatprep.subr.mxu0 0.0
    %1938 = vmatpush1.msra.mxu0 0.0
    %1939 = vmatprep.mubr.f32.mxu0 0.0
    %1940 = vmatmul.mubr.f32.gmra.mrb[0].mxu0 %v1873
    %v1941 = vpop.f32.mrb[0].mxu0
    %v1942 = vadd.f32 %v299, %v1941
    %v1943 = vpop.f32.mrb[0].mxu0
    %v1944 = vadd.f32 %v303, %v1943
    %1945 = vdwg.mxu0
    %v1946 = vsel %vm309, %v1767, 0
    %1948 = vmatprep.subr.mxu0 %v236
    %1949 = vmatpush1.msra.mxu0 %v235
    %1950 = vmatprep.subr.mxu0 %v238
    %1951 = vmatpush1.msra.mxu0 %v237
    %1952 = vmatprep.subr.mxu0 %v240
    %1953 = vmatpush1.msra.mxu0 %v239
    %1954 = vmatprep.subr.mxu0 %v242
    %1955 = vmatpush1.msra.mxu0 %v241
    %1956 = vmatprep.subr.mxu0 %v244
    %1957 = vmatpush1.msra.mxu0 %v243
    %1958 = vmatprep.subr.mxu0 %v246
    %1959 = vmatpush1.msra.mxu0 %v245
    %1960 = vmatprep.subr.mxu0 %v248
    %1961 = vmatpush1.msra.mxu0 %v247
    %1962 = vmatprep.subr.mxu0 %v250
    %1963 = vmatpush1.msra.mxu0 %v249
    %1964 = vmatprep.subr.mxu0 0.0
    %1965 = vmatpush1.msra.mxu0 0.0
    %1966 = vmatprep.subr.mxu0 0.0
    %1967 = vmatpush1.msra.mxu0 0.0
    %1968 = vmatprep.subr.mxu0 0.0
    %1969 = vmatpush1.msra.mxu0 0.0
    %1970 = vmatprep.subr.mxu0 0.0
    %1971 = vmatpush1.msra.mxu0 0.0
    %1972 = vmatprep.subr.mxu0 0.0
    %1973 = vmatpush1.msra.mxu0 0.0
    %1974 = vmatprep.subr.mxu0 0.0
    %1975 = vmatpush1.msra.mxu0 0.0
    %1976 = vmatprep.subr.mxu0 0.0
    %1977 = vmatpush1.msra.mxu0 0.0
    %1978 = vmatprep.subr.mxu0 0.0
    %1979 = vmatpush1.msra.mxu0 0.0
    %1980 = vmatprep.subr.mxu0 0.0
    %1981 = vmatpush1.msra.mxu0 0.0
    %1982 = vmatprep.subr.mxu0 0.0
    %1983 = vmatpush1.msra.mxu0 0.0
    %1984 = vmatprep.subr.mxu0 0.0
    %1985 = vmatpush1.msra.mxu0 0.0
    %1986 = vmatprep.subr.mxu0 0.0
    %1987 = vmatpush1.msra.mxu0 0.0
    %1988 = vmatprep.subr.mxu0 0.0
    %1989 = vmatpush1.msra.mxu0 0.0
    %1990 = vmatprep.subr.mxu0 0.0
    %1991 = vmatpush1.msra.mxu0 0.0
    %1992 = vmatprep.subr.mxu0 0.0
    %1993 = vmatpush1.msra.mxu0 0.0
    %1994 = vmatprep.subr.mxu0 0.0
    %1995 = vmatpush1.msra.mxu0 0.0
    %1996 = vmatprep.subr.mxu0 0.0
    %1997 = vmatpush1.msra.mxu0 0.0
    %1998 = vmatprep.subr.mxu0 0.0
    %1999 = vmatpush1.msra.mxu0 0.0
    %2000 = vmatprep.subr.mxu0 0.0
    %2001 = vmatpush1.msra.mxu0 0.0
    %2002 = vmatprep.subr.mxu0 0.0
    %2003 = vmatpush1.msra.mxu0 0.0
    %2004 = vmatprep.subr.mxu0 0.0
    %2005 = vmatpush1.msra.mxu0 0.0
    %2006 = vmatprep.subr.mxu0 0.0
    %2007 = vmatpush1.msra.mxu0 0.0
    %2008 = vmatprep.subr.mxu0 0.0
    %2009 = vmatpush1.msra.mxu0 0.0
    %2010 = vmatprep.subr.mxu0 0.0
    %2011 = vmatpush1.msra.mxu0 0.0
    %2012 = vmatprep.mubr.f32.mxu0 0.0
    %2013 = vmatmul.mubr.f32.gmra.mrb[0].mxu0 %v1946
    %v2014 = vpop.f32.mrb[0].mxu0
    %v2015 = vadd.f32 0.0, %v2014
    %v2016 = vpop.f32.mrb[0].mxu0
    %v2017 = vadd.f32 0.0, %v2016
    %2018 = vdwg.mxu0
    %v2019 = vadd.f32 %v1942, %v2015
    %v2020 = vxor.u32 %v2019, 2147483648
    %v2021 = vmul.f32 %v2020, 1.442695
    %v2022 = vpow.pop %v2021
    %v2023 = vadd.f32 %v2022, 1.0
    %v2024 = vrcp.pop %v2023
    %v2025 = vmul.f32 1.0, %v2024
    %v2026 = vadd.f32 %v2017, %v394
    %v2027 = vmul.f32 %v2025, %v2026
    %v2028 = vadd.f32 %v1944, %v2027
    %v2029 = vtanh.pop %v2028
    %v2030 = vsub.f32 1.0, %v2025
    %2032 = vrot.lane.b32.xlu0 %v2029, 64
    %v2033 = vpop.permute.xlu0 %2032
    %v2035 = vmul.f32 %v2030, %v2033
    %v2036 = vmul.f32 %v2025, %v1764
    %v2037 = vadd.f32 %v2035, %v2036
    %2039 = vrot.lane.b32.xlu0 %v2037, 64
    %v2040 = vpop.permute.xlu0 %2039
    %s2042 = scalar_lea.vmem [#allocation2], 12
    %2043 = vst.msk [vmem:[%s2042] sm:$0x3] %vm412, %v2040
    %2044 = vmatprep.subr.mxu0 %v220
    %2045 = vmatpush1.msra.mxu0 %v219
    %2046 = vmatprep.subr.mxu0 %v222
    %2047 = vmatpush1.msra.mxu0 %v221
    %2048 = vmatprep.subr.mxu0 %v224
    %2049 = vmatpush1.msra.mxu0 %v223
    %2050 = vmatprep.subr.mxu0 %v226
    %2051 = vmatpush1.msra.mxu0 %v225
    %2052 = vmatprep.subr.mxu0 %v228
    %2053 = vmatpush1.msra.mxu0 %v227
    %2054 = vmatprep.subr.mxu0 %v230
    %2055 = vmatpush1.msra.mxu0 %v229
    %2056 = vmatprep.subr.mxu0 %v232
    %2057 = vmatpush1.msra.mxu0 %v231
    %2058 = vmatprep.subr.mxu0 %v234
    %2059 = vmatpush1.msra.mxu0 %v233
    %2060 = vmatprep.subr.mxu0 0.0
    %2061 = vmatpush1.msra.mxu0 0.0
    %2062 = vmatprep.subr.mxu0 0.0
    %2063 = vmatpush1.msra.mxu0 0.0
    %2064 = vmatprep.subr.mxu0 0.0
    %2065 = vmatpush1.msra.mxu0 0.0
    %2066 = vmatprep.subr.mxu0 0.0
    %2067 = vmatpush1.msra.mxu0 0.0
    %2068 = vmatprep.subr.mxu0 0.0
    %2069 = vmatpush1.msra.mxu0 0.0
    %2070 = vmatprep.subr.mxu0 0.0
    %2071 = vmatpush1.msra.mxu0 0.0
    %2072 = vmatprep.subr.mxu0 0.0
    %2073 = vmatpush1.msra.mxu0 0.0
    %2074 = vmatprep.subr.mxu0 0.0
    %2075 = vmatpush1.msra.mxu0 0.0
    %2076 = vmatprep.subr.mxu0 0.0
    %2077 = vmatpush1.msra.mxu0 0.0
    %2078 = vmatprep.subr.mxu0 0.0
    %2079 = vmatpush1.msra.mxu0 0.0
    %2080 = vmatprep.subr.mxu0 0.0
    %2081 = vmatpush1.msra.mxu0 0.0
    %2082 = vmatprep.subr.mxu0 0.0
    %2083 = vmatpush1.msra.mxu0 0.0
    %2084 = vmatprep.subr.mxu0 0.0
    %2085 = vmatpush1.msra.mxu0 0.0
    %2086 = vmatprep.subr.mxu0 0.0
    %2087 = vmatpush1.msra.mxu0 0.0
    %2088 = vmatprep.subr.mxu0 0.0
    %2089 = vmatpush1.msra.mxu0 0.0
    %2090 = vmatprep.subr.mxu0 0.0
    %2091 = vmatpush1.msra.mxu0 0.0
    %2092 = vmatprep.subr.mxu0 0.0
    %2093 = vmatpush1.msra.mxu0 0.0
    %2094 = vmatprep.subr.mxu0 0.0
    %2095 = vmatpush1.msra.mxu0 0.0
    %2096 = vmatprep.subr.mxu0 0.0
    %2097 = vmatpush1.msra.mxu0 0.0
    %2098 = vmatprep.subr.mxu0 0.0
    %2099 = vmatpush1.msra.mxu0 0.0
    %2100 = vmatprep.subr.mxu0 0.0
    %2101 = vmatpush1.msra.mxu0 0.0
    %2102 = vmatprep.subr.mxu0 0.0
    %2103 = vmatpush1.msra.mxu0 0.0
    %2104 = vmatprep.subr.mxu0 0.0
    %2105 = vmatpush1.msra.mxu0 0.0
    %2106 = vmatprep.subr.mxu0 0.0
    %2107 = vmatpush1.msra.mxu0 0.0
    %2108 = vmatprep.mubr.f32.mxu0 0.0
    %2109 = vmatmul.mubr.f32.gmra.mrb[0].mxu0 %v1873
    %v2110 = vpop.f32.mrb[0].mxu0
    %v2111 = vadd.f32 0.0, %v2110
    %v2112 = vpop.f32.mrb[0].mxu0
    %v2113 = vadd.f32 0.0, %v2112
    %2114 = vdwg.mxu0
    %v2116 = vrot.slane %v2111, 2
    %v2118 = vadd.f32 %v215, %v2116
    %v2119 = vxor.u32 %v2118, 2147483648
    %v2120 = vmul.f32 %v2119, 1.442695
    %v2121 = vpow.pop %v2120
    %v2122 = vadd.f32 %v2121, 1.0
    %v2123 = vrcp.pop %v2122
    %v2124 = vmul.f32 1.0, %v2123
    %v2125 = vadd.f32 %v2113, %v281
    %v2127 = vrot.slane %v2125, 2
    %v2129 = vmul.f32 %v2124, %v2127
    %v2130 = vadd.f32 %v217, %v2129
    %v2131 = vtanh.pop %v2130
    %v2132 = vsub.f32 1.0, %v2124
    %2134 = vrot.lane.b32.xlu0 %v2131, 64
    %v2135 = vpop.permute.xlu0 %2134
    %v2137 = vmul.f32 %v2132, %v2135
    %v2138 = vrot.slane %v1868, 6
    %v2140 = vmul.f32 %v2124, %v2138
    %v2141 = vadd.f32 %v2137, %v2140
    %v2143 = vrot.slane %v2141, 6
    %2144 = vrot.lane.b32.xlu0 %v2143, 64
    %v2145 = vpop.permute.xlu0 %2144
    %v2146 = vsel %vm309, %v2145, 0
    %2148 = vmatprep.subr.mxu0 %v252
    %2149 = vmatpush1.msra.mxu0 %v251
    %2150 = vmatprep.subr.mxu0 %v254
    %2151 = vmatpush1.msra.mxu0 %v253
    %2152 = vmatprep.subr.mxu0 %v256
    %2153 = vmatpush1.msra.mxu0 %v255
    %2154 = vmatprep.subr.mxu0 %v258
    %2155 = vmatpush1.msra.mxu0 %v257
    %2156 = vmatprep.subr.mxu0 %v260
    %2157 = vmatpush1.msra.mxu0 %v259
    %2158 = vmatprep.subr.mxu0 %v262
    %2159 = vmatpush1.msra.mxu0 %v261
    %2160 = vmatprep.subr.mxu0 %v264
    %2161 = vmatpush1.msra.mxu0 %v263
    %2162 = vmatprep.subr.mxu0 %v266
    %2163 = vmatpush1.msra.mxu0 %v265
    %2164 = vmatprep.subr.mxu0 0.0
    %2165 = vmatpush1.msra.mxu0 0.0
    %2166 = vmatprep.subr.mxu0 0.0
    %2167 = vmatpush1.msra.mxu0 0.0
    %2168 = vmatprep.subr.mxu0 0.0
    %2169 = vmatpush1.msra.mxu0 0.0
    %2170 = vmatprep.subr.mxu0 0.0
    %2171 = vmatpush1.msra.mxu0 0.0
    %2172 = vmatprep.subr.mxu0 0.0
    %2173 = vmatpush1.msra.mxu0 0.0
    %2174 = vmatprep.subr.mxu0 0.0
    %2175 = vmatpush1.msra.mxu0 0.0
    %2176 = vmatprep.subr.mxu0 0.0
    %2177 = vmatpush1.msra.mxu0 0.0
    %2178 = vmatprep.subr.mxu0 0.0
    %2179 = vmatpush1.msra.mxu0 0.0
    %2180 = vmatprep.subr.mxu0 0.0
    %2181 = vmatpush1.msra.mxu0 0.0
    %2182 = vmatprep.subr.mxu0 0.0
    %2183 = vmatpush1.msra.mxu0 0.0
    %2184 = vmatprep.subr.mxu0 0.0
    %2185 = vmatpush1.msra.mxu0 0.0
    %2186 = vmatprep.subr.mxu0 0.0
    %2187 = vmatpush1.msra.mxu0 0.0
    %2188 = vmatprep.subr.mxu0 0.0
    %2189 = vmatpush1.msra.mxu0 0.0
    %2190 = vmatprep.subr.mxu0 0.0
    %2191 = vmatpush1.msra.mxu0 0.0
    %2192 = vmatprep.subr.mxu0 0.0
    %2193 = vmatpush1.msra.mxu0 0.0
    %2194 = vmatprep.subr.mxu0 0.0
    %2195 = vmatpush1.msra.mxu0 0.0
    %2196 = vmatprep.subr.mxu0 0.0
    %2197 = vmatpush1.msra.mxu0 0.0
    %2198 = vmatprep.subr.mxu0 0.0
    %2199 = vmatpush1.msra.mxu0 0.0
    %2200 = vmatprep.subr.mxu0 0.0
    %2201 = vmatpush1.msra.mxu0 0.0
    %2202 = vmatprep.subr.mxu0 0.0
    %2203 = vmatpush1.msra.mxu0 0.0
    %2204 = vmatprep.subr.mxu0 0.0
    %2205 = vmatpush1.msra.mxu0 0.0
    %2206 = vmatprep.subr.mxu0 0.0
    %2207 = vmatpush1.msra.mxu0 0.0
    %2208 = vmatprep.subr.mxu0 0.0
    %2209 = vmatpush1.msra.mxu0 0.0
    %2210 = vmatprep.subr.mxu0 0.0
    %2211 = vmatpush1.msra.mxu0 0.0
    %2212 = vmatprep.mubr.f32.mxu0 0.0
    %2213 = vmatmul.mubr.f32.gmra.mrb[0].mxu0 %v2146
    %v2214 = vpop.f32.mrb[0].mxu0
    %v2215 = vadd.f32 %v299, %v2214
    %v2216 = vpop.f32.mrb[0].mxu0
    %v2217 = vadd.f32 %v303, %v2216
    %2218 = vdwg.mxu0
    %v2219 = vsel %vm309, %v2040, 0
    %2221 = vmatprep.subr.mxu0 %v236
    %2222 = vmatpush1.msra.mxu0 %v235
    %2223 = vmatprep.subr.mxu0 %v238
    %2224 = vmatpush1.msra.mxu0 %v237
    %2225 = vmatprep.subr.mxu0 %v240
    %2226 = vmatpush1.msra.mxu0 %v239
    %2227 = vmatprep.subr.mxu0 %v242
    %2228 = vmatpush1.msra.mxu0 %v241
    %2229 = vmatprep.subr.mxu0 %v244
    %2230 = vmatpush1.msra.mxu0 %v243
    %2231 = vmatprep.subr.mxu0 %v246
    %2232 = vmatpush1.msra.mxu0 %v245
    %2233 = vmatprep.subr.mxu0 %v248
    %2234 = vmatpush1.msra.mxu0 %v247
    %2235 = vmatprep.subr.mxu0 %v250
    %2236 = vmatpush1.msra.mxu0 %v249
    %2237 = vmatprep.subr.mxu0 0.0
    %2238 = vmatpush1.msra.mxu0 0.0
    %2239 = vmatprep.subr.mxu0 0.0
    %2240 = vmatpush1.msra.mxu0 0.0
    %2241 = vmatprep.subr.mxu0 0.0
    %2242 = vmatpush1.msra.mxu0 0.0
    %2243 = vmatprep.subr.mxu0 0.0
    %2244 = vmatpush1.msra.mxu0 0.0
    %2245 = vmatprep.subr.mxu0 0.0
    %2246 = vmatpush1.msra.mxu0 0.0
    %2247 = vmatprep.subr.mxu0 0.0
    %2248 = vmatpush1.msra.mxu0 0.0
    %2249 = vmatprep.subr.mxu0 0.0
    %2250 = vmatpush1.msra.mxu0 0.0
    %2251 = vmatprep.subr.mxu0 0.0
    %2252 = vmatpush1.msra.mxu0 0.0
    %2253 = vmatprep.subr.mxu0 0.0
    %2254 = vmatpush1.msra.mxu0 0.0
    %2255 = vmatprep.subr.mxu0 0.0
    %2256 = vmatpush1.msra.mxu0 0.0
    %2257 = vmatprep.subr.mxu0 0.0
    %2258 = vmatpush1.msra.mxu0 0.0
    %2259 = vmatprep.subr.mxu0 0.0
    %2260 = vmatpush1.msra.mxu0 0.0
    %2261 = vmatprep.subr.mxu0 0.0
    %2262 = vmatpush1.msra.mxu0 0.0
    %2263 = vmatprep.subr.mxu0 0.0
    %2264 = vmatpush1.msra.mxu0 0.0
    %2265 = vmatprep.subr.mxu0 0.0
    %2266 = vmatpush1.msra.mxu0 0.0
    %2267 = vmatprep.subr.mxu0 0.0
    %2268 = vmatpush1.msra.mxu0 0.0
    %2269 = vmatprep.subr.mxu0 0.0
    %2270 = vmatpush1.msra.mxu0 0.0
    %2271 = vmatprep.subr.mxu0 0.0
    %2272 = vmatpush1.msra.mxu0 0.0
    %2273 = vmatprep.subr.mxu0 0.0
    %2274 = vmatpush1.msra.mxu0 0.0
    %2275 = vmatprep.subr.mxu0 0.0
    %2276 = vmatpush1.msra.mxu0 0.0
    %2277 = vmatprep.subr.mxu0 0.0
    %2278 = vmatpush1.msra.mxu0 0.0
    %2279 = vmatprep.subr.mxu0 0.0
    %2280 = vmatpush1.msra.mxu0 0.0
    %2281 = vmatprep.subr.mxu0 0.0
    %2282 = vmatpush1.msra.mxu0 0.0
    %2283 = vmatprep.subr.mxu0 0.0
    %2284 = vmatpush1.msra.mxu0 0.0
    %2285 = vmatprep.mubr.f32.mxu0 0.0
    %2286 = vmatmul.mubr.f32.gmra.mrb[0].mxu0 %v2219
    %v2287 = vpop.f32.mrb[0].mxu0
    %v2288 = vadd.f32 0.0, %v2287
    %v2289 = vpop.f32.mrb[0].mxu0
    %v2290 = vadd.f32 0.0, %v2289
    %2291 = vdwg.mxu0
    %v2292 = vadd.f32 %v2215, %v2288
    %v2293 = vxor.u32 %v2292, 2147483648
    %v2294 = vmul.f32 %v2293, 1.442695
    %v2295 = vpow.pop %v2294
    %v2296 = vadd.f32 %v2295, 1.0
    %v2297 = vrcp.pop %v2296
    %v2298 = vmul.f32 1.0, %v2297
    %v2299 = vadd.f32 %v2290, %v394
    %v2300 = vmul.f32 %v2298, %v2299
    %v2301 = vadd.f32 %v2217, %v2300
    %v2302 = vtanh.pop %v2301
    %v2303 = vsub.f32 1.0, %v2298
    %2305 = vrot.lane.b32.xlu0 %v2302, 64
    %v2306 = vpop.permute.xlu0 %2305
    %v2308 = vmul.f32 %v2303, %v2306
    %v2309 = vmul.f32 %v2298, %v2037
    %v2310 = vadd.f32 %v2308, %v2309
    %2312 = vrot.lane.b32.xlu0 %v2310, 64
    %v2313 = vpop.permute.xlu0 %2312
    %s2315 = scalar_lea.vmem [#allocation2], 14
    %2316 = vst.msk [vmem:[%s2315] sm:$0x3] %vm412, %v2313
    %v2317 = vld [vmem:[#allocation2] sm:$0x3]
    %v2318 = vld [vmem:[#allocation2 + $0x2] sm:$0x3]
    %v2319 = vld [vmem:[#allocation2 + $0x4] sm:$0x3]
    %v2320 = vld [vmem:[#allocation2 + $0x6] sm:$0x3]
    %v2321 = vld [vmem:[#allocation2 + $0x8] sm:$0x3]
    %v2322 = vld [vmem:[#allocation2 + $0xa] sm:$0x3]
    %v2323 = vld [vmem:[#allocation2 + $0xc] sm:$0x3]
    %v2324 = vld [vmem:[#allocation2 + $0xe] sm:$0x3]
    %v2325 = vmul.f32 %v2317, 3.0
    %v2326 = vmul.f32 %v2318, 3.0
    %v2327 = vmul.f32 %v2319, 3.0
    %v2328 = vmul.f32 %v2320, 3.0
    %v2329 = vmul.f32 %v2321, 3.0
    %v2330 = vmul.f32 %v2322, 3.0
    %v2331 = vmul.f32 %v2323, 3.0
    %v2332 = vmul.f32 %v2324, 3.0
    %v2333 = vtanh.pop %v2325
    %v2334 = vtanh.pop %v2326
    %v2335 = vtanh.pop %v2327
    %v2336 = vtanh.pop %v2328
    %v2337 = vtanh.pop %v2329
    %v2338 = vtanh.pop %v2330
    %v2339 = vtanh.pop %v2331
    %v2340 = vtanh.pop %v2332
    %v2341 = vcombine.low %v2333, %v2335
    %v2343 = vunpack.c.l.s4 1983009808
    %v2344 = vunpack.c.0.s8 %v2343
    %v2345 = vlaneseq
    %v2346 = vshrl.u32 %v2345, 7
    %v2347 = vsub.s32 %v2344, %v2346
    %v2348 = vrot.slane %v2341, %v2347
    %v2349 = vcombine.low %v2334, %v2336
    %v2351 = vunpack.c.l.s4 1983009808
    %v2352 = vunpack.c.0.s8 %v2351
    %v2353 = vlaneseq
    %v2354 = vshrl.u32 %v2353, 7
    %v2355 = vsub.s32 %v2352, %v2354
    %v2356 = vrot.slane %v2349, %v2355
    %v2357 = vcombine.low %v2337, %v2339
    %v2359 = vunpack.c.l.s4 1983009808
    %v2360 = vunpack.c.0.s8 %v2359
    %v2361 = vlaneseq
    %v2362 = vshrl.u32 %v2361, 7
    %v2363 = vsub.s32 %v2360, %v2362
    %v2364 = vrot.slane %v2357, %v2363
    %v2365 = vcombine.low %v2338, %v2340
    %v2367 = vunpack.c.l.s4 1983009808
    %v2368 = vunpack.c.0.s8 %v2367
    %v2369 = vlaneseq
    %v2370 = vshrl.u32 %v2369, 7
    %v2371 = vsub.s32 %v2368, %v2370
    %v2372 = vrot.slane %v2365, %v2371
    %v2373 = vcombine.low %v2348, %v2356
    %v2375 = vunpack.c.l.s4 1934713408
    %v2376 = vunpack.c.0.s8 %v2375
    %v2377 = vlaneseq
    %v2378 = vshrl.u32 %v2377, 7
    %v2379 = vsub.s32 %v2376, %v2378
    %v2380 = vrot.slane %v2373, %v2379
    %v2381 = vcombine.low %v2364, %v2372
    %v2383 = vunpack.c.l.s4 1934713408
    %v2384 = vunpack.c.0.s8 %v2383
    %v2385 = vlaneseq
    %v2386 = vshrl.u32 %v2385, 7
    %v2387 = vsub.s32 %v2384, %v2386
    %v2388 = vrot.slane %v2381, %v2387
    %v2389 = vcombine.low %v2380, %v2388
    %v2390 = vcombine.high %v2380, %v2388
    %v2391 = vsub.f32 0.0, %v2389
    %v2392 = vsub.f32 0.0, %v2390
    %2395 = vrot.lane.b32.xlu0 %v2389, 96
    %v2396 = vpop.permute.xlu0 %2395
    %2397 = vrot.lane.b32.xlu0 %v2390, 96
    %v2398 = vpop.permute.xlu0 %2397
    %2403 = vrot.lane.b32.xlu0 %v2391, 32
    %v2404 = vpop.permute.xlu0 %2403
    %2405 = vrot.lane.b32.xlu0 %v2392, 32
    %v2406 = vpop.permute.xlu0 %2405
    %vm2409 = vcmask 261120
    %v2410 = vsel %vm2409, %v2396, %v2404
    %v2411 = vsel %vm2409, %v2398, %v2406
    %v2412 = vsel %vm309, %v2389, 0
    %v2415 = vsel %vm309, %v2410, 0
    %2417 = vmatprep.subr.mxu0 0.0
    %2418 = vmatpush1.xpose.msra.mxu0 %v2415
    %2419 = vmatprep.subr.mxu0 0.0
    %2420 = vmatpush1.xpose.msra.mxu0 0.0
    %2421 = vmatprep.subr.mxu0 0.0
    %2422 = vmatpush1.xpose.msra.mxu0 0.0
    %2423 = vmatprep.subr.mxu0 0.0
    %2424 = vmatpush1.xpose.msra.mxu0 0.0
    %2425 = vmatprep.subr.mxu0 0.0
    %2426 = vmatpush1.xpose.msra.mxu0 0.0
    %2427 = vmatprep.subr.mxu0 0.0
    %2428 = vmatpush1.xpose.msra.mxu0 0.0
    %2429 = vmatprep.subr.mxu0 0.0
    %2430 = vmatpush1.xpose.msra.mxu0 0.0
    %2431 = vmatprep.subr.mxu0 0.0
    %2432 = vmatpush1.xpose.msra.mxu0 0.0
    %2433 = vmatprep.subr.mxu0 0.0
    %2434 = vmatpush1.xpose.msra.mxu0 0.0
    %2435 = vmatprep.subr.mxu0 0.0
    %2436 = vmatpush1.xpose.msra.mxu0 0.0
    %2437 = vmatprep.subr.mxu0 0.0
    %2438 = vmatpush1.xpose.msra.mxu0 0.0
    %2439 = vmatprep.subr.mxu0 0.0
    %2440 = vmatpush1.xpose.msra.mxu0 0.0
    %2441 = vmatprep.subr.mxu0 0.0
    %2442 = vmatpush1.xpose.msra.mxu0 0.0
    %2443 = vmatprep.subr.mxu0 0.0
    %2444 = vmatpush1.xpose.msra.mxu0 0.0
    %2445 = vmatprep.subr.mxu0 0.0
    %2446 = vmatpush1.xpose.msra.mxu0 0.0
    %2447 = vmatprep.subr.mxu0 0.0
    %2448 = vmatpush1.xpose.msra.mxu0 0.0
    %2449 = vmatprep.subr.mxu0 0.0
    %2450 = vmatpush1.xpose.msra.mxu0 0.0
    %2451 = vmatprep.subr.mxu0 0.0
    %2452 = vmatpush1.xpose.msra.mxu0 0.0
    %2453 = vmatprep.subr.mxu0 0.0
    %2454 = vmatpush1.xpose.msra.mxu0 0.0
    %2455 = vmatprep.subr.mxu0 0.0
    %2456 = vmatpush1.xpose.msra.mxu0 0.0
    %2457 = vmatprep.subr.mxu0 0.0
    %2458 = vmatpush1.xpose.msra.mxu0 0.0
    %2459 = vmatprep.subr.mxu0 0.0
    %2460 = vmatpush1.xpose.msra.mxu0 0.0
    %2461 = vmatprep.subr.mxu0 0.0
    %2462 = vmatpush1.xpose.msra.mxu0 0.0
    %2463 = vmatprep.subr.mxu0 0.0
    %2464 = vmatpush1.xpose.msra.mxu0 0.0
    %2465 = vmatprep.subr.mxu0 0.0
    %2466 = vmatpush1.xpose.msra.mxu0 0.0
    %2467 = vmatprep.subr.mxu0 0.0
    %2468 = vmatpush1.xpose.msra.mxu0 0.0
    %2469 = vmatprep.subr.mxu0 0.0
    %2470 = vmatpush1.xpose.msra.mxu0 0.0
    %2471 = vmatprep.subr.mxu0 0.0
    %2472 = vmatpush1.xpose.msra.mxu0 0.0
    %2473 = vmatprep.subr.mxu0 0.0
    %2474 = vmatpush1.xpose.msra.mxu0 0.0
    %2475 = vmatprep.subr.mxu0 0.0
    %2476 = vmatpush1.xpose.msra.mxu0 0.0
    %2477 = vmatprep.subr.mxu0 0.0
    %2478 = vmatpush1.xpose.msra.mxu0 0.0
    %2479 = vmatprep.subr.mxu0 0.0
    %2480 = vmatpush1.xpose.msra.mxu0 0.0
    %2481 = vmatprep.mubr.f32.mxu0 0.0
    %2482 = vmatmul.mubr.f32.gmra.mrb[0].mxu0 %v2412
    %v2483 = vpop.f32.mrb[0].mxu0
    %v2484 = vadd.f32 0.0, %v2483
    %v2485 = vpop.f32.mrb[0].mxu0
    %2486 = vdwg.mxu0
    %v2487 = vsel %vm309, %v2390, 0
    %v2490 = vsel %vm309, %v2411, 0
    %2492 = vmatprep.subr.mxu0 0.0
    %2493 = vmatpush1.xpose.msra.mxu0 %v2490
    %2494 = vmatprep.subr.mxu0 0.0
    %2495 = vmatpush1.xpose.msra.mxu0 0.0
    %2496 = vmatprep.subr.mxu0 0.0
    %2497 = vmatpush1.xpose.msra.mxu0 0.0
    %2498 = vmatprep.subr.mxu0 0.0
    %2499 = vmatpush1.xpose.msra.mxu0 0.0
    %2500 = vmatprep.subr.mxu0 0.0
    %2501 = vmatpush1.xpose.msra.mxu0 0.0
    %2502 = vmatprep.subr.mxu0 0.0
    %2503 = vmatpush1.xpose.msra.mxu0 0.0
    %2504 = vmatprep.subr.mxu0 0.0
    %2505 = vmatpush1.xpose.msra.mxu0 0.0
    %2506 = vmatprep.subr.mxu0 0.0
    %2507 = vmatpush1.xpose.msra.mxu0 0.0
    %2508 = vmatprep.subr.mxu0 0.0
    %2509 = vmatpush1.xpose.msra.mxu0 0.0
    %2510 = vmatprep.subr.mxu0 0.0
    %2511 = vmatpush1.xpose.msra.mxu0 0.0
    %2512 = vmatprep.subr.mxu0 0.0
    %2513 = vmatpush1.xpose.msra.mxu0 0.0
    %2514 = vmatprep.subr.mxu0 0.0
    %2515 = vmatpush1.xpose.msra.mxu0 0.0
    %2516 = vmatprep.subr.mxu0 0.0
    %2517 = vmatpush1.xpose.msra.mxu0 0.0
    %2518 = vmatprep.subr.mxu0 0.0
    %2519 = vmatpush1.xpose.msra.mxu0 0.0
    %2520 = vmatprep.subr.mxu0 0.0
    %2521 = vmatpush1.xpose.msra.mxu0 0.0
    %2522 = vmatprep.subr.mxu0 0.0
    %2523 = vmatpush1.xpose.msra.mxu0 0.0
    %2524 = vmatprep.subr.mxu0 0.0
    %2525 = vmatpush1.xpose.msra.mxu0 0.0
    %2526 = vmatprep.subr.mxu0 0.0
    %2527 = vmatpush1.xpose.msra.mxu0 0.0
    %2528 = vmatprep.subr.mxu0 0.0
    %2529 = vmatpush1.xpose.msra.mxu0 0.0
    %2530 = vmatprep.subr.mxu0 0.0
    %2531 = vmatpush1.xpose.msra.mxu0 0.0
    %2532 = vmatprep.subr.mxu0 0.0
    %2533 = vmatpush1.xpose.msra.mxu0 0.0
    %2534 = vmatprep.subr.mxu0 0.0
    %2535 = vmatpush1.xpose.msra.mxu0 0.0
    %2536 = vmatprep.subr.mxu0 0.0
    %2537 = vmatpush1.xpose.msra.mxu0 0.0
    %2538 = vmatprep.subr.mxu0 0.0
    %2539 = vmatpush1.xpose.msra.mxu0 0.0
    %2540 = vmatprep.subr.mxu0 0.0
    %2541 = vmatpush1.xpose.msra.mxu0 0.0
    %2542 = vmatprep.subr.mxu0 0.0
    %2543 = vmatpush1.xpose.msra.mxu0 0.0
    %2544 = vmatprep.subr.mxu0 0.0
    %2545 = vmatpush1.xpose.msra.mxu0 0.0
    %2546 = vmatprep.subr.mxu0 0.0
    %2547 = vmatpush1.xpose.msra.mxu0 0.0
    %2548 = vmatprep.subr.mxu0 0.0
    %2549 = vmatpush1.xpose.msra.mxu0 0.0
    %2550 = vmatprep.subr.mxu0 0.0
    %2551 = vmatpush1.xpose.msra.mxu0 0.0
    %2552 = vmatprep.subr.mxu0 0.0
    %2553 = vmatpush1.xpose.msra.mxu0 0.0
    %2554 = vmatprep.subr.mxu0 0.0
    %2555 = vmatpush1.xpose.msra.mxu0 0.0
    %2556 = vmatprep.mubr.f32.mxu0 0.0
    %2557 = vmatmul.mubr.f32.gmra.mrb[0].mxu0 %v2487
    %v2558 = vpop.f32.mrb[0].mxu0
    %v2559 = vadd.f32 0.0, %v2558
    %v2560 = vpop.f32.mrb[0].mxu0
    %2561 = vdwg.mxu0
    %v2562 = vmul.f32 %v2484, 3.0
    %v2563 = vmul.f32 %v2559, 3.0
    %v2564 = vtanh.pop %v2562
    %v2565 = vtanh.pop %v2563
    %v2566 = vmax.f32 %v2564, 0.0
    %v2567 = vmax.f32 %v2565, 0.0
    %vm2568 = vcmask 64512
    %2569 = vst.msk [vmem:[#allocation11] sm:$0xff] %vm2568, %v2566
    %2570 = vst.msk [vmem:[#allocation11 + $0x8] sm:$0xff] %vm2568, %v2567
    %v2571 = vld [vmem:[%s9] sm:$0xff]
    %v2572 = vld [vmem:[%s9 + $0x8] sm:$0xff]
    %v2573 = vmul.f32 %v2571, 0.01
    %v2574 = vmul.f32 %v2572, 0.01
    %v2575 = vadd.f32 %v2566, %v2573
    %v2576 = vadd.f32 %v2567, %v2574
    %v2577 = vsel %vm2568, %v2575, -inf
    %2578 = vmax.xlane.f32.xlu0 %v2577
    %v2579 = vpop.xlane.xlu0 %2578
    %v2580 = vsel %vm2568, %v2576, -inf
    %2581 = vmax.xlane.f32.xlu0 %v2580
    %v2582 = vpop.xlane.xlu0 %2581
    %vm2583 = vcmp.ge.f32.partialorder %v2575, %v2579
    %vm2584 = vcmp.ge.f32.partialorder %v2576, %v2582
    %v2585 = vsel %vm2583, -inf, %v2575
    %v2586 = vsel %vm2584, -inf, %v2576
    %v2587 = vsel %vm2568, %v2585, -inf
    %2588 = vmax.xlane.f32.xlu0 %v2587
    %v2589 = vpop.xlane.xlu0 %2588
    %v2590 = vsel %vm2568, %v2586, -inf
    %2591 = vmax.xlane.f32.xlu0 %v2590
    %v2592 = vpop.xlane.xlu0 %2591
    %vm2593 = vcmp.ge.f32.partialorder %v2585, %v2589
    %vm2594 = vcmp.ge.f32.partialorder %v2586, %v2592
    %v2595 = vsel %vm2593, -inf, %v2585
    %v2596 = vsel %vm2594, -inf, %v2586
    %v2597 = vsel %vm2568, %v2595, -inf
    %2598 = vmax.xlane.f32.xlu0 %v2597
    %v2599 = vpop.xlane.xlu0 %2598
    %v2600 = vsel %vm2568, %v2596, -inf
    %2601 = vmax.xlane.f32.xlu0 %v2600
    %v2602 = vpop.xlane.xlu0 %2601
    %vm2603 = vcmp.ge.f32.partialorder %v2575, %v2599
    %vm2604 = vcmp.ge.f32.partialorder %v2576, %v2602
    %v2605 = vsel %vm2603, 1, 0
    %v2606 = vsel %vm2604, 1, 0
    %v2607 = vcvt.s32.f32 %v2605
    %v2608 = vcvt.s32.f32 %v2606
    %v2609 = vmul.f32 %v2566, %v2607
    %v2610 = vmul.f32 %v2567, %v2608
    %2611 = vst.msk [vmem:[#allocation12] sm:$0xff] %vm2568, %v2609
    %2612 = vst.msk [vmem:[#allocation12 + $0x8] sm:$0xff] %vm2568, %v2610
    // Predicated region
    $region58: #{tpu_custom_call.1} parent=1 // pred_check
      _
    $region59: #{tpu_custom_call.1} parent=1 // pred_check_branch
      %2614 = sbr.rel (0) target = $region61
    $region60: #{tpu_custom_call.1} parent=1 // pred_region
      %s2616 = ssub.s32 256, 256
      %2617 = vsyncadd [#allocation5], %s2616
      %s2618 = sshll.u32 [#allocation11], 4
      %s2619 = int_to_ptr.vmem [resolvable:$true] %s2618
      %2624 = dma.vmem_to_hbm [thread:$0]  %s2619, 256, %s10, [#allocation5], 128, 128, 8
    $region61: #{tpu_custom_call.1} parent=1 // pred_fallthru
      _
    // Predicated region
    $region62: #{tpu_custom_call.1} parent=1 // pred_check
      _
    $region63: #{tpu_custom_call.1} parent=1 // pred_check_branch
      %2626 = sbr.rel (0) target = $region65
    $region64: #{tpu_custom_call.1} parent=1 // pred_region
      %s2628 = ssub.s32 256, 256
      %2629 = vsyncadd [#allocation13], %s2628
      %s2630 = sshll.u32 [#allocation12], 4
      %s2631 = int_to_ptr.vmem [resolvable:$true] %s2630
      %2636 = dma.vmem_to_hbm [thread:$0]  %s2631, 256, %s11, [#allocation13], 128, 128, 8
    $region65: #{tpu_custom_call.1} parent=1 // pred_fallthru
      _
    // Predicated region
    $region66: #{tpu_custom_call.1} parent=1 // pred_check
      _
    $region67: #{tpu_custom_call.1} parent=1 // pred_check_branch
      %2638 = sbr.rel (0) target = $region69
    $region68: #{tpu_custom_call.1} parent=1 // pred_region
      %2639 = dma.done [#allocation5], 256
    $region69: #{tpu_custom_call.1} parent=1 // pred_fallthru
      _
    // Predicated region
    $region70: #{tpu_custom_call.1} parent=1 // pred_check
      _
    $region71: #{tpu_custom_call.1} parent=1 // pred_check_branch
      %2641 = sbr.rel (0) target = $region73
    $region72: #{tpu_custom_call.1} parent=1 // pred_region
      %2642 = dma.done [#allocation13], 256
    $region73: #{tpu_custom_call.1} parent=1 // pred_fallthru
      _
    %2643 = vsyncpa [#allocation4], 1
    %2644 = vsyncpa [#allocation7], 1
    %2645 = vsyncpa [#allocation10], 1
    %2646 = vsyncpa [#allocation5], 1
    %2647 = vsyncpa [#allocation13], 1

</llo_original>
